<compile_context>
chip_gen: v6e
topology: v6e:2x2x1
jax: 0.10.0
libtpu: 0.0.40
codegen_flags: <defaults>
</compile_context>

<pallas_src>
import math
import functools

import jax
import jax.numpy as jnp
from jax import lax
from jax.experimental import pallas as pl
from jax.experimental.pallas import tpu as pltpu


_LANE = 128

# Rows of the packed per-layer vector block lpack[l, row, :].
_ROW_BQKV, _ROW_BI, _ROW_BO, _ROW_BF = 0, 1, 2, 3
_ROW_LN1G, _ROW_LN1B, _ROW_LN2G, _ROW_LN2B = 4, 5, 6, 7

_ERF_P = 0.3275911
_ERF_A = (0.254829592, -0.284496736, 1.421413741, -1.453152027, 1.061405429)


def _erf_f32(x):
    """Abramowitz & Stegun 7.1.26 erf approximation (~1.5e-7 max abs error)."""
    a1, a2, a3, a4, a5 = _ERF_A
    ax = jnp.abs(x)
    t = 1.0 / (1.0 + _ERF_P * ax)
    poly = ((((a5 * t + a4) * t + a3) * t + a2) * t + a1) * t
    y = 1.0 - poly * jnp.exp(-ax * ax)
    return jnp.where(x >= 0.0, y, -y)


def _gelu(x, kind):
    if kind == "tanh":
        # tanh-approximate GELU: one EUP tanh per element on the [tokens, I] FFN
        # intermediate, freeing VALU bandwidth (per review); ~1e-3 deviation from exact.
        return 0.5 * x * (1.0 + jnp.tanh(0.7978845608028654 * (x + 0.044715 * x * x * x)))
    # "erf": exact erf-based GELU, matching BERT/KoBERT ("gelu") numerics.
    return 0.5 * x * (1.0 + _erf_f32(x * 0.7071067811865475))


# --------------------------- fused whole-encoder kernel ---------------------------

def _kobert_kernel(x_emb_ref, mask_ref, gvec_ref, clsw_ref, clsb_ref,
                   wqkv_ref, wo_ref, wi_ref, wf_ref, lpack_ref,
                   logits_ref,
                   h_scr, q_scr, k_scr, v_scr, ctx_scr,
                   *, num_heads, scale, eps, compute_dtype, gelu_kind):
    f32 = jnp.float32
    cdt = compute_dtype
    bb, S, H = x_emb_ref.shape
    I = wi_ref.shape[2]
    nH = num_heads
    dH = H // nH
    layer = pl.program_id(1)

    def layer_norm(v, g, b):
        mean = jnp.mean(v, axis=-1, keepdims=True)
        var = jnp.mean(jnp.square(v - mean), axis=-1, keepdims=True)
        return (v - mean) * lax.rsqrt(var + eps) * g + b

    def mm(a, w, b):
        # MXU matmul (bf16 inputs by default), f32 accumulation, f32 bias add.
        return jnp.dot(a.astype(cdt), w, preferred_element_type=f32) + b

    # ---- grid step l == 0: fold the BERT embedding LayerNorm into the kernel ----
    @pl.when(layer == 0)
    def _():
        xe = x_emb_ref[...].astype(f32)
        h_scr[...] = layer_norm(xe,
                                gvec_ref[0:1, :].astype(f32),
                                gvec_ref[1:2, :].astype(f32))

    vecs = lpack_ref[0].astype(f32)                     # [8, W] packed per-layer vectors
    b_qkv = vecs[_ROW_BQKV:_ROW_BQKV + 1, :3 * H]       # [1, 3H]
    b_i = vecs[_ROW_BI:_ROW_BI + 1, :I]                 # [1, I]
    b_o = vecs[_ROW_BO:_ROW_BO + 1, :H]
    b_f = vecs[_ROW_BF:_ROW_BF + 1, :H]
    ln1_g = vecs[_ROW_LN1G:_ROW_LN1G + 1, :H]
    ln1_b = vecs[_ROW_LN1B:_ROW_LN1B + 1, :H]
    ln2_g = vecs[_ROW_LN2G:_ROW_LN2G + 1, :H]
    ln2_b = vecs[_ROW_LN2B:_ROW_LN2B + 1, :H]

    # Running hidden state: resident in VMEM scratch across all layer grid steps.
    x2 = h_scr[...].reshape(bb * S, H)                  # [bb*S, H] f32

    # ---- self-attention: fused QKV matmul, head-batched softmax / PV ----
    qkv = mm(x2, wqkv_ref[0], b_qkv)                    # [bb*S, 3H] f32
    # Head-major relayout via static-slice VMEM staging stores (each per-head temp is
    # stored immediately -> bounded live ranges; avoids an in-kernel 4-D transpose).
    for b in range(bb):
        rows = slice(b * S, (b + 1) * S)
        for h in range(nH):
            q_scr[b * nH + h] = qkv[rows, h * dH:(h + 1) * dH].astype(cdt)
            k_scr[b * nH + h] = qkv[rows, H + h * dH:H + (h + 1) * dH].astype(cdt)
            v_scr[b * nH + h] = qkv[rows, 2 * H + h * dH:2 * H + (h + 1) * dH].astype(cdt)

    qh = q_scr[...]                                     # [bb*nH, S, dH]
    kh = k_scr[...]
    vh = v_scr[...]
    s = jnp.einsum('bqd,bkd->bqk', qh, kh,
                   preferred_element_type=f32) * scale  # [bb*nH, S, S]
    # Additive attention mask [bb,1,S], broadcast over heads and query positions.
    m = mask_ref[...].astype(f32)                       # [bb, 1, S]
    s = (s.reshape(bb, nH, S, S) + m[:, None, :, :]).reshape(bb * nH, S, S)
    s = s - jnp.max(s, axis=-1, keepdims=True)
    p = jnp.exp(s)
    # EUP approximate reciprocal: softmax normalization moves off the VALU slot.
    p = p * pl.reciprocal(jnp.sum(p, axis=-1, keepdims=True), approx=True)
    ctx = jnp.einsum('bqk,bkd->bqd', p.astype(cdt), vh,
                     preferred_element_type=f32)        # [bb*nH, S, dH]
    # Merge heads back (static-slice stores into the [bb*S, H] context scratch).
    for b in range(bb):
        for h in range(nH):
            ctx_scr[b * S:(b + 1) * S, h * dH:(h + 1) * dH] = ctx[b * nH + h]

    attn_out = mm(ctx_scr[...], wo_ref[0], b_o)         # [bb*S, H]
    h1 = layer_norm(attn_out + x2, ln1_g, ln1_b)

    # ---- feed-forward with in-kernel GELU ----
    inter = _gelu(mm(h1, wi_ref[0], b_i), gelu_kind)    # [bb*S, I]
    ffn_out = mm(inter, wf_ref[0], b_f)                 # [bb*S, H]
    h2 = layer_norm(ffn_out + h1, ln2_g, ln2_b)

    h_scr[...] = h2.reshape(bb, S, H)

    # ---- last grid step: classifier on the [CLS] hidden state (no pooler, as in the
    # reference module: classifier(last_hidden_state[:, 0, :])) ----
    @pl.when(layer == pl.num_programs(1) - 1)
    def _():
        cls_tok = h2.reshape(bb, S, H)[:, 0:1, :].reshape(bb, H)
        logits = (jnp.dot(cls_tok.astype(cdt), clsw_ref[...],
                          preferred_element_type=f32)
                  + clsb_ref[...].astype(f32))          # [bb, LPAD] (lane-dense store)
        logits_ref[0] = logits.astype(logits_ref.dtype)


def _kobert_pallas(x_emb, add_mask, prep, cfg, *, batch_block=None):
    """Run the full BERT encoder + classifier head in one pallas_call."""
    B, S, H = x_emb.shape
    L = prep['wqkv'].shape[0]
    I = prep['wi'].shape[2]
    W = prep['lpack'].shape[2]
    LPAD = prep['clsw'].shape[1]
    nH = cfg.heads
    dH = H // nH

    bb = B if batch_block is None else batch_block      # batch block; set B//2 on v7x
    assert B % bb == 0, "batch_block must divide the batch size"
    nb = B // bb

    kernel = functools.partial(
        _kobert_kernel,
        num_heads=nH, scale=1.0 / math.sqrt(dH), eps=cfg.eps,
        compute_dtype=cfg.compute_dtype, gelu_kind=cfg.gelu)

    grid_spec = pltpu.PrefetchScalarGridSpec(
        num_scalar_prefetch=0,
        grid=(nb, L),                                    # (batch blocks, encoder layers)
        in_specs=[
            pl.BlockSpec((bb, S, H), lambda b, l: (b, 0, 0)),     # embeddings (read at l==0)
            pl.BlockSpec((bb, 1, S), lambda b, l: (b, 0, 0)),     # additive attention mask
            pl.BlockSpec((2, H), lambda b, l: (0, 0)),            # embedding LN gamma/beta
            pl.BlockSpec((H, LPAD), lambda b, l: (0, 0)),         # classifier W (lane-padded)
            pl.BlockSpec((1, LPAD), lambda b, l: (0, 0)),         # classifier b (lane-padded)
            pl.BlockSpec((1, H, 3 * H), lambda b, l: (l, 0, 0)),  # fused QKV weight, layer l
            pl.BlockSpec((1, H, H), lambda b, l: (l, 0, 0)),      # attention output weight
            pl.BlockSpec((1, H, I), lambda b, l: (l, 0, 0)),      # FFN in weight
            pl.BlockSpec((1, I, H), lambda b, l: (l, 0, 0)),      # FFN out weight
            pl.BlockSpec((1, 8, W), lambda b, l: (l, 0, 0)),      # packed per-layer vectors
        ],
        out_specs=pl.BlockSpec((1, bb, LPAD), lambda b, l: (b, 0, 0)),
        scratch_shapes=[
            pltpu.VMEM((bb, S, H), jnp.float32),                  # resident hidden state
            pltpu.VMEM((bb * nH, S, dH), cfg.compute_dtype),      # Q, head-major
            pltpu.VMEM((bb * nH, S, dH), cfg.compute_dtype),      # K, head-major
            pltpu.VMEM((bb * nH, S, dH), cfg.compute_dtype),      # V, head-major
            pltpu.VMEM((bb * S, H), jnp.float32),                 # merged attention context
        ],
    )

    out = pl.pallas_call(
        kernel,
        grid_spec=grid_spec,
        out_shape=jax.ShapeDtypeStruct((nb, bb, LPAD), jnp.float32),
        compiler_params=pltpu.CompilerParams(
            # Batch blocks are independent -> shard across the two v7x TensorCores.
            dimension_semantics=("parallel", "arbitrary"),
            # Raise the scoped-VMEM cap above the 16/32 MiB defaults; 64 MiB fits all
            # generations' physical VMEM.  At production H/I, also single-buffer the
            # constant-index blocks (pipeline_mode=pl.Buffered(1)) to halve residency.
            vmem_limit_bytes=64 * 1024 * 1024,
        ),
    )(x_emb, add_mask, prep['gvec'], prep['clsw'], prep['clsb'],
      prep['wqkv'], prep['wo'], prep['wi'], prep['wf'], prep['lpack'])

    return out.reshape(B, LPAD)


# --------------------------- model (config + params) ---------------------------

class Config:
    vocab_size = 64
    hidden = 32
    heads = 4
    layers = 2
    intermediate = 64
    max_pos = 32
    type_vocab = 2
    num_labels = 3
    eps = 1e-12
    # MXU input dtype for all matmuls (accumulation, softmax, LayerNorm stay f32).
    # bf16 by default (v5e/v6e/v7x MXU peak, half the weight DMA/VMEM); set
    # jnp.float32 for tighter-tolerance numerics.
    compute_dtype = jnp.bfloat16
    # "erf" matches BERT/KoBERT exactly; "tanh" moves the GELU onto the EUP slot.
    gelu = "erf"


def init_params(key, cfg):
    keys = iter(jax.random.split(key, 256))

    def w(shape):
        return 0.02 * jax.random.normal(next(keys), shape, jnp.float32)

    H, I = cfg.hidden, cfg.intermediate
    params = dict(
        word_emb=w((cfg.vocab_size, H)),
        pos_emb=w((cfg.max_pos, H)),
        type_emb=w((cfg.type_vocab, H)),
        emb_ln_g=jnp.ones((H,), jnp.float32),
        emb_ln_b=jnp.zeros((H,), jnp.float32),
        cls_w=w((cfg.num_labels, H)),
        cls_b=jnp.zeros((cfg.num_labels,), jnp.float32),
        layers=[],
    )
    for _ in range(cfg.layers):
        params['layers'].append(dict(
            q_w=w((H, H)), q_b=jnp.zeros((H,), jnp.float32),
            k_w=w((H, H)), k_b=jnp.zeros((H,), jnp.float32),
            v_w=w((H, H)), v_b=jnp.zeros((H,), jnp.float32),
            o_w=w((H, H)), o_b=jnp.zeros((H,), jnp.float32),
            attn_ln_g=jnp.ones((H,), jnp.float32),
            attn_ln_b=jnp.zeros((H,), jnp.float32),
            i_w=w((I, H)), i_b=jnp.zeros((I,), jnp.float32),
            f_w=w((H, I)), f_b=jnp.zeros((H,), jnp.float32),
            out_ln_g=jnp.ones((H,), jnp.float32),
            out_ln_b=jnp.zeros((H,), jnp.float32),
        ))
    return params


def prepare_params(params, *, compute_dtype=jnp.bfloat16):
    """One-time layout plumbing:
       - transpose nn.Linear weights, fuse Q|K|V, stack every layer on a leading L axis;
       - store matmul weights in the MXU compute dtype (bf16 default);
       - pack the 8 small per-layer bias/LayerNorm vectors into one [L, 8, W] block;
       - lane-pad the classifier to 128 output columns (dense stores in-kernel).
    """
    H = params['word_emb'].shape[1]
    I = params['layers'][0]['i_w'].shape[0]
    NL = params['cls_w'].shape[0]
    W = max(3 * H, I, H)
    LPAD = ((NL + _LANE - 1) // _LANE) * _LANE

    def pad_row(v):
        return jnp.pad(v, (0, W - v.shape[0]))

    wqkv, wo, wi, wf, lpack = [], [], [], [], []
    for lp in params['layers']:
        wqkv.append(jnp.concatenate([lp['q_w'].T, lp['k_w'].T, lp['v_w'].T], axis=1))
        wo.append(lp['o_w'].T)
        wi.append(lp['i_w'].T)
        wf.append(lp['f_w'].T)
        lpack.append(jnp.stack([
            pad_row(jnp.concatenate([lp['q_b'], lp['k_b'], lp['v_b']])),  # _ROW_BQKV
            pad_row(lp['i_b']),                                           # _ROW_BI
            pad_row(lp['o_b']),                                           # _ROW_BO
            pad_row(lp['f_b']),                                           # _ROW_BF
            pad_row(lp['attn_ln_g']), pad_row(lp['attn_ln_b']),           # _ROW_LN1G/B
            pad_row(lp['out_ln_g']), pad_row(lp['out_ln_b']),             # _ROW_LN2G/B
        ]))

    clsw = jnp.zeros((H, LPAD), jnp.float32).at[:, :NL].set(params['cls_w'].T)
    clsb = jnp.zeros((1, LPAD), jnp.float32).at[0, :NL].set(params['cls_b'])

    return dict(
        word_emb=params['word_emb'],
        pos_emb=params['pos_emb'],
        type_emb=params['type_emb'],
        gvec=jnp.stack([params['emb_ln_g'], params['emb_ln_b']]),     # [2, H] f32
        clsw=clsw.astype(compute_dtype),                              # [H, LPAD]
        clsb=clsb,                                                    # [1, LPAD] f32
        wqkv=jnp.stack(wqkv).astype(compute_dtype),                   # [L, H, 3H]
        wo=jnp.stack(wo).astype(compute_dtype),                       # [L, H, H]
        wi=jnp.stack(wi).astype(compute_dtype),                       # [L, H, I]
        wf=jnp.stack(wf).astype(compute_dtype),                       # [L, I, H]
        lpack=jnp.stack(lpack),                                       # [L, 8, W] f32
    )


def kobert_classifier_forward(prep, input_ids, attention_mask, *, cfg, batch_block=None):
    """logits = Linear(BERT(input_ids, attention_mask).last_hidden_state[:, 0, :])."""
    B, S = input_ids.shape
    # BERT embeddings: table gathers are glue (plain JAX); the embedding LayerNorm is
    # fused into the layer-0 grid step of the Pallas kernel.
    # TODO(synk): token_type_ids are assumed to be all zeros (single-segment input).
    x = (prep['word_emb'][input_ids]
         + prep['pos_emb'][:S][None, :, :]
         + prep['type_emb'][0][None, None, :])
    # Additive attention mask [B,1,S] (0 / -10000), broadcast over heads in-kernel.
    add_mask = ((1.0 - attention_mask.astype(jnp.float32)) * -10000.0)[:, None, :]

    logits_pad = _kobert_pallas(x, add_mask, prep, cfg, batch_block=batch_block)
    return logits_pad[:, :cfg.num_labels]


# --------------------------- main ---------------------------

if __name__ == "__main__":
    cfg = Config()
    key = jax.random.PRNGKey(0)
    pkey, ikey = jax.random.split(key)

    params = init_params(pkey, cfg)
    prep = prepare_params(params, compute_dtype=cfg.compute_dtype)

    B, S = 2, 8
    input_ids = jax.random.randint(ikey, (B, S), 0, cfg.vocab_size, dtype=jnp.int32)
    attention_mask = jnp.array([[1, 1, 1, 1, 1, 1, 1, 1],
                                [1, 1, 1, 1, 1, 1, 0, 0]], dtype=jnp.int32)

    fwd = jax.jit(functools.partial(kobert_classifier_forward, cfg=cfg))
    logits = jax.block_until_ready(fwd(prep, input_ids, attention_mask))

    assert logits.shape == (B, cfg.num_labels) and logits.dtype == jnp.float32
    assert bool(jnp.all(jnp.isfinite(logits)))
    print("KERNEL_OK")
</pallas_src>

<mosaic_0001>
module attributes {stable_mosaic.version = 11 : i64} {
  func.func @_kobert_kernel(%arg0: i32, %arg1: i32, %arg2: memref<2x8x32xf32, #tpu.memory_space<vmem>>, %arg3: memref<2x1x8xf32, #tpu.memory_space<vmem>>, %arg4: memref<2x32xf32, #tpu.memory_space<vmem>>, %arg5: memref<32x128xbf16, #tpu.memory_space<vmem>>, %arg6: memref<1x128xf32, #tpu.memory_space<vmem>>, %arg7: memref<1x32x96xbf16, #tpu.memory_space<vmem>>, %arg8: memref<1x32x32xbf16, #tpu.memory_space<vmem>>, %arg9: memref<1x32x64xbf16, #tpu.memory_space<vmem>>, %arg10: memref<1x64x32xbf16, #tpu.memory_space<vmem>>, %arg11: memref<1x8x96xf32, #tpu.memory_space<vmem>>, %arg12: memref<1x2x128xf32, #tpu.memory_space<vmem>>, %arg13: memref<2x8x32xf32, #tpu.memory_space<vmem>>, %arg14: memref<8x8x8xbf16, #tpu.memory_space<vmem>>, %arg15: memref<8x8x8xbf16, #tpu.memory_space<vmem>>, %arg16: memref<8x8x8xbf16, #tpu.memory_space<vmem>>, %arg17: memref<16x32xf32, #tpu.memory_space<vmem>>) attributes {dimension_semantics = [#tpu.dimension_semantics<parallel>, #tpu.dimension_semantics<arbitrary>], iteration_bounds = array<i64: 1, 2>, scalar_prefetch = 0 : i64, scratch_operands = 5 : i64, tpu.core_type = #tpu.core_type<tc>, window_params = [{transform_indices = @transform_0, window_bounds = array<i64: 2, 8, 32>}, {transform_indices = @transform_1, window_bounds = array<i64: 2, 1, 8>}, {pipeline_mode = #tpu.pipeline_mode<synchronous>, transform_indices = @transform_2, window_bounds = array<i64: 2, 32>}, {pipeline_mode = #tpu.pipeline_mode<synchronous>, transform_indices = @transform_3, window_bounds = array<i64: 32, 128>}, {pipeline_mode = #tpu.pipeline_mode<synchronous>, transform_indices = @transform_4, window_bounds = array<i64: 1, 128>}, {transform_indices = @transform_5, window_bounds = array<i64: 1, 32, 96>}, {transform_indices = @transform_6, window_bounds = array<i64: 1, 32, 32>}, {transform_indices = @transform_7, window_bounds = array<i64: 1, 32, 64>}, {transform_indices = @transform_8, window_bounds = array<i64: 1, 64, 32>}, {transform_indices = @transform_9, window_bounds = array<i64: 1, 8, 96>}, {transform_indices = @transform_10, window_bounds = array<i64: 1, 2, 128>}]} {
    %c0_i32 = arith.constant 0 : i32
    %0 = arith.cmpi eq, %arg1, %c0_i32 : i32
    %1 = arith.extui %0 : i1 to i32
    %c0_i32_0 = arith.constant 0 : i32
    %2 = arith.cmpi ne, %1, %c0_i32_0 : i32
    scf.if %2 {
      %c0_147 = arith.constant 0 : index
      %c0_148 = arith.constant 0 : index
      %c0_149 = arith.constant 0 : index
      %299 = vector.load %arg2[%c0_147, %c0_148, %c0_149] : memref<2x8x32xf32, #tpu.memory_space<vmem>>, vector<2x8x32xf32>
      %c0_150 = arith.constant 0 : index
      %c0_151 = arith.constant 0 : index
      %300 = vector.load %arg4[%c0_150, %c0_151] : memref<2x32xf32, #tpu.memory_space<vmem>>, vector<1x32xf32>
      %c1_152 = arith.constant 1 : index
      %c0_153 = arith.constant 0 : index
      %301 = vector.load %arg4[%c1_152, %c0_153] : memref<2x32xf32, #tpu.memory_space<vmem>>, vector<1x32xf32>
      %cst_154 = arith.constant dense<0.000000e+00> : vector<2x8xf32>
      %302 = vector.multi_reduction <add>, %299, %cst_154 [2] : vector<2x8x32xf32> to vector<2x8xf32>
      %303 = vector.shape_cast %302 : vector<2x8xf32> to vector<2x8x1xf32>
      %cst_155 = arith.constant 3.200000e+01 : f32
      %304 = vector.broadcast %cst_155 : f32 to vector<2x8x1xf32>
      %305 = arith.divf %303, %304 : vector<2x8x1xf32>
      %306 = vector.broadcast %305 : vector<2x8x1xf32> to vector<2x8x32xf32>
      %307 = arith.subf %299, %306 : vector<2x8x32xf32>
      %308 = arith.mulf %307, %307 : vector<2x8x32xf32>
      %cst_156 = arith.constant dense<0.000000e+00> : vector<2x8xf32>
      %309 = vector.multi_reduction <add>, %308, %cst_156 [2] : vector<2x8x32xf32> to vector<2x8xf32>
      %310 = vector.shape_cast %309 : vector<2x8xf32> to vector<2x8x1xf32>
      %cst_157 = arith.constant 3.200000e+01 : f32
      %311 = vector.broadcast %cst_157 : f32 to vector<2x8x1xf32>
      %312 = arith.divf %310, %311 : vector<2x8x1xf32>
      %313 = vector.broadcast %305 : vector<2x8x1xf32> to vector<2x8x32xf32>
      %314 = arith.subf %299, %313 : vector<2x8x32xf32>
      %cst_158 = arith.constant 9.99999996E-13 : f32
      %315 = vector.broadcast %cst_158 : f32 to vector<2x8x1xf32>
      %316 = arith.addf %312, %315 : vector<2x8x1xf32>
      %317 = math.rsqrt %316 : vector<2x8x1xf32>
      %318 = vector.broadcast %317 : vector<2x8x1xf32> to vector<2x8x32xf32>
      %319 = arith.mulf %314, %318 : vector<2x8x32xf32>
      %320 = vector.shape_cast %300 : vector<1x32xf32> to vector<1x1x32xf32>
      %321 = vector.broadcast %320 : vector<1x1x32xf32> to vector<2x8x32xf32>
      %322 = arith.mulf %319, %321 : vector<2x8x32xf32>
      %323 = vector.shape_cast %301 : vector<1x32xf32> to vector<1x1x32xf32>
      %324 = vector.broadcast %323 : vector<1x1x32xf32> to vector<2x8x32xf32>
      %325 = arith.addf %322, %324 : vector<2x8x32xf32>
      %c0_159 = arith.constant 0 : index
      %c0_160 = arith.constant 0 : index
      %c0_161 = arith.constant 0 : index
      %326 = vector.load %arg13[%c0_159, %c0_160, %c0_161] : memref<2x8x32xf32, #tpu.memory_space<vmem>>, vector<2x8x32xf32>
      tpu.vector_store %arg13[%c0_159, %c0_160, %c0_161], %325 {strides = array<i32>} : memref<2x8x32xf32, #tpu.memory_space<vmem>>, vector<2x8x32xf32>,
    } else {
    }
    %c0 = arith.constant 0 : index
    %c0_1 = arith.constant 0 : index
    %c0_2 = arith.constant 0 : index
    %3 = vector.load %arg11[%c0, %c0_1, %c0_2] : memref<1x8x96xf32, #tpu.memory_space<vmem>>, vector<1x8x96xf32>
    %4 = vector.shape_cast %3 : vector<1x8x96xf32> to vector<8x96xf32>
    %5 = vector.extract_strided_slice %4 {offsets = [0, 0], sizes = [1, 96], strides = [1, 1]} : vector<8x96xf32> to vector<1x96xf32>
    %6 = vector.extract_strided_slice %4 {offsets = [1, 0], sizes = [1, 64], strides = [1, 1]} : vector<8x96xf32> to vector<1x64xf32>
    %7 = vector.extract_strided_slice %4 {offsets = [2, 0], sizes = [1, 32], strides = [1, 1]} : vector<8x96xf32> to vector<1x32xf32>
    %8 = vector.extract_strided_slice %4 {offsets = [3, 0], sizes = [1, 32], strides = [1, 1]} : vector<8x96xf32> to vector<1x32xf32>
    %9 = vector.extract_strided_slice %4 {offsets = [4, 0], sizes = [1, 32], strides = [1, 1]} : vector<8x96xf32> to vector<1x32xf32>
    %10 = vector.extract_strided_slice %4 {offsets = [5, 0], sizes = [1, 32], strides = [1, 1]} : vector<8x96xf32> to vector<1x32xf32>
    %11 = vector.extract_strided_slice %4 {offsets = [6, 0], sizes = [1, 32], strides = [1, 1]} : vector<8x96xf32> to vector<1x32xf32>
    %12 = vector.extract_strided_slice %4 {offsets = [7, 0], sizes = [1, 32], strides = [1, 1]} : vector<8x96xf32> to vector<1x32xf32>
    %c0_3 = arith.constant 0 : index
    %c0_4 = arith.constant 0 : index
    %c0_5 = arith.constant 0 : index
    %13 = vector.load %arg13[%c0_3, %c0_4, %c0_5] : memref<2x8x32xf32, #tpu.memory_space<vmem>>, vector<2x8x32xf32>
    %14 = vector.shape_cast %13 : vector<2x8x32xf32> to vector<16x32xf32>
    %c0_6 = arith.constant 0 : index
    %c0_7 = arith.constant 0 : index
    %c0_8 = arith.constant 0 : index
    %15 = vector.load %arg7[%c0_6, %c0_7, %c0_8] : memref<1x32x96xbf16, #tpu.memory_space<vmem>>, vector<1x32x96xbf16>
    %16 = vector.shape_cast %15 : vector<1x32x96xbf16> to vector<32x96xbf16>
    %17 = arith.truncf %14 : vector<16x32xf32> to vector<16x32xbf16>
    %cst = arith.constant dense<0.000000e+00> : vector<16x96xf32>
    %18 = tpu.matmul %17, %16, %cst {dimension_numbers = #tpu.dot_dimension_numbers<[1], [0], [0], [1], [0, 0, 1, 1], [], []>} : vector<16x32xbf16>, vector<32x96xbf16>, vector<16x96xf32> -> vector<16x96xf32>
    %19 = vector.broadcast %5 : vector<1x96xf32> to vector<16x96xf32>
    %20 = arith.addf %18, %19 : vector<16x96xf32>
    %21 = vector.extract_strided_slice %20 {offsets = [0, 0], sizes = [8, 8], strides = [1, 1]} : vector<16x96xf32> to vector<8x8xf32>
    %22 = arith.truncf %21 : vector<8x8xf32> to vector<8x8xbf16>
    %c0_9 = arith.constant 0 : index
    %c0_10 = arith.constant 0 : index
    %c0_11 = arith.constant 0 : index
    %23 = vector.load %arg14[%c0_9, %c0_10, %c0_11] : memref<8x8x8xbf16, #tpu.memory_space<vmem>>, vector<1x8x8xbf16>
    %24 = vector.shape_cast %23 : vector<1x8x8xbf16> to vector<8x8xbf16>
    %25 = vector.shape_cast %22 : vector<8x8xbf16> to vector<1x8x8xbf16>
    tpu.vector_store %arg14[%c0_9, %c0_10, %c0_11], %25 {strides = array<i32>} : memref<8x8x8xbf16, #tpu.memory_space<vmem>>, vector<1x8x8xbf16>,
    %26 = vector.extract_strided_slice %20 {offsets = [0, 32], sizes = [8, 8], strides = [1, 1]} : vector<16x96xf32> to vector<8x8xf32>
    %27 = arith.truncf %26 : vector<8x8xf32> to vector<8x8xbf16>
    %c0_12 = arith.constant 0 : index
    %c0_13 = arith.constant 0 : index
    %c0_14 = arith.constant 0 : index
    %28 = vector.load %arg15[%c0_12, %c0_13, %c0_14] : memref<8x8x8xbf16, #tpu.memory_space<vmem>>, vector<1x8x8xbf16>
    %29 = vector.shape_cast %28 : vector<1x8x8xbf16> to vector<8x8xbf16>
    %30 = vector.shape_cast %27 : vector<8x8xbf16> to vector<1x8x8xbf16>
    tpu.vector_store %arg15[%c0_12, %c0_13, %c0_14], %30 {strides = array<i32>} : memref<8x8x8xbf16, #tpu.memory_space<vmem>>, vector<1x8x8xbf16>,
    %31 = vector.extract_strided_slice %20 {offsets = [0, 64], sizes = [8, 8], strides = [1, 1]} : vector<16x96xf32> to vector<8x8xf32>
    %32 = arith.truncf %31 : vector<8x8xf32> to vector<8x8xbf16>
    %c0_15 = arith.constant 0 : index
    %c0_16 = arith.constant 0 : index
    %c0_17 = arith.constant 0 : index
    %33 = vector.load %arg16[%c0_15, %c0_16, %c0_17] : memref<8x8x8xbf16, #tpu.memory_space<vmem>>, vector<1x8x8xbf16>
    %34 = vector.shape_cast %33 : vector<1x8x8xbf16> to vector<8x8xbf16>
    %35 = vector.shape_cast %32 : vector<8x8xbf16> to vector<1x8x8xbf16>
    tpu.vector_store %arg16[%c0_15, %c0_16, %c0_17], %35 {strides = array<i32>} : memref<8x8x8xbf16, #tpu.memory_space<vmem>>, vector<1x8x8xbf16>,
    %36 = vector.extract_strided_slice %20 {offsets = [0, 8], sizes = [8, 8], strides = [1, 1]} : vector<16x96xf32> to vector<8x8xf32>
    %37 = arith.truncf %36 : vector<8x8xf32> to vector<8x8xbf16>
    %c1 = arith.constant 1 : index
    %c0_18 = arith.constant 0 : index
    %c0_19 = arith.constant 0 : index
    %38 = vector.load %arg14[%c1, %c0_18, %c0_19] : memref<8x8x8xbf16, #tpu.memory_space<vmem>>, vector<1x8x8xbf16>
    %39 = vector.shape_cast %38 : vector<1x8x8xbf16> to vector<8x8xbf16>
    %40 = vector.shape_cast %37 : vector<8x8xbf16> to vector<1x8x8xbf16>
    tpu.vector_store %arg14[%c1, %c0_18, %c0_19], %40 {strides = array<i32>} : memref<8x8x8xbf16, #tpu.memory_space<vmem>>, vector<1x8x8xbf16>,
    %41 = vector.extract_strided_slice %20 {offsets = [0, 40], sizes = [8, 8], strides = [1, 1]} : vector<16x96xf32> to vector<8x8xf32>
    %42 = arith.truncf %41 : vector<8x8xf32> to vector<8x8xbf16>
    %c1_20 = arith.constant 1 : index
    %c0_21 = arith.constant 0 : index
    %c0_22 = arith.constant 0 : index
    %43 = vector.load %arg15[%c1_20, %c0_21, %c0_22] : memref<8x8x8xbf16, #tpu.memory_space<vmem>>, vector<1x8x8xbf16>
    %44 = vector.shape_cast %43 : vector<1x8x8xbf16> to vector<8x8xbf16>
    %45 = vector.shape_cast %42 : vector<8x8xbf16> to vector<1x8x8xbf16>
    tpu.vector_store %arg15[%c1_20, %c0_21, %c0_22], %45 {strides = array<i32>} : memref<8x8x8xbf16, #tpu.memory_space<vmem>>, vector<1x8x8xbf16>,
    %46 = vector.extract_strided_slice %20 {offsets = [0, 72], sizes = [8, 8], strides = [1, 1]} : vector<16x96xf32> to vector<8x8xf32>
    %47 = arith.truncf %46 : vector<8x8xf32> to vector<8x8xbf16>
    %c1_23 = arith.constant 1 : index
    %c0_24 = arith.constant 0 : index
    %c0_25 = arith.constant 0 : index
    %48 = vector.load %arg16[%c1_23, %c0_24, %c0_25] : memref<8x8x8xbf16, #tpu.memory_space<vmem>>, vector<1x8x8xbf16>
    %49 = vector.shape_cast %48 : vector<1x8x8xbf16> to vector<8x8xbf16>
    %50 = vector.shape_cast %47 : vector<8x8xbf16> to vector<1x8x8xbf16>
    tpu.vector_store %arg16[%c1_23, %c0_24, %c0_25], %50 {strides = array<i32>} : memref<8x8x8xbf16, #tpu.memory_space<vmem>>, vector<1x8x8xbf16>,
    %51 = vector.extract_strided_slice %20 {offsets = [0, 16], sizes = [8, 8], strides = [1, 1]} : vector<16x96xf32> to vector<8x8xf32>
    %52 = arith.truncf %51 : vector<8x8xf32> to vector<8x8xbf16>
    %c2 = arith.constant 2 : index
    %c0_26 = arith.constant 0 : index
    %c0_27 = arith.constant 0 : index
    %53 = vector.load %arg14[%c2, %c0_26, %c0_27] : memref<8x8x8xbf16, #tpu.memory_space<vmem>>, vector<1x8x8xbf16>
    %54 = vector.shape_cast %53 : vector<1x8x8xbf16> to vector<8x8xbf16>
    %55 = vector.shape_cast %52 : vector<8x8xbf16> to vector<1x8x8xbf16>
    tpu.vector_store %arg14[%c2, %c0_26, %c0_27], %55 {strides = array<i32>} : memref<8x8x8xbf16, #tpu.memory_space<vmem>>, vector<1x8x8xbf16>,
    %56 = vector.extract_strided_slice %20 {offsets = [0, 48], sizes = [8, 8], strides = [1, 1]} : vector<16x96xf32> to vector<8x8xf32>
    %57 = arith.truncf %56 : vector<8x8xf32> to vector<8x8xbf16>
    %c2_28 = arith.constant 2 : index
    %c0_29 = arith.constant 0 : index
    %c0_30 = arith.constant 0 : index
    %58 = vector.load %arg15[%c2_28, %c0_29, %c0_30] : memref<8x8x8xbf16, #tpu.memory_space<vmem>>, vector<1x8x8xbf16>
    %59 = vector.shape_cast %58 : vector<1x8x8xbf16> to vector<8x8xbf16>
    %60 = vector.shape_cast %57 : vector<8x8xbf16> to vector<1x8x8xbf16>
    tpu.vector_store %arg15[%c2_28, %c0_29, %c0_30], %60 {strides = array<i32>} : memref<8x8x8xbf16, #tpu.memory_space<vmem>>, vector<1x8x8xbf16>,
    %61 = vector.extract_strided_slice %20 {offsets = [0, 80], sizes = [8, 8], strides = [1, 1]} : vector<16x96xf32> to vector<8x8xf32>
    %62 = arith.truncf %61 : vector<8x8xf32> to vector<8x8xbf16>
    %c2_31 = arith.constant 2 : index
    %c0_32 = arith.constant 0 : index
    %c0_33 = arith.constant 0 : index
    %63 = vector.load %arg16[%c2_31, %c0_32, %c0_33] : memref<8x8x8xbf16, #tpu.memory_space<vmem>>, vector<1x8x8xbf16>
    %64 = vector.shape_cast %63 : vector<1x8x8xbf16> to vector<8x8xbf16>
    %65 = vector.shape_cast %62 : vector<8x8xbf16> to vector<1x8x8xbf16>
    tpu.vector_store %arg16[%c2_31, %c0_32, %c0_33], %65 {strides = array<i32>} : memref<8x8x8xbf16, #tpu.memory_space<vmem>>, vector<1x8x8xbf16>,
    %66 = vector.extract_strided_slice %20 {offsets = [0, 24], sizes = [8, 8], strides = [1, 1]} : vector<16x96xf32> to vector<8x8xf32>
    %67 = arith.truncf %66 : vector<8x8xf32> to vector<8x8xbf16>
    %c3 = arith.constant 3 : index
    %c0_34 = arith.constant 0 : index
    %c0_35 = arith.constant 0 : index
    %68 = vector.load %arg14[%c3, %c0_34, %c0_35] : memref<8x8x8xbf16, #tpu.memory_space<vmem>>, vector<1x8x8xbf16>
    %69 = vector.shape_cast %68 : vector<1x8x8xbf16> to vector<8x8xbf16>
    %70 = vector.shape_cast %67 : vector<8x8xbf16> to vector<1x8x8xbf16>
    tpu.vector_store %arg14[%c3, %c0_34, %c0_35], %70 {strides = array<i32>} : memref<8x8x8xbf16, #tpu.memory_space<vmem>>, vector<1x8x8xbf16>,
    %71 = vector.extract_strided_slice %20 {offsets = [0, 56], sizes = [8, 8], strides = [1, 1]} : vector<16x96xf32> to vector<8x8xf32>
    %72 = arith.truncf %71 : vector<8x8xf32> to vector<8x8xbf16>
    %c3_36 = arith.constant 3 : index
    %c0_37 = arith.constant 0 : index
    %c0_38 = arith.constant 0 : index
    %73 = vector.load %arg15[%c3_36, %c0_37, %c0_38] : memref<8x8x8xbf16, #tpu.memory_space<vmem>>, vector<1x8x8xbf16>
    %74 = vector.shape_cast %73 : vector<1x8x8xbf16> to vector<8x8xbf16>
    %75 = vector.shape_cast %72 : vector<8x8xbf16> to vector<1x8x8xbf16>
    tpu.vector_store %arg15[%c3_36, %c0_37, %c0_38], %75 {strides = array<i32>} : memref<8x8x8xbf16, #tpu.memory_space<vmem>>, vector<1x8x8xbf16>,
    %76 = vector.extract_strided_slice %20 {offsets = [0, 88], sizes = [8, 8], strides = [1, 1]} : vector<16x96xf32> to vector<8x8xf32>
    %77 = arith.truncf %76 : vector<8x8xf32> to vector<8x8xbf16>
    %c3_39 = arith.constant 3 : index
    %c0_40 = arith.constant 0 : index
    %c0_41 = arith.constant 0 : index
    %78 = vector.load %arg16[%c3_39, %c0_40, %c0_41] : memref<8x8x8xbf16, #tpu.memory_space<vmem>>, vector<1x8x8xbf16>
    %79 = vector.shape_cast %78 : vector<1x8x8xbf16> to vector<8x8xbf16>
    %80 = vector.shape_cast %77 : vector<8x8xbf16> to vector<1x8x8xbf16>
    tpu.vector_store %arg16[%c3_39, %c0_40, %c0_41], %80 {strides = array<i32>} : memref<8x8x8xbf16, #tpu.memory_space<vmem>>, vector<1x8x8xbf16>,
    %81 = vector.extract_strided_slice %20 {offsets = [8, 0], sizes = [8, 8], strides = [1, 1]} : vector<16x96xf32> to vector<8x8xf32>
    %82 = arith.truncf %81 : vector<8x8xf32> to vector<8x8xbf16>
    %c4 = arith.constant 4 : index
    %c0_42 = arith.constant 0 : index
    %c0_43 = arith.constant 0 : index
    %83 = vector.load %arg14[%c4, %c0_42, %c0_43] : memref<8x8x8xbf16, #tpu.memory_space<vmem>>, vector<1x8x8xbf16>
    %84 = vector.shape_cast %83 : vector<1x8x8xbf16> to vector<8x8xbf16>
    %85 = vector.shape_cast %82 : vector<8x8xbf16> to vector<1x8x8xbf16>
    tpu.vector_store %arg14[%c4, %c0_42, %c0_43], %85 {strides = array<i32>} : memref<8x8x8xbf16, #tpu.memory_space<vmem>>, vector<1x8x8xbf16>,
    %86 = vector.extract_strided_slice %20 {offsets = [8, 32], sizes = [8, 8], strides = [1, 1]} : vector<16x96xf32> to vector<8x8xf32>
    %87 = arith.truncf %86 : vector<8x8xf32> to vector<8x8xbf16>
    %c4_44 = arith.constant 4 : index
    %c0_45 = arith.constant 0 : index
    %c0_46 = arith.constant 0 : index
    %88 = vector.load %arg15[%c4_44, %c0_45, %c0_46] : memref<8x8x8xbf16, #tpu.memory_space<vmem>>, vector<1x8x8xbf16>
    %89 = vector.shape_cast %88 : vector<1x8x8xbf16> to vector<8x8xbf16>
    %90 = vector.shape_cast %87 : vector<8x8xbf16> to vector<1x8x8xbf16>
    tpu.vector_store %arg15[%c4_44, %c0_45, %c0_46], %90 {strides = array<i32>} : memref<8x8x8xbf16, #tpu.memory_space<vmem>>, vector<1x8x8xbf16>,
    %91 = vector.extract_strided_slice %20 {offsets = [8, 64], sizes = [8, 8], strides = [1, 1]} : vector<16x96xf32> to vector<8x8xf32>
    %92 = arith.truncf %91 : vector<8x8xf32> to vector<8x8xbf16>
    %c4_47 = arith.constant 4 : index
    %c0_48 = arith.constant 0 : index
    %c0_49 = arith.constant 0 : index
    %93 = vector.load %arg16[%c4_47, %c0_48, %c0_49] : memref<8x8x8xbf16, #tpu.memory_space<vmem>>, vector<1x8x8xbf16>
    %94 = vector.shape_cast %93 : vector<1x8x8xbf16> to vector<8x8xbf16>
    %95 = vector.shape_cast %92 : vector<8x8xbf16> to vector<1x8x8xbf16>
    tpu.vector_store %arg16[%c4_47, %c0_48, %c0_49], %95 {strides = array<i32>} : memref<8x8x8xbf16, #tpu.memory_space<vmem>>, vector<1x8x8xbf16>,
    %96 = vector.extract_strided_slice %20 {offsets = [8, 8], sizes = [8, 8], strides = [1, 1]} : vector<16x96xf32> to vector<8x8xf32>
    %97 = arith.truncf %96 : vector<8x8xf32> to vector<8x8xbf16>
    %c5 = arith.constant 5 : index
    %c0_50 = arith.constant 0 : index
    %c0_51 = arith.constant 0 : index
    %98 = vector.load %arg14[%c5, %c0_50, %c0_51] : memref<8x8x8xbf16, #tpu.memory_space<vmem>>, vector<1x8x8xbf16>
    %99 = vector.shape_cast %98 : vector<1x8x8xbf16> to vector<8x8xbf16>
    %100 = vector.shape_cast %97 : vector<8x8xbf16> to vector<1x8x8xbf16>
    tpu.vector_store %arg14[%c5, %c0_50, %c0_51], %100 {strides = array<i32>} : memref<8x8x8xbf16, #tpu.memory_space<vmem>>, vector<1x8x8xbf16>,
    %101 = vector.extract_strided_slice %20 {offsets = [8, 40], sizes = [8, 8], strides = [1, 1]} : vector<16x96xf32> to vector<8x8xf32>
    %102 = arith.truncf %101 : vector<8x8xf32> to vector<8x8xbf16>
    %c5_52 = arith.constant 5 : index
    %c0_53 = arith.constant 0 : index
    %c0_54 = arith.constant 0 : index
    %103 = vector.load %arg15[%c5_52, %c0_53, %c0_54] : memref<8x8x8xbf16, #tpu.memory_space<vmem>>, vector<1x8x8xbf16>
    %104 = vector.shape_cast %103 : vector<1x8x8xbf16> to vector<8x8xbf16>
    %105 = vector.shape_cast %102 : vector<8x8xbf16> to vector<1x8x8xbf16>
    tpu.vector_store %arg15[%c5_52, %c0_53, %c0_54], %105 {strides = array<i32>} : memref<8x8x8xbf16, #tpu.memory_space<vmem>>, vector<1x8x8xbf16>,
    %106 = vector.extract_strided_slice %20 {offsets = [8, 72], sizes = [8, 8], strides = [1, 1]} : vector<16x96xf32> to vector<8x8xf32>
    %107 = arith.truncf %106 : vector<8x8xf32> to vector<8x8xbf16>
    %c5_55 = arith.constant 5 : index
    %c0_56 = arith.constant 0 : index
    %c0_57 = arith.constant 0 : index
    %108 = vector.load %arg16[%c5_55, %c0_56, %c0_57] : memref<8x8x8xbf16, #tpu.memory_space<vmem>>, vector<1x8x8xbf16>
    %109 = vector.shape_cast %108 : vector<1x8x8xbf16> to vector<8x8xbf16>
    %110 = vector.shape_cast %107 : vector<8x8xbf16> to vector<1x8x8xbf16>
    tpu.vector_store %arg16[%c5_55, %c0_56, %c0_57], %110 {strides = array<i32>} : memref<8x8x8xbf16, #tpu.memory_space<vmem>>, vector<1x8x8xbf16>,
    %111 = vector.extract_strided_slice %20 {offsets = [8, 16], sizes = [8, 8], strides = [1, 1]} : vector<16x96xf32> to vector<8x8xf32>
    %112 = arith.truncf %111 : vector<8x8xf32> to vector<8x8xbf16>
    %c6 = arith.constant 6 : index
    %c0_58 = arith.constant 0 : index
    %c0_59 = arith.constant 0 : index
    %113 = vector.load %arg14[%c6, %c0_58, %c0_59] : memref<8x8x8xbf16, #tpu.memory_space<vmem>>, vector<1x8x8xbf16>
    %114 = vector.shape_cast %113 : vector<1x8x8xbf16> to vector<8x8xbf16>
    %115 = vector.shape_cast %112 : vector<8x8xbf16> to vector<1x8x8xbf16>
    tpu.vector_store %arg14[%c6, %c0_58, %c0_59], %115 {strides = array<i32>} : memref<8x8x8xbf16, #tpu.memory_space<vmem>>, vector<1x8x8xbf16>,
    %116 = vector.extract_strided_slice %20 {offsets = [8, 48], sizes = [8, 8], strides = [1, 1]} : vector<16x96xf32> to vector<8x8xf32>
    %117 = arith.truncf %116 : vector<8x8xf32> to vector<8x8xbf16>
    %c6_60 = arith.constant 6 : index
    %c0_61 = arith.constant 0 : index
    %c0_62 = arith.constant 0 : index
    %118 = vector.load %arg15[%c6_60, %c0_61, %c0_62] : memref<8x8x8xbf16, #tpu.memory_space<vmem>>, vector<1x8x8xbf16>
    %119 = vector.shape_cast %118 : vector<1x8x8xbf16> to vector<8x8xbf16>
    %120 = vector.shape_cast %117 : vector<8x8xbf16> to vector<1x8x8xbf16>
    tpu.vector_store %arg15[%c6_60, %c0_61, %c0_62], %120 {strides = array<i32>} : memref<8x8x8xbf16, #tpu.memory_space<vmem>>, vector<1x8x8xbf16>,
    %121 = vector.extract_strided_slice %20 {offsets = [8, 80], sizes = [8, 8], strides = [1, 1]} : vector<16x96xf32> to vector<8x8xf32>
    %122 = arith.truncf %121 : vector<8x8xf32> to vector<8x8xbf16>
    %c6_63 = arith.constant 6 : index
    %c0_64 = arith.constant 0 : index
    %c0_65 = arith.constant 0 : index
    %123 = vector.load %arg16[%c6_63, %c0_64, %c0_65] : memref<8x8x8xbf16, #tpu.memory_space<vmem>>, vector<1x8x8xbf16>
    %124 = vector.shape_cast %123 : vector<1x8x8xbf16> to vector<8x8xbf16>
    %125 = vector.shape_cast %122 : vector<8x8xbf16> to vector<1x8x8xbf16>
    tpu.vector_store %arg16[%c6_63, %c0_64, %c0_65], %125 {strides = array<i32>} : memref<8x8x8xbf16, #tpu.memory_space<vmem>>, vector<1x8x8xbf16>,
    %126 = vector.extract_strided_slice %20 {offsets = [8, 24], sizes = [8, 8], strides = [1, 1]} : vector<16x96xf32> to vector<8x8xf32>
    %127 = arith.truncf %126 : vector<8x8xf32> to vector<8x8xbf16>
    %c7 = arith.constant 7 : index
    %c0_66 = arith.constant 0 : index
    %c0_67 = arith.constant 0 : index
    %128 = vector.load %arg14[%c7, %c0_66, %c0_67] : memref<8x8x8xbf16, #tpu.memory_space<vmem>>, vector<1x8x8xbf16>
    %129 = vector.shape_cast %128 : vector<1x8x8xbf16> to vector<8x8xbf16>
    %130 = vector.shape_cast %127 : vector<8x8xbf16> to vector<1x8x8xbf16>
    tpu.vector_store %arg14[%c7, %c0_66, %c0_67], %130 {strides = array<i32>} : memref<8x8x8xbf16, #tpu.memory_space<vmem>>, vector<1x8x8xbf16>,
    %131 = vector.extract_strided_slice %20 {offsets = [8, 56], sizes = [8, 8], strides = [1, 1]} : vector<16x96xf32> to vector<8x8xf32>
    %132 = arith.truncf %131 : vector<8x8xf32> to vector<8x8xbf16>
    %c7_68 = arith.constant 7 : index
    %c0_69 = arith.constant 0 : index
    %c0_70 = arith.constant 0 : index
    %133 = vector.load %arg15[%c7_68, %c0_69, %c0_70] : memref<8x8x8xbf16, #tpu.memory_space<vmem>>, vector<1x8x8xbf16>
    %134 = vector.shape_cast %133 : vector<1x8x8xbf16> to vector<8x8xbf16>
    %135 = vector.shape_cast %132 : vector<8x8xbf16> to vector<1x8x8xbf16>
    tpu.vector_store %arg15[%c7_68, %c0_69, %c0_70], %135 {strides = array<i32>} : memref<8x8x8xbf16, #tpu.memory_space<vmem>>, vector<1x8x8xbf16>,
    %136 = vector.extract_strided_slice %20 {offsets = [8, 88], sizes = [8, 8], strides = [1, 1]} : vector<16x96xf32> to vector<8x8xf32>
    %137 = arith.truncf %136 : vector<8x8xf32> to vector<8x8xbf16>
    %c7_71 = arith.constant 7 : index
    %c0_72 = arith.constant 0 : index
    %c0_73 = arith.constant 0 : index
    %138 = vector.load %arg16[%c7_71, %c0_72, %c0_73] : memref<8x8x8xbf16, #tpu.memory_space<vmem>>, vector<1x8x8xbf16>
    %139 = vector.shape_cast %138 : vector<1x8x8xbf16> to vector<8x8xbf16>
    %140 = vector.shape_cast %137 : vector<8x8xbf16> to vector<1x8x8xbf16>
    tpu.vector_store %arg16[%c7_71, %c0_72, %c0_73], %140 {strides = array<i32>} : memref<8x8x8xbf16, #tpu.memory_space<vmem>>, vector<1x8x8xbf16>,
    %c0_74 = arith.constant 0 : index
    %c0_75 = arith.constant 0 : index
    %c0_76 = arith.constant 0 : index
    %141 = vector.load %arg14[%c0_74, %c0_75, %c0_76] : memref<8x8x8xbf16, #tpu.memory_space<vmem>>, vector<8x8x8xbf16>
    %c0_77 = arith.constant 0 : index
    %c0_78 = arith.constant 0 : index
    %c0_79 = arith.constant 0 : index
    %142 = vector.load %arg15[%c0_77, %c0_78, %c0_79] : memref<8x8x8xbf16, #tpu.memory_space<vmem>>, vector<8x8x8xbf16>
    %c0_80 = arith.constant 0 : index
    %c0_81 = arith.constant 0 : index
    %c0_82 = arith.constant 0 : index
    %143 = vector.load %arg16[%c0_80, %c0_81, %c0_82] : memref<8x8x8xbf16, #tpu.memory_space<vmem>>, vector<8x8x8xbf16>
    "tpu.trace_start"() <{level = 10 : i32, message = "bqd,bkd->bqk"}> : () -> ()
    %cst_83 = arith.constant dense<0.000000e+00> : vector<8x8x8xf32>
    %144 = tpu.matmul %141, %142, %cst_83 {dimension_numbers = #tpu.dot_dimension_numbers<[2], [2], [1], [1], [0, 0, 0, 1, 1, 1], [0], [0]>} : vector<8x8x8xbf16>, vector<8x8x8xbf16>, vector<8x8x8xf32> -> vector<8x8x8xf32>
    "tpu.trace_stop"() : () -> ()
    %cst_84 = arith.constant 0.353553385 : f32
    %145 = vector.broadcast %cst_84 : f32 to vector<8x8x8xf32>
    %146 = arith.mulf %144, %145 : vector<8x8x8xf32>
    %c0_85 = arith.constant 0 : index
    %c0_86 = arith.constant 0 : index
    %c0_87 = arith.constant 0 : index
    %147 = vector.load %arg3[%c0_85, %c0_86, %c0_87] : memref<2x1x8xf32, #tpu.memory_space<vmem>>, vector<2x1x8xf32>
    %148 = vector.shape_cast %146 : vector<8x8x8xf32> to vector<2x4x8x8xf32>
    %149 = vector.shape_cast %147 : vector<2x1x8xf32> to vector<2x1x1x8xf32>
    %150 = vector.broadcast %149 : vector<2x1x1x8xf32> to vector<2x4x8x8xf32>
    %151 = arith.addf %148, %150 : vector<2x4x8x8xf32>
    %152 = vector.shape_cast %151 : vector<2x4x8x8xf32> to vector<8x8x8xf32>
    %cst_88 = arith.constant dense<0xFF800000> : vector<8x8xf32>
    %153 = vector.multi_reduction <maximumf>, %152, %cst_88 [2] : vector<8x8x8xf32> to vector<8x8xf32>
    %154 = vector.shape_cast %153 : vector<8x8xf32> to vector<8x8x1xf32>
    %155 = vector.broadcast %154 : vector<8x8x1xf32> to vector<8x8x8xf32>
    %156 = arith.subf %152, %155 : vector<8x8x8xf32>
    %157 = math.exp %156 : vector<8x8x8xf32>
    %cst_89 = arith.constant dense<0.000000e+00> : vector<8x8xf32>
    %158 = vector.multi_reduction <add>, %157, %cst_89 [2] : vector<8x8x8xf32> to vector<8x8xf32>
    %159 = vector.shape_cast %158 : vector<8x8xf32> to vector<8x8x1xf32>
    %160 = tpu.reciprocal %159 {approx = true} : vector<8x8x1xf32> -> vector<8x8x1xf32>
    %161 = vector.broadcast %160 : vector<8x8x1xf32> to vector<8x8x8xf32>
    %162 = arith.mulf %157, %161 : vector<8x8x8xf32>
    %163 = arith.truncf %162 : vector<8x8x8xf32> to vector<8x8x8xbf16>
    "tpu.trace_start"() <{level = 10 : i32, message = "bqk,bkd->bqd"}> : () -> ()
    %cst_90 = arith.constant dense<0.000000e+00> : vector<8x8x8xf32>
    %164 = tpu.matmul %163, %143, %cst_90 {dimension_numbers = #tpu.dot_dimension_numbers<[2], [1], [1], [2], [0, 0, 0, 1, 1, 2], [0], [0]>} : vector<8x8x8xbf16>, vector<8x8x8xbf16>, vector<8x8x8xf32> -> vector<8x8x8xf32>
    "tpu.trace_stop"() : () -> ()
    %165 = vector.extract_strided_slice %164 {offsets = [0, 0, 0], sizes = [1, 8, 8], strides = [1, 1, 1]} : vector<8x8x8xf32> to vector<1x8x8xf32>
    %166 = vector.shape_cast %165 : vector<1x8x8xf32> to vector<8x8xf32>
    %c0_91 = arith.constant 0 : index
    %c0_92 = arith.constant 0 : index
    %167 = vector.load %arg17[%c0_91, %c0_92] : memref<16x32xf32, #tpu.memory_space<vmem>>, vector<8x8xf32>
    tpu.vector_store %arg17[%c0_91, %c0_92], %166 {strides = array<i32>} : memref<16x32xf32, #tpu.memory_space<vmem>>, vector<8x8xf32>,
    %168 = vector.extract_strided_slice %164 {offsets = [1, 0, 0], sizes = [1, 8, 8], strides = [1, 1, 1]} : vector<8x8x8xf32> to vector<1x8x8xf32>
    %169 = vector.shape_cast %168 : vector<1x8x8xf32> to vector<8x8xf32>
    %c0_93 = arith.constant 0 : index
    %c8 = arith.constant 8 : index
    %170 = vector.load %arg17[%c0_93, %c8] : memref<16x32xf32, #tpu.memory_space<vmem>>, vector<8x8xf32>
    tpu.vector_store %arg17[%c0_93, %c8], %169 {strides = array<i32>} : memref<16x32xf32, #tpu.memory_space<vmem>>, vector<8x8xf32>,
    %171 = vector.extract_strided_slice %164 {offsets = [2, 0, 0], sizes = [1, 8, 8], strides = [1, 1, 1]} : vector<8x8x8xf32> to vector<1x8x8xf32>
    %172 = vector.shape_cast %171 : vector<1x8x8xf32> to vector<8x8xf32>
    %c0_94 = arith.constant 0 : index
    %c16 = arith.constant 16 : index
    %173 = vector.load %arg17[%c0_94, %c16] : memref<16x32xf32, #tpu.memory_space<vmem>>, vector<8x8xf32>
    tpu.vector_store %arg17[%c0_94, %c16], %172 {strides = array<i32>} : memref<16x32xf32, #tpu.memory_space<vmem>>, vector<8x8xf32>,
    %174 = vector.extract_strided_slice %164 {offsets = [3, 0, 0], sizes = [1, 8, 8], strides = [1, 1, 1]} : vector<8x8x8xf32> to vector<1x8x8xf32>
    %175 = vector.shape_cast %174 : vector<1x8x8xf32> to vector<8x8xf32>
    %c0_95 = arith.constant 0 : index
    %c24 = arith.constant 24 : index
    %176 = vector.load %arg17[%c0_95, %c24] : memref<16x32xf32, #tpu.memory_space<vmem>>, vector<8x8xf32>
    tpu.vector_store %arg17[%c0_95, %c24], %175 {strides = array<i32>} : memref<16x32xf32, #tpu.memory_space<vmem>>, vector<8x8xf32>,
    %177 = vector.extract_strided_slice %164 {offsets = [4, 0, 0], sizes = [1, 8, 8], strides = [1, 1, 1]} : vector<8x8x8xf32> to vector<1x8x8xf32>
    %178 = vector.shape_cast %177 : vector<1x8x8xf32> to vector<8x8xf32>
    %c8_96 = arith.constant 8 : index
    %c0_97 = arith.constant 0 : index
    %179 = vector.load %arg17[%c8_96, %c0_97] : memref<16x32xf32, #tpu.memory_space<vmem>>, vector<8x8xf32>
    tpu.vector_store %arg17[%c8_96, %c0_97], %178 {strides = array<i32>} : memref<16x32xf32, #tpu.memory_space<vmem>>, vector<8x8xf32>,
    %180 = vector.extract_strided_slice %164 {offsets = [5, 0, 0], sizes = [1, 8, 8], strides = [1, 1, 1]} : vector<8x8x8xf32> to vector<1x8x8xf32>
    %181 = vector.shape_cast %180 : vector<1x8x8xf32> to vector<8x8xf32>
    %c8_98 = arith.constant 8 : index
    %c8_99 = arith.constant 8 : index
    %182 = vector.load %arg17[%c8_98, %c8_99] : memref<16x32xf32, #tpu.memory_space<vmem>>, vector<8x8xf32>
    tpu.vector_store %arg17[%c8_98, %c8_99], %181 {strides = array<i32>} : memref<16x32xf32, #tpu.memory_space<vmem>>, vector<8x8xf32>,
    %183 = vector.extract_strided_slice %164 {offsets = [6, 0, 0], sizes = [1, 8, 8], strides = [1, 1, 1]} : vector<8x8x8xf32> to vector<1x8x8xf32>
    %184 = vector.shape_cast %183 : vector<1x8x8xf32> to vector<8x8xf32>
    %c8_100 = arith.constant 8 : index
    %c16_101 = arith.constant 16 : index
    %185 = vector.load %arg17[%c8_100, %c16_101] : memref<16x32xf32, #tpu.memory_space<vmem>>, vector<8x8xf32>
    tpu.vector_store %arg17[%c8_100, %c16_101], %184 {strides = array<i32>} : memref<16x32xf32, #tpu.memory_space<vmem>>, vector<8x8xf32>,
    %186 = vector.extract_strided_slice %164 {offsets = [7, 0, 0], sizes = [1, 8, 8], strides = [1, 1, 1]} : vector<8x8x8xf32> to vector<1x8x8xf32>
    %187 = vector.shape_cast %186 : vector<1x8x8xf32> to vector<8x8xf32>
    %c8_102 = arith.constant 8 : index
    %c24_103 = arith.constant 24 : index
    %188 = vector.load %arg17[%c8_102, %c24_103] : memref<16x32xf32, #tpu.memory_space<vmem>>, vector<8x8xf32>
    tpu.vector_store %arg17[%c8_102, %c24_103], %187 {strides = array<i32>} : memref<16x32xf32, #tpu.memory_space<vmem>>, vector<8x8xf32>,
    %c0_104 = arith.constant 0 : index
    %c0_105 = arith.constant 0 : index
    %189 = vector.load %arg17[%c0_104, %c0_105] : memref<16x32xf32, #tpu.memory_space<vmem>>, vector<16x32xf32>
    %c0_106 = arith.constant 0 : index
    %c0_107 = arith.constant 0 : index
    %c0_108 = arith.constant 0 : index
    %190 = vector.load %arg8[%c0_106, %c0_107, %c0_108] : memref<1x32x32xbf16, #tpu.memory_space<vmem>>, vector<1x32x32xbf16>
    %191 = vector.shape_cast %190 : vector<1x32x32xbf16> to vector<32x32xbf16>
    %192 = arith.truncf %189 : vector<16x32xf32> to vector<16x32xbf16>
    %cst_109 = arith.constant dense<0.000000e+00> : vector<16x32xf32>
    %193 = tpu.matmul %192, %191, %cst_109 {dimension_numbers = #tpu.dot_dimension_numbers<[1], [0], [0], [1], [0, 0, 1, 1], [], []>} : vector<16x32xbf16>, vector<32x32xbf16>, vector<16x32xf32> -> vector<16x32xf32>
    %194 = vector.broadcast %7 : vector<1x32xf32> to vector<16x32xf32>
    %195 = arith.addf %193, %194 : vector<16x32xf32>
    %196 = arith.addf %195, %14 : vector<16x32xf32>
    %cst_110 = arith.constant dense<0.000000e+00> : vector<16xf32>
    %197 = vector.multi_reduction <add>, %196, %cst_110 [1] : vector<16x32xf32> to vector<16xf32>
    %198 = vector.shape_cast %197 : vector<16xf32> to vector<16x1xf32>
    %cst_111 = arith.constant 3.200000e+01 : f32
    %199 = vector.broadcast %cst_111 : f32 to vector<16x1xf32>
    %200 = arith.divf %198, %199 : vector<16x1xf32>
    %201 = vector.broadcast %200 : vector<16x1xf32> to vector<16x32xf32>
    %202 = arith.subf %196, %201 : vector<16x32xf32>
    %203 = arith.mulf %202, %202 : vector<16x32xf32>
    %cst_112 = arith.constant dense<0.000000e+00> : vector<16xf32>
    %204 = vector.multi_reduction <add>, %203, %cst_112 [1] : vector<16x32xf32> to vector<16xf32>
    %205 = vector.shape_cast %204 : vector<16xf32> to vector<16x1xf32>
    %cst_113 = arith.constant 3.200000e+01 : f32
    %206 = vector.broadcast %cst_113 : f32 to vector<16x1xf32>
    %207 = arith.divf %205, %206 : vector<16x1xf32>
    %208 = vector.broadcast %200 : vector<16x1xf32> to vector<16x32xf32>
    %209 = arith.subf %196, %208 : vector<16x32xf32>
    %cst_114 = arith.constant 9.99999996E-13 : f32
    %210 = vector.broadcast %cst_114 : f32 to vector<16x1xf32>
    %211 = arith.addf %207, %210 : vector<16x1xf32>
    %212 = math.rsqrt %211 : vector<16x1xf32>
    %213 = vector.broadcast %212 : vector<16x1xf32> to vector<16x32xf32>
    %214 = arith.mulf %209, %213 : vector<16x32xf32>
    %215 = vector.broadcast %9 : vector<1x32xf32> to vector<16x32xf32>
    %216 = arith.mulf %214, %215 : vector<16x32xf32>
    %217 = vector.broadcast %10 : vector<1x32xf32> to vector<16x32xf32>
    %218 = arith.addf %216, %217 : vector<16x32xf32>
    %c0_115 = arith.constant 0 : index
    %c0_116 = arith.constant 0 : index
    %c0_117 = arith.constant 0 : index
    %219 = vector.load %arg9[%c0_115, %c0_116, %c0_117] : memref<1x32x64xbf16, #tpu.memory_space<vmem>>, vector<1x32x64xbf16>
    %220 = vector.shape_cast %219 : vector<1x32x64xbf16> to vector<32x64xbf16>
    %221 = arith.truncf %218 : vector<16x32xf32> to vector<16x32xbf16>
    %cst_118 = arith.constant dense<0.000000e+00> : vector<16x64xf32>
    %222 = tpu.matmul %221, %220, %cst_118 {dimension_numbers = #tpu.dot_dimension_numbers<[1], [0], [0], [1], [0, 0, 1, 1], [], []>} : vector<16x32xbf16>, vector<32x64xbf16>, vector<16x64xf32> -> vector<16x64xf32>
    %223 = vector.broadcast %6 : vector<1x64xf32> to vector<16x64xf32>
    %224 = arith.addf %222, %223 : vector<16x64xf32>
    %cst_119 = arith.constant 5.000000e-01 : f32
    %225 = vector.broadcast %cst_119 : f32 to vector<16x64xf32>
    %226 = arith.mulf %225, %224 : vector<16x64xf32>
    %cst_120 = arith.constant 0.707106769 : f32
    %227 = vector.broadcast %cst_120 : f32 to vector<16x64xf32>
    %228 = arith.mulf %224, %227 : vector<16x64xf32>
    %229 = math.absf %228 : vector<16x64xf32>
    %cst_121 = arith.constant 0.327591091 : f32
    %230 = vector.broadcast %cst_121 : f32 to vector<16x64xf32>
    %231 = arith.mulf %230, %229 : vector<16x64xf32>
    %cst_122 = arith.constant 1.000000e+00 : f32
    %232 = vector.broadcast %cst_122 : f32 to vector<16x64xf32>
    %233 = arith.addf %232, %231 : vector<16x64xf32>
    %cst_123 = arith.constant 1.000000e+00 : f32
    %234 = vector.broadcast %cst_123 : f32 to vector<16x64xf32>
    %235 = arith.divf %234, %233 : vector<16x64xf32>
    %cst_124 = arith.constant 1.06140542 : f32
    %236 = vector.broadcast %cst_124 : f32 to vector<16x64xf32>
    %237 = arith.mulf %236, %235 : vector<16x64xf32>
    %cst_125 = arith.constant -1.45315206 : f32
    %238 = vector.broadcast %cst_125 : f32 to vector<16x64xf32>
    %239 = arith.addf %237, %238 : vector<16x64xf32>
    %240 = arith.mulf %239, %235 : vector<16x64xf32>
    %cst_126 = arith.constant 1.42141378 : f32
    %241 = vector.broadcast %cst_126 : f32 to vector<16x64xf32>
    %242 = arith.addf %240, %241 : vector<16x64xf32>
    %243 = arith.mulf %242, %235 : vector<16x64xf32>
    %cst_127 = arith.constant -0.284496725 : f32
    %244 = vector.broadcast %cst_127 : f32 to vector<16x64xf32>
    %245 = arith.addf %243, %244 : vector<16x64xf32>
    %246 = arith.mulf %245, %235 : vector<16x64xf32>
    %cst_128 = arith.constant 0.254829586 : f32
    %247 = vector.broadcast %cst_128 : f32 to vector<16x64xf32>
    %248 = arith.addf %246, %247 : vector<16x64xf32>
    %249 = arith.mulf %248, %235 : vector<16x64xf32>
    %cst_129 = arith.constant 0.000000e+00 : f32
    %250 = vector.broadcast %cst_129 : f32 to vector<16x64xf32>
    %251 = arith.subf %250, %229 : vector<16x64xf32>
    %252 = arith.mulf %251, %229 : vector<16x64xf32>
    %253 = math.exp %252 : vector<16x64xf32>
    %254 = arith.mulf %249, %253 : vector<16x64xf32>
    %cst_130 = arith.constant 1.000000e+00 : f32
    %255 = vector.broadcast %cst_130 : f32 to vector<16x64xf32>
    %256 = arith.subf %255, %254 : vector<16x64xf32>
    %cst_131 = arith.constant 0.000000e+00 : f32
    %257 = vector.broadcast %cst_131 : f32 to vector<16x64xf32>
    %258 = arith.cmpf oge, %228, %257 : vector<16x64xf32>
    %cst_132 = arith.constant 0.000000e+00 : f32
    %259 = vector.broadcast %cst_132 : f32 to vector<16x64xf32>
    %260 = arith.subf %259, %256 : vector<16x64xf32>
    %261 = arith.select %258, %256, %260 : vector<16x64xi1>, vector<16x64xf32>
    %cst_133 = arith.constant 1.000000e+00 : f32
    %262 = vector.broadcast %cst_133 : f32 to vector<16x64xf32>
    %263 = arith.addf %262, %261 : vector<16x64xf32>
    %264 = arith.mulf %226, %263 : vector<16x64xf32>
    %c0_134 = arith.constant 0 : index
    %c0_135 = arith.constant 0 : index
    %c0_136 = arith.constant 0 : index
    %265 = vector.load %arg10[%c0_134, %c0_135, %c0_136] : memref<1x64x32xbf16, #tpu.memory_space<vmem>>, vector<1x64x32xbf16>
    %266 = vector.shape_cast %265 : vector<1x64x32xbf16> to vector<64x32xbf16>
    %267 = arith.truncf %264 : vector<16x64xf32> to vector<16x64xbf16>
    %cst_137 = arith.constant dense<0.000000e+00> : vector<16x32xf32>
    %268 = tpu.matmul %267, %266, %cst_137 {dimension_numbers = #tpu.dot_dimension_numbers<[1], [0], [0], [1], [0, 0, 1, 1], [], []>} : vector<16x64xbf16>, vector<64x32xbf16>, vector<16x32xf32> -> vector<16x32xf32>
    %269 = vector.broadcast %8 : vector<1x32xf32> to vector<16x32xf32>
    %270 = arith.addf %268, %269 : vector<16x32xf32>
    %271 = arith.addf %270, %218 : vector<16x32xf32>
    %cst_138 = arith.constant dense<0.000000e+00> : vector<16xf32>
    %272 = vector.multi_reduction <add>, %271, %cst_138 [1] : vector<16x32xf32> to vector<16xf32>
    %273 = vector.shape_cast %272 : vector<16xf32> to vector<16x1xf32>
    %cst_139 = arith.constant 3.200000e+01 : f32
    %274 = vector.broadcast %cst_139 : f32 to vector<16x1xf32>
    %275 = arith.divf %273, %274 : vector<16x1xf32>
    %276 = vector.broadcast %275 : vector<16x1xf32> to vector<16x32xf32>
    %277 = arith.subf %271, %276 : vector<16x32xf32>
    %278 = arith.mulf %277, %277 : vector<16x32xf32>
    %cst_140 = arith.constant dense<0.000000e+00> : vector<16xf32>
    %279 = vector.multi_reduction <add>, %278, %cst_140 [1] : vector<16x32xf32> to vector<16xf32>
    %280 = vector.shape_cast %279 : vector<16xf32> to vector<16x1xf32>
    %cst_141 = arith.constant 3.200000e+01 : f32
    %281 = vector.broadcast %cst_141 : f32 to vector<16x1xf32>
    %282 = arith.divf %280, %281 : vector<16x1xf32>
    %283 = vector.broadcast %275 : vector<16x1xf32> to vector<16x32xf32>
    %284 = arith.subf %271, %283 : vector<16x32xf32>
    %cst_142 = arith.constant 9.99999996E-13 : f32
    %285 = vector.broadcast %cst_142 : f32 to vector<16x1xf32>
    %286 = arith.addf %282, %285 : vector<16x1xf32>
    %287 = math.rsqrt %286 : vector<16x1xf32>
    %288 = vector.broadcast %287 : vector<16x1xf32> to vector<16x32xf32>
    %289 = arith.mulf %284, %288 : vector<16x32xf32>
    %290 = vector.broadcast %11 : vector<1x32xf32> to vector<16x32xf32>
    %291 = arith.mulf %289, %290 : vector<16x32xf32>
    %292 = vector.broadcast %12 : vector<1x32xf32> to vector<16x32xf32>
    %293 = arith.addf %291, %292 : vector<16x32xf32>
    %294 = vector.shape_cast %293 : vector<16x32xf32> to vector<2x8x32xf32>
    %c0_143 = arith.constant 0 : index
    %c0_144 = arith.constant 0 : index
    %c0_145 = arith.constant 0 : index
    %295 = vector.load %arg13[%c0_143, %c0_144, %c0_145] : memref<2x8x32xf32, #tpu.memory_space<vmem>>, vector<2x8x32xf32>
    tpu.vector_store %arg13[%c0_143, %c0_144, %c0_145], %294 {strides = array<i32>} : memref<2x8x32xf32, #tpu.memory_space<vmem>>, vector<2x8x32xf32>,
    %c1_i32 = arith.constant 1 : i32
    %296 = arith.cmpi eq, %arg1, %c1_i32 : i32
    %297 = arith.extui %296 : i1 to i32
    %c0_i32_146 = arith.constant 0 : i32
    %298 = arith.cmpi ne, %297, %c0_i32_146 : i32
    scf.if %298 {
      %299 = vector.shape_cast %293 : vector<16x32xf32> to vector<2x8x32xf32>
      %300 = vector.extract_strided_slice %299 {offsets = [0, 0, 0], sizes = [2, 1, 32], strides = [1, 1, 1]} : vector<2x8x32xf32> to vector<2x1x32xf32>
      %301 = vector.shape_cast %300 : vector<2x1x32xf32> to vector<2x32xf32>
      %302 = arith.truncf %301 : vector<2x32xf32> to vector<2x32xbf16>
      %c0_147 = arith.constant 0 : index
      %c0_148 = arith.constant 0 : index
      %303 = vector.load %arg5[%c0_147, %c0_148] : memref<32x128xbf16, #tpu.memory_space<vmem>>, vector<32x128xbf16>
      %cst_149 = arith.constant dense<0.000000e+00> : vector<2x128xf32>
      %304 = tpu.matmul %302, %303, %cst_149 {dimension_numbers = #tpu.dot_dimension_numbers<[1], [0], [0], [1], [0, 0, 1, 1], [], []>} : vector<2x32xbf16>, vector<32x128xbf16>, vector<2x128xf32> -> vector<2x128xf32>
      %c0_150 = arith.constant 0 : index
      %c0_151 = arith.constant 0 : index
      %305 = vector.load %arg6[%c0_150, %c0_151] : memref<1x128xf32, #tpu.memory_space<vmem>>, vector<1x128xf32>
      %306 = vector.broadcast %305 : vector<1x128xf32> to vector<2x128xf32>
      %307 = arith.addf %304, %306 : vector<2x128xf32>
      %c0_152 = arith.constant 0 : index
      %c0_153 = arith.constant 0 : index
      %c0_154 = arith.constant 0 : index
      %308 = vector.load %arg12[%c0_152, %c0_153, %c0_154] : memref<1x2x128xf32, #tpu.memory_space<vmem>>, vector<1x2x128xf32>
      %309 = vector.shape_cast %308 : vector<1x2x128xf32> to vector<2x128xf32>
      %310 = vector.shape_cast %307 : vector<2x128xf32> to vector<1x2x128xf32>
      tpu.vector_store %arg12[%c0_152, %c0_153, %c0_154], %310 {strides = array<i32>} : memref<1x2x128xf32, #tpu.memory_space<vmem>>, vector<1x2x128xf32>,
    } else {
    }
    return
  }
  func.func @transform_0(%arg0: i32, %arg1: i32) -> (i32, i32, i32) {
    %c0_i32 = arith.constant 0 : i32
    %c0_i32_0 = arith.constant 0 : i32
    %c0_i32_1 = arith.constant 0 : i32
    return %arg0, %c0_i32, %c0_i32_0 : i32, i32, i32
  }
  func.func @transform_1(%arg0: i32, %arg1: i32) -> (i32, i32, i32) {
    %c0_i32 = arith.constant 0 : i32
    %c0_i32_0 = arith.constant 0 : i32
    %c0_i32_1 = arith.constant 0 : i32
    return %arg0, %c0_i32, %c0_i32_0 : i32, i32, i32
  }
  func.func @transform_2(%arg0: i32, %arg1: i32) -> (i32, i32) {
    %c0_i32 = arith.constant 0 : i32
    %c0_i32_0 = arith.constant 0 : i32
    %c0_i32_1 = arith.constant 0 : i32
    return %c0_i32, %c0_i32_0 : i32, i32
  }
  func.func @transform_3(%arg0: i32, %arg1: i32) -> (i32, i32) {
    %c0_i32 = arith.constant 0 : i32
    %c0_i32_0 = arith.constant 0 : i32
    %c0_i32_1 = arith.constant 0 : i32
    return %c0_i32, %c0_i32_0 : i32, i32
  }
  func.func @transform_4(%arg0: i32, %arg1: i32) -> (i32, i32) {
    %c0_i32 = arith.constant 0 : i32
    %c0_i32_0 = arith.constant 0 : i32
    %c0_i32_1 = arith.constant 0 : i32
    return %c0_i32, %c0_i32_0 : i32, i32
  }
  func.func @transform_5(%arg0: i32, %arg1: i32) -> (i32, i32, i32) {
    %c0_i32 = arith.constant 0 : i32
    %c0_i32_0 = arith.constant 0 : i32
    %c0_i32_1 = arith.constant 0 : i32
    return %arg1, %c0_i32, %c0_i32_0 : i32, i32, i32
  }
  func.func @transform_6(%arg0: i32, %arg1: i32) -> (i32, i32, i32) {
    %c0_i32 = arith.constant 0 : i32
    %c0_i32_0 = arith.constant 0 : i32
    %c0_i32_1 = arith.constant 0 : i32
    return %arg1, %c0_i32, %c0_i32_0 : i32, i32, i32
  }
  func.func @transform_7(%arg0: i32, %arg1: i32) -> (i32, i32, i32) {
    %c0_i32 = arith.constant 0 : i32
    %c0_i32_0 = arith.constant 0 : i32
    %c0_i32_1 = arith.constant 0 : i32
    return %arg1, %c0_i32, %c0_i32_0 : i32, i32, i32
  }
  func.func @transform_8(%arg0: i32, %arg1: i32) -> (i32, i32, i32) {
    %c0_i32 = arith.constant 0 : i32
    %c0_i32_0 = arith.constant 0 : i32
    %c0_i32_1 = arith.constant 0 : i32
    return %arg1, %c0_i32, %c0_i32_0 : i32, i32, i32
  }
  func.func @transform_9(%arg0: i32, %arg1: i32) -> (i32, i32, i32) {
    %c0_i32 = arith.constant 0 : i32
    %c0_i32_0 = arith.constant 0 : i32
    %c0_i32_1 = arith.constant 0 : i32
    return %arg1, %c0_i32, %c0_i32_0 : i32, i32, i32
  }
  func.func @transform_10(%arg0: i32, %arg1: i32) -> (i32, i32, i32) {
    %c0_i32 = arith.constant 0 : i32
    %c0_i32_0 = arith.constant 0 : i32
    %c0_i32_1 = arith.constant 0 : i32
    return %arg0, %c0_i32, %c0_i32_0 : i32, i32, i32
  }
}

</mosaic_0001>

<llo_original>
// kernel: kobert_classifier_forward.1
$region0: #{kobert_classifier_forward.1}
  #allocation0 [shape = 'u32[]', space=smem, size = 0x4, offset = 0x4, fixed_abs, tag = 'smem constant byte address 0x4 - core index']
  #allocation1 [shape = 'u32[144,128]{1,0:T(1,128)}', space=vmem, size = 0x12000, scoped, tag = 'internal scratch']
  #allocation2 [shape = 'f32[2,8,32]{2,1,0:T(8,128)}', space=vmem, size = 0x2000, scoped, tag = 'scratch operand']
  #allocation3 [shape = 'bf16[8,8,8]{2,1,0:T(8,128)(2,1)}', space=vmem, size = 0x4000, scoped, tag = 'scratch operand']
  #allocation4 [shape = 'bf16[8,8,8]{2,1,0:T(8,128)(2,1)}', space=vmem, size = 0x4000, scoped, tag = 'scratch operand']
  #allocation5 [shape = 'bf16[8,8,8]{2,1,0:T(8,128)(2,1)}', space=vmem, size = 0x4000, scoped, tag = 'scratch operand']
  #allocation6 [shape = 'f32[16,32]{1,0:T(8,128)}', space=vmem, size = 0x2000, scoped, tag = 'scratch operand']
  %s0 = inlined_call_operand.vmem [shape: f32[2,8,32], index: 0, kind: input, shape index: {}]
  %s1 = inlined_call_operand.vmem [shape: f32[2,1,8], index: 1, kind: input, shape index: {}]
  %s2 = inlined_call_operand.vmem [shape: f32[2,32], index: 2, kind: input, shape index: {}]
  %s3 = inlined_call_operand.vmem [shape: bf16[32,128], index: 3, kind: input, shape index: {}]
  %s4 = inlined_call_operand.vmem [shape: f32[1,128], index: 4, kind: input, shape index: {}]
  %s5 = inlined_call_operand.vmem [shape: bf16[2,32,96], index: 5, kind: input, shape index: {}]
  %s6 = inlined_call_operand.vmem [shape: bf16[2,32,32], index: 6, kind: input, shape index: {}]
  %s7 = inlined_call_operand.vmem [shape: bf16[2,32,64], index: 7, kind: input, shape index: {}]
  %s8 = inlined_call_operand.vmem [shape: bf16[2,64,32], index: 8, kind: input, shape index: {}]
  %s9 = inlined_call_operand.vmem [shape: f32[2,8,96], index: 9, kind: input, shape index: {}]
  %s10 = inlined_call_operand.hbm [shape: f32[1,2,128], index: 10, kind: output, shape index: {}]
  %s11 = sld [smem:[#allocation0]]
  $region81: #{kobert_classifier_forward.1} parent=0
    _
  %s13 = ssub.s32 1, %s11
  %s14 = scalar_select 0, %s13, %s11
  $region1: #{kobert_classifier_forward.1} parent=0
    #allocation7 [shape = 'u8[1024]{0}', space=vmem, size = 0x400, scoped, tag = 'output window, operand 0, single buffered']
    #allocation8 [shape = 's32[2]{0}', space=sflag, size = 0x8, scoped, tag = 'scoped memory for kobert_classifier_forward.1']
    %15 = vsyncpa [#allocation8], 0
    loop: start=0, step=1, limit=4
    $region2: #{kobert_classifier_forward.1} parent=1 // loop_pre_header
      _
    $region3: #{kobert_classifier_forward.1} parent=1 // loop_header
      %s17 = sphi 0, %s21
      %p18 = scmp.ge.s32.totalorder %s17, 4
      %s24 = sphi 0, %s36
      %s25 = sphi 0, %s32
      %s26 = sphi 0, %s24
      %s27 = sphi 0, %s25
      %s28 = sphi 0, %s26
      %s29 = sphi 0, %s27
      %s39 = sphi 0, %s41
      %s42 = sphi 0, %s39
      %s43 = sphi 0, %s42
      %s59 = sphi 0, %s43
      %s65 = sphi 0, %s67
      %s68 = sphi 0, %s65
      %s69 = sphi 0, %s68
      %s85 = sphi 0, %s69
      %s89 = sphi 0, %s89
      %s91 = sphi 0, %s89
      %s92 = sphi 0, %s91
      %s106 = sphi 0, %s92
      %s110 = sphi 0, %s110
      %s112 = sphi 0, %s110
      %s113 = sphi 0, %s112
      %s127 = sphi 0, %s113
      %s131 = sphi 0, %s131
      %s133 = sphi 0, %s131
      %s134 = sphi 0, %s133
      %s148 = sphi 0, %s134
      %s154 = sphi 0, %s156
      %s157 = sphi 0, %s154
      %s158 = sphi 0, %s157
      %s174 = sphi 0, %s158
      %s180 = sphi 0, %s182
      %s183 = sphi 0, %s180
      %s184 = sphi 0, %s183
      %s200 = sphi 0, %s184
      %s206 = sphi 0, %s208
      %s209 = sphi 0, %s206
      %s210 = sphi 0, %s209
      %s226 = sphi 0, %s210
      %s232 = sphi 0, %s234
      %s235 = sphi 0, %s232
      %s236 = sphi 0, %s235
      %s252 = sphi 0, %s236
      %s258 = sphi 0, %s260
      %s261 = sphi 0, %s258
      %s262 = sphi 0, %s261
      %s278 = sphi 0, %s262
      %s284 = sphi 0, %s286
      %s287 = sphi 0, %s284
      %s288 = sphi 0, %s287
      %s304 = sphi 0, %s288
    $region4: #{kobert_classifier_forward.1} parent=1 // loop_header_branch
      %20 = sbr.rel (%p18) target = $region8
    $region5: #{kobert_classifier_forward.1} parent=1 // loop_body
      %s22 = ssub.s32 %s17, 1
      %s23 = ssub.s32 %s17, 2
      %s30 = sadd.s32 1, %s25
      %p31 = scmp.ge.s32.totalorder %s30, 2
      %s32 = scalar_select %p31, 0, %s30
      %s33 = sadd.s32 1, %s24
      %s34 = scalar_select %p31, %s33, %s24
      %p35 = scmp.ge.s32.totalorder %s34, 1
      %s36 = scalar_select %p35, 0, %s34
      %s37 = ssub.s32 %s24, %s36
      %p38 = scmp.eq.s32.totalorder %s37, 0
      %s40 = sadd.s32 %s39, 1
      %s41 = scalar_select %p38, %s39, %s40
      %p44 = pneg %p38
      %p45 = scmp.eq.s32.totalorder %s17, 1
      %p46 = por %p44, %p45
      %p47 = scmp.ne.s32.totalorder %s39, %s42
      %p48 = scmp.eq.s32.totalorder %s17, 0
      %p49 = por %p47, %p48
      %p50 = scmp.ne.s32.totalorder %s39, %s42
      %p51 = scmp.eq.s32.totalorder %s22, 1
      %p52 = por %p50, %p51
      %p53 = scmp.ne.s32.totalorder %s42, %s43
      %p54 = scmp.eq.s32.totalorder %s22, 0
      %p55 = por %p53, %p54
      %p56 = scmp.ne.s32.totalorder %s42, %s43
      %p57 = scmp.eq.s32.totalorder %s23, 1
      %p58 = por %p56, %p57
      %p60 = scmp.ne.s32.totalorder %s43, %s59
      %p61 = scmp.eq.s32.totalorder %s23, 0
      %p62 = por %p60, %p61
      %s63 = ssub.s32 %s24, %s36
      %p64 = scmp.eq.s32.totalorder %s63, 0
      %s66 = sadd.s32 %s65, 1
      %s67 = scalar_select %p64, %s65, %s66
      %p70 = pneg %p64
      %p71 = scmp.eq.s32.totalorder %s17, 1
      %p72 = por %p70, %p71
      %p73 = scmp.ne.s32.totalorder %s65, %s68
      %p74 = scmp.eq.s32.totalorder %s17, 0
      %p75 = por %p73, %p74
      %p76 = scmp.ne.s32.totalorder %s65, %s68
      %p77 = scmp.eq.s32.totalorder %s22, 1
      %p78 = por %p76, %p77
      %p79 = scmp.ne.s32.totalorder %s68, %s69
      %p80 = scmp.eq.s32.totalorder %s22, 0
      %p81 = por %p79, %p80
      %p82 = scmp.ne.s32.totalorder %s68, %s69
      %p83 = scmp.eq.s32.totalorder %s23, 1
      %p84 = por %p82, %p83
      %p86 = scmp.ne.s32.totalorder %s69, %s85
      %p87 = scmp.eq.s32.totalorder %s23, 0
      %p88 = por %p86, %p87
      %s90 = sadd.s32 %s89, 1
      %p93 = scmp.eq.s32.totalorder %s17, 1
      %p94 = scmp.ne.s32.totalorder %s89, %s91
      %p95 = scmp.eq.s32.totalorder %s17, 0
      %p96 = por %p94, %p95
      %p97 = scmp.ne.s32.totalorder %s89, %s91
      %p98 = scmp.eq.s32.totalorder %s22, 1
      %p99 = por %p97, %p98
      %p100 = scmp.ne.s32.totalorder %s91, %s92
      %p101 = scmp.eq.s32.totalorder %s22, 0
      %p102 = por %p100, %p101
      %p103 = scmp.ne.s32.totalorder %s91, %s92
      %p104 = scmp.eq.s32.totalorder %s23, 1
      %p105 = por %p103, %p104
      %p107 = scmp.ne.s32.totalorder %s92, %s106
      %p108 = scmp.eq.s32.totalorder %s23, 0
      %p109 = por %p107, %p108
      %s111 = sadd.s32 %s110, 1
      %p114 = scmp.eq.s32.totalorder %s17, 1
      %p115 = scmp.ne.s32.totalorder %s110, %s112
      %p116 = scmp.eq.s32.totalorder %s17, 0
      %p117 = por %p115, %p116
      %p118 = scmp.ne.s32.totalorder %s110, %s112
      %p119 = scmp.eq.s32.totalorder %s22, 1
      %p120 = por %p118, %p119
      %p121 = scmp.ne.s32.totalorder %s112, %s113
      %p122 = scmp.eq.s32.totalorder %s22, 0
      %p123 = por %p121, %p122
      %p124 = scmp.ne.s32.totalorder %s112, %s113
      %p125 = scmp.eq.s32.totalorder %s23, 1
      %p126 = por %p124, %p125
      %p128 = scmp.ne.s32.totalorder %s113, %s127
      %p129 = scmp.eq.s32.totalorder %s23, 0
      %p130 = por %p128, %p129
      %s132 = sadd.s32 %s131, 1
      %p135 = scmp.eq.s32.totalorder %s17, 1
      %p136 = scmp.ne.s32.totalorder %s131, %s133
      %p137 = scmp.eq.s32.totalorder %s17, 0
      %p138 = por %p136, %p137
      %p139 = scmp.ne.s32.totalorder %s131, %s133
      %p140 = scmp.eq.s32.totalorder %s22, 1
      %p141 = por %p139, %p140
      %p142 = scmp.ne.s32.totalorder %s133, %s134
      %p143 = scmp.eq.s32.totalorder %s22, 0
      %p144 = por %p142, %p143
      %p145 = scmp.ne.s32.totalorder %s133, %s134
      %p146 = scmp.eq.s32.totalorder %s23, 1
      %p147 = por %p145, %p146
      %p149 = scmp.ne.s32.totalorder %s134, %s148
      %p150 = scmp.eq.s32.totalorder %s23, 0
      %p151 = por %p149, %p150
      %s152 = ssub.s32 %s25, %s32
      %p153 = scmp.eq.s32.totalorder %s152, 0
      %s155 = sadd.s32 %s154, 1
      %s156 = scalar_select %p153, %s154, %s155
      %p159 = pneg %p153
      %p160 = scmp.eq.s32.totalorder %s17, 1
      %p161 = por %p159, %p160
      %p162 = scmp.ne.s32.totalorder %s154, %s157
      %p163 = scmp.eq.s32.totalorder %s17, 0
      %p164 = por %p162, %p163
      %p165 = scmp.ne.s32.totalorder %s154, %s157
      %p166 = scmp.eq.s32.totalorder %s22, 1
      %p167 = por %p165, %p166
      %p168 = scmp.ne.s32.totalorder %s157, %s158
      %p169 = scmp.eq.s32.totalorder %s22, 0
      %p170 = por %p168, %p169
      %p171 = scmp.ne.s32.totalorder %s157, %s158
      %p172 = scmp.eq.s32.totalorder %s23, 1
      %p173 = por %p171, %p172
      %p175 = scmp.ne.s32.totalorder %s158, %s174
      %p176 = scmp.eq.s32.totalorder %s23, 0
      %p177 = por %p175, %p176
      %s178 = ssub.s32 %s25, %s32
      %p179 = scmp.eq.s32.totalorder %s178, 0
      %s181 = sadd.s32 %s180, 1
      %s182 = scalar_select %p179, %s180, %s181
      %p185 = pneg %p179
      %p186 = scmp.eq.s32.totalorder %s17, 1
      %p187 = por %p185, %p186
      %p188 = scmp.ne.s32.totalorder %s180, %s183
      %p189 = scmp.eq.s32.totalorder %s17, 0
      %p190 = por %p188, %p189
      %p191 = scmp.ne.s32.totalorder %s180, %s183
      %p192 = scmp.eq.s32.totalorder %s22, 1
      %p193 = por %p191, %p192
      %p194 = scmp.ne.s32.totalorder %s183, %s184
      %p195 = scmp.eq.s32.totalorder %s22, 0
      %p196 = por %p194, %p195
      %p197 = scmp.ne.s32.totalorder %s183, %s184
      %p198 = scmp.eq.s32.totalorder %s23, 1
      %p199 = por %p197, %p198
      %p201 = scmp.ne.s32.totalorder %s184, %s200
      %p202 = scmp.eq.s32.totalorder %s23, 0
      %p203 = por %p201, %p202
      %s204 = ssub.s32 %s25, %s32
      %p205 = scmp.eq.s32.totalorder %s204, 0
      %s207 = sadd.s32 %s206, 1
      %s208 = scalar_select %p205, %s206, %s207
      %p211 = pneg %p205
      %p212 = scmp.eq.s32.totalorder %s17, 1
      %p213 = por %p211, %p212
      %p214 = scmp.ne.s32.totalorder %s206, %s209
      %p215 = scmp.eq.s32.totalorder %s17, 0
      %p216 = por %p214, %p215
      %p217 = scmp.ne.s32.totalorder %s206, %s209
      %p218 = scmp.eq.s32.totalorder %s22, 1
      %p219 = por %p217, %p218
      %p220 = scmp.ne.s32.totalorder %s209, %s210
      %p221 = scmp.eq.s32.totalorder %s22, 0
      %p222 = por %p220, %p221
      %p223 = scmp.ne.s32.totalorder %s209, %s210
      %p224 = scmp.eq.s32.totalorder %s23, 1
      %p225 = por %p223, %p224
      %p227 = scmp.ne.s32.totalorder %s210, %s226
      %p228 = scmp.eq.s32.totalorder %s23, 0
      %p229 = por %p227, %p228
      %s230 = ssub.s32 %s25, %s32
      %p231 = scmp.eq.s32.totalorder %s230, 0
      %s233 = sadd.s32 %s232, 1
      %s234 = scalar_select %p231, %s232, %s233
      %p237 = pneg %p231
      %p238 = scmp.eq.s32.totalorder %s17, 1
      %p239 = por %p237, %p238
      %p240 = scmp.ne.s32.totalorder %s232, %s235
      %p241 = scmp.eq.s32.totalorder %s17, 0
      %p242 = por %p240, %p241
      %p243 = scmp.ne.s32.totalorder %s232, %s235
      %p244 = scmp.eq.s32.totalorder %s22, 1
      %p245 = por %p243, %p244
      %p246 = scmp.ne.s32.totalorder %s235, %s236
      %p247 = scmp.eq.s32.totalorder %s22, 0
      %p248 = por %p246, %p247
      %p249 = scmp.ne.s32.totalorder %s235, %s236
      %p250 = scmp.eq.s32.totalorder %s23, 1
      %p251 = por %p249, %p250
      %p253 = scmp.ne.s32.totalorder %s236, %s252
      %p254 = scmp.eq.s32.totalorder %s23, 0
      %p255 = por %p253, %p254
      %s256 = ssub.s32 %s25, %s32
      %p257 = scmp.eq.s32.totalorder %s256, 0
      %s259 = sadd.s32 %s258, 1
      %s260 = scalar_select %p257, %s258, %s259
      %p263 = pneg %p257
      %p264 = scmp.eq.s32.totalorder %s17, 1
      %p265 = por %p263, %p264
      %p266 = scmp.ne.s32.totalorder %s258, %s261
      %p267 = scmp.eq.s32.totalorder %s17, 0
      %p268 = por %p266, %p267
      %p269 = scmp.ne.s32.totalorder %s258, %s261
      %p270 = scmp.eq.s32.totalorder %s22, 1
      %p271 = por %p269, %p270
      %p272 = scmp.ne.s32.totalorder %s261, %s262
      %p273 = scmp.eq.s32.totalorder %s22, 0
      %p274 = por %p272, %p273
      %p275 = scmp.ne.s32.totalorder %s261, %s262
      %p276 = scmp.eq.s32.totalorder %s23, 1
      %p277 = por %p275, %p276
      %p279 = scmp.ne.s32.totalorder %s262, %s278
      %p280 = scmp.eq.s32.totalorder %s23, 0
      %p281 = por %p279, %p280
      %s282 = ssub.s32 %s24, %s36
      %p283 = scmp.eq.s32.totalorder %s282, 0
      %s285 = sadd.s32 %s284, 1
      %s286 = scalar_select %p283, %s284, %s285
      %p289 = pneg %p283
      %p290 = scmp.eq.s32.totalorder %s17, 1
      %p291 = por %p289, %p290
      %p292 = scmp.ne.s32.totalorder %s284, %s287
      %p293 = scmp.eq.s32.totalorder %s17, 0
      %p294 = por %p292, %p293
      %p295 = scmp.ne.s32.totalorder %s284, %s287
      %p296 = scmp.eq.s32.totalorder %s22, 1
      %p297 = por %p295, %p296
      %p298 = scmp.ne.s32.totalorder %s287, %s288
      %p299 = scmp.eq.s32.totalorder %s22, 0
      %p300 = por %p298, %p299
      %p301 = scmp.ne.s32.totalorder %s287, %s288
      %p302 = scmp.eq.s32.totalorder %s23, 1
      %p303 = por %p301, %p302
      %p305 = scmp.ne.s32.totalorder %s288, %s304
      %p306 = scmp.eq.s32.totalorder %s23, 0
      %p307 = por %p305, %p306
      %p308 = scmp.le.s32.totalorder 1, %s17
      %p309 = scmp.lt.s32.totalorder %s17, 3
      %p310 = pnand %p308, %p309
      %p311 = pneg %p310
      // Predicated region
      $region9: #{kobert_classifier_forward.1} parent=5 // pred_check
        _
      $region10: #{kobert_classifier_forward.1} parent=5 // pred_check_branch
        %313 = sbr.rel (%p310) target = $region12
      $region11: #{kobert_classifier_forward.1} parent=5 // pred_region
        %s314 = ssub.s32 %s17, 1
        // Predicated region
        $region13: #{kobert_classifier_forward.1} parent=11 // pred_check
          %p315 = pneg %p55
        $region14: #{kobert_classifier_forward.1} parent=11 // pred_check_branch
          %317 = sbr.rel (%p315) target = $region16
        $region15: #{kobert_classifier_forward.1} parent=11 // pred_region
          %s318 = smul.u32 2, %s26
          %p319 = scmp.lt.s32.totalorder %s318, 1
          %s320 = scalar_select %p319, %s318, 1
          %s321 = smul.addr %s320, 8
          %s322 = scalar_lea.vmem %s0, %s321
          %s323 = smul.u32 2, %s26
        $region16: #{kobert_classifier_forward.1} parent=11 // pred_fallthru
          _
        // Predicated region
        $region17: #{kobert_classifier_forward.1} parent=11 // pred_check
          %p324 = pneg %p81
        $region18: #{kobert_classifier_forward.1} parent=11 // pred_check_branch
          %326 = sbr.rel (%p324) target = $region20
        $region19: #{kobert_classifier_forward.1} parent=11 // pred_region
          %s327 = smul.u32 2, %s26
          %p328 = scmp.lt.s32.totalorder %s327, 1
          %s329 = scalar_select %p328, %s327, 1
          %s330 = scalar_lea.vmem %s1, %s329
          %s331 = smul.u32 2, %s26
        $region20: #{kobert_classifier_forward.1} parent=11 // pred_fallthru
          _
        // Predicated region
        $region21: #{kobert_classifier_forward.1} parent=11 // pred_check
          %p332 = pneg %p102
        $region22: #{kobert_classifier_forward.1} parent=11 // pred_check_branch
          %334 = sbr.rel (%p332) target = $region24
        $region23: #{kobert_classifier_forward.1} parent=11 // pred_region
          _
        $region24: #{kobert_classifier_forward.1} parent=11 // pred_fallthru
          _
        // Predicated region
        $region25: #{kobert_classifier_forward.1} parent=11 // pred_check
          %p335 = pneg %p123
        $region26: #{kobert_classifier_forward.1} parent=11 // pred_check_branch
          %337 = sbr.rel (%p335) target = $region28
        $region27: #{kobert_classifier_forward.1} parent=11 // pred_region
          _
        $region28: #{kobert_classifier_forward.1} parent=11 // pred_fallthru
          _
        // Predicated region
        $region29: #{kobert_classifier_forward.1} parent=11 // pred_check
          %p338 = pneg %p144
        $region30: #{kobert_classifier_forward.1} parent=11 // pred_check_branch
          %340 = sbr.rel (%p338) target = $region32
        $region31: #{kobert_classifier_forward.1} parent=11 // pred_region
          _
        $region32: #{kobert_classifier_forward.1} parent=11 // pred_fallthru
          _
      $region12: #{kobert_classifier_forward.1} parent=5 // pred_fallthru
        _
      %p341 = scmp.lt.s32.totalorder %s17, 2
      // Predicated region
      $region33: #{kobert_classifier_forward.1} parent=5 // pred_check
        %p342 = pneg %p341
      $region34: #{kobert_classifier_forward.1} parent=5 // pred_check_branch
        %344 = sbr.rel (%p342) target = $region36
      $region35: #{kobert_classifier_forward.1} parent=5 // pred_region
        // Predicated region
        $region37: #{kobert_classifier_forward.1} parent=35 // pred_check
          %p345 = pneg %p164
        $region38: #{kobert_classifier_forward.1} parent=35 // pred_check_branch
          %347 = sbr.rel (%p345) target = $region40
        $region39: #{kobert_classifier_forward.1} parent=35 // pred_region
          %p348 = scmp.lt.s32.totalorder %s25, 1
          %s349 = scalar_select %p348, %s25, 1
          %s350 = smul.addr %s349, 4
          %s351 = smul.addr %s350, 4
          %s352 = scalar_lea.vmem %s5, %s351
        $region40: #{kobert_classifier_forward.1} parent=35 // pred_fallthru
          _
        // Predicated region
        $region41: #{kobert_classifier_forward.1} parent=35 // pred_check
          %p353 = pneg %p190
        $region42: #{kobert_classifier_forward.1} parent=35 // pred_check_branch
          %355 = sbr.rel (%p353) target = $region44
        $region43: #{kobert_classifier_forward.1} parent=35 // pred_region
          %p356 = scmp.lt.s32.totalorder %s25, 1
          %s357 = scalar_select %p356, %s25, 1
          %s358 = smul.addr %s357, 4
          %s359 = smul.addr %s358, 4
          %s360 = scalar_lea.vmem %s6, %s359
        $region44: #{kobert_classifier_forward.1} parent=35 // pred_fallthru
          _
        // Predicated region
        $region45: #{kobert_classifier_forward.1} parent=35 // pred_check
          %p361 = pneg %p216
        $region46: #{kobert_classifier_forward.1} parent=35 // pred_check_branch
          %363 = sbr.rel (%p361) target = $region48
        $region47: #{kobert_classifier_forward.1} parent=35 // pred_region
          %p364 = scmp.lt.s32.totalorder %s25, 1
          %s365 = scalar_select %p364, %s25, 1
          %s366 = smul.addr %s365, 4
          %s367 = smul.addr %s366, 4
          %s368 = scalar_lea.vmem %s7, %s367
        $region48: #{kobert_classifier_forward.1} parent=35 // pred_fallthru
          _
        // Predicated region
        $region49: #{kobert_classifier_forward.1} parent=35 // pred_check
          %p369 = pneg %p242
        $region50: #{kobert_classifier_forward.1} parent=35 // pred_check_branch
          %371 = sbr.rel (%p369) target = $region52
        $region51: #{kobert_classifier_forward.1} parent=35 // pred_region
          %p372 = scmp.lt.s32.totalorder %s25, 1
          %s373 = scalar_select %p372, %s25, 1
          %s374 = smul.addr %s373, 8
          %s375 = smul.addr %s374, 4
          %s376 = scalar_lea.vmem %s8, %s375
        $region52: #{kobert_classifier_forward.1} parent=35 // pred_fallthru
          _
        // Predicated region
        $region53: #{kobert_classifier_forward.1} parent=35 // pred_check
          %p377 = pneg %p268
        $region54: #{kobert_classifier_forward.1} parent=35 // pred_check_branch
          %379 = sbr.rel (%p377) target = $region56
        $region55: #{kobert_classifier_forward.1} parent=35 // pred_region
          %p380 = scmp.lt.s32.totalorder %s25, 1
          %s381 = scalar_select %p380, %s25, 1
          %s382 = smul.addr %s381, 8
          %s383 = scalar_lea.vmem %s9, %s382
        $region56: #{kobert_classifier_forward.1} parent=35 // pred_fallthru
          _
      $region36: #{kobert_classifier_forward.1} parent=5 // pred_fallthru
        _
      %p384 = scmp.le.s32.totalorder 1, %s17
      %p385 = scmp.lt.s32.totalorder %s17, 3
      %p386 = pnand %p384, %p385
      %p387 = pneg %p386
      // Predicated region
      $region57: #{kobert_classifier_forward.1} parent=5 // pred_check
        _
      $region58: #{kobert_classifier_forward.1} parent=5 // pred_check_branch
        %389 = sbr.rel (%p386) target = $region60
      $region59: #{kobert_classifier_forward.1} parent=5 // pred_region
        %s390 = ssub.s32 %s17, 1
        %s391 = smul.u32 2, %s26
        %p392 = scmp.lt.s32.totalorder %s391, 1
        %s393 = scalar_select %p392, %s391, 1
        %s394 = smul.addr %s393, 8
        %s395 = scalar_lea.vmem %s0, %s394
        %p396 = pneg %p55
        %p397 = pneg %p52
        %s398 = smul.u32 2, %s26
        %p399 = scmp.lt.s32.totalorder %s398, 1
        %s400 = scalar_select %p399, %s398, 1
        %s401 = scalar_lea.vmem %s1, %s400
        %p402 = pneg %p81
        %p403 = pneg %p78
        %p404 = pneg %p102
        %p405 = pneg %p99
        %p406 = pneg %p123
        %p407 = pneg %p120
        %p408 = pneg %p144
        %p409 = pneg %p141
        %p410 = scmp.lt.s32.totalorder %s27, 1
        %s411 = scalar_select %p410, %s27, 1
        %s412 = smul.addr %s411, 4
        %s413 = smul.addr %s412, 4
        %s414 = scalar_lea.vmem %s5, %s413
        %p415 = pneg %p170
        %p416 = pneg %p167
        %p417 = scmp.lt.s32.totalorder %s27, 1
        %s418 = scalar_select %p417, %s27, 1
        %s419 = smul.addr %s418, 4
        %s420 = smul.addr %s419, 4
        %s421 = scalar_lea.vmem %s6, %s420
        %p422 = pneg %p196
        %p423 = pneg %p193
        %p424 = scmp.lt.s32.totalorder %s27, 1
        %s425 = scalar_select %p424, %s27, 1
        %s426 = smul.addr %s425, 4
        %s427 = smul.addr %s426, 4
        %s428 = scalar_lea.vmem %s7, %s427
        %p429 = pneg %p222
        %p430 = pneg %p219
        %p431 = scmp.lt.s32.totalorder %s27, 1
        %s432 = scalar_select %p431, %s27, 1
        %s433 = smul.addr %s432, 8
        %s434 = smul.addr %s433, 4
        %s435 = scalar_lea.vmem %s8, %s434
        %p436 = pneg %p248
        %p437 = pneg %p245
        %p438 = scmp.lt.s32.totalorder %s27, 1
        %s439 = scalar_select %p438, %s27, 1
        %s440 = smul.addr %s439, 8
        %s441 = scalar_lea.vmem %s9, %s440
        %p442 = pneg %p274
        %p443 = pneg %p271
        %p444 = pneg %p300
        %p445 = pneg %p297
        %s446 = smul.u32 2, %s26
        %p447 = scmp.lt.s32.totalorder %s446, 1
        %s448 = scalar_select %p447, %s446, 1
        %s449 = smul.addr %s448, 8
        %s450 = scalar_lea.vmem %s0, %s449
        %s451 = smul.u32 2, %s26
        %s452 = smul.u32 2, %s26
        %p453 = scmp.lt.s32.totalorder %s452, 1
        %s454 = scalar_select %p453, %s452, 1
        %s455 = scalar_lea.vmem %s1, %s454
        %s456 = smul.u32 2, %s26
        %p457 = scmp.lt.s32.totalorder %s27, 1
        %s458 = scalar_select %p457, %s27, 1
        %s459 = smul.addr %s458, 4
        %s460 = smul.addr %s459, 4
        %s461 = scalar_lea.vmem %s5, %s460
        %p462 = scmp.lt.s32.totalorder %s27, 1
        %s463 = scalar_select %p462, %s27, 1
        %s464 = smul.addr %s463, 4
        %s465 = smul.addr %s464, 4
        %s466 = scalar_lea.vmem %s6, %s465
        %p467 = scmp.lt.s32.totalorder %s27, 1
        %s468 = scalar_select %p467, %s27, 1
        %s469 = smul.addr %s468, 4
        %s470 = smul.addr %s469, 4
        %s471 = scalar_lea.vmem %s7, %s470
        %p472 = scmp.lt.s32.totalorder %s27, 1
        %s473 = scalar_select %p472, %s27, 1
        %s474 = smul.addr %s473, 8
        %s475 = smul.addr %s474, 4
        %s476 = scalar_lea.vmem %s8, %s475
        %p477 = scmp.lt.s32.totalorder %s27, 1
        %s478 = scalar_select %p477, %s27, 1
        %s479 = smul.addr %s478, 8
        %s480 = scalar_lea.vmem %s9, %s479
        %p482 = scmp.eq.s32.totalorder %s27, 0
        // Predicated region
        $region61: #{kobert_classifier_forward.1} parent=59 // pred_check
          %p483 = pneg %p482
        $region62: #{kobert_classifier_forward.1} parent=59 // pred_check_branch
          %485 = sbr.rel (%p483) target = $region64
        $region63: #{kobert_classifier_forward.1} parent=59 // pred_region
          %v486 = vld [vmem:[%s450] sm:$0xff]
          %v487 = vld [vmem:[%s450 + $0x8] sm:$0xff]
          %v488 = vld [vmem:[%s2] sm:$0x1]
          %v489 = vld [vmem:[%s2 + $0x1] sm:$0x1]
          %vm490 = vcmask 261120
          %v491 = vsel %vm490, %v486, 0.0
          %492 = vadd.xlane.f32.xlu0 %v491
          %v493 = vpop.xlane.xlu0 %492
          %v494 = vsel %vm490, %v487, 0.0
          %495 = vadd.xlane.f32.xlu0 %v494
          %v496 = vpop.xlane.xlu0 %495
          %v497 = vrcp.pop 32.0
          %v498 = vmul.f32 %v493, %v497
          %v499 = vmul.f32 %v496, %v497
          %v500 = vsub.f32 %v486, %v498
          %v501 = vsub.f32 %v487, %v499
          %v502 = vmul.f32 %v500, %v500
          %v503 = vmul.f32 %v501, %v501
          %v504 = vsel %vm490, %v502, 0.0
          %505 = vadd.xlane.f32.xlu0 %v504
          %v506 = vpop.xlane.xlu0 %505
          %v507 = vsel %vm490, %v503, 0.0
          %508 = vadd.xlane.f32.xlu0 %v507
          %v509 = vpop.xlane.xlu0 %508
          %v510 = vmul.f32 %v506, %v497
          %v511 = vmul.f32 %v509, %v497
          %v512 = vadd.f32 %v510, 1e-12
          %v513 = vadd.f32 %v511, 1e-12
          %v514 = vrsqrt.pop %v512
          %v515 = vrsqrt.pop %v513
          %v516 = vmul.f32 %v500, %v514
          %v517 = vmul.f32 %v501, %v515
          %v518 = vlaneseq
          %v519 = vshrl.u32 %v518, 7
          %v520 = vsub.s32 0, %v519
          %v521 = vrot.slane %v488, %v520
          %v522 = vmul.f32 %v516, %v521
          %v523 = vmul.f32 %v517, %v521
          %v524 = vlaneseq
          %v525 = vshrl.u32 %v524, 7
          %v526 = vsub.s32 0, %v525
          %v527 = vrot.slane %v489, %v526
          %v528 = vadd.f32 %v522, %v527
          %v529 = vadd.f32 %v523, %v527
          %530 = vst.msk [vmem:[#allocation2] sm:$0xff] %vm490, %v528
          %531 = vst.msk [vmem:[#allocation2 + $0x8] sm:$0xff] %vm490, %v529
        $region64: #{kobert_classifier_forward.1} parent=59 // pred_fallthru
          _
        %v532 = vld [vmem:[%s480] sm:$0xff]
        %v533 = vld [vmem:[#allocation2] sm:$0xff]
        %v534 = vld [vmem:[#allocation2 + $0x8] sm:$0xff]
        %v535 = vld [vmem:[%s461] sm:$0xf]
        %v536 = vld [vmem:[%s461 + $0x4] sm:$0xf]
        %v537 = vld [vmem:[%s461 + $0x8] sm:$0xf]
        %v538 = vld [vmem:[%s461 + $0xc] sm:$0xf]
        %v539 = vpack.c.bf16 %v534, %v533
        %v540 = vlaneseq
        %v541 = vshrl.u32 %v540, 7
        %v542 = vsub.s32 0, %v541
        %v543 = vrot.slane %v532, %v542
        %v548 = vunpack.c.l.b16 %v535
        %v549 = vunpack.c.l.b16 %v536
        %v550 = vunpack.c.l.b16 %v537
        %v551 = vunpack.c.l.b16 %v538
        %v552 = vpack.c.b16 %v549, %v548
        %v553 = vpack.c.b16 %v551, %v550
        %vm556 = vcmask 261120
        %v558 = vsel %vm556, %v539, 0
        %560 = vmatprep.subr.bf16.mxu0 0
        %561 = vmatpush1.bf16.msra.mxu0 0
        %562 = vmatprep.subr.bf16.mxu0 0
        %563 = vmatpush1.bf16.msra.mxu0 0
        %564 = vmatprep.subr.bf16.mxu0 0
        %565 = vmatpush1.bf16.msra.mxu0 0
        %566 = vmatprep.subr.bf16.mxu0 0
        %567 = vmatpush1.bf16.msra.mxu0 0
        %568 = vmatprep.subr.bf16.mxu0 0
        %569 = vmatpush1.bf16.msra.mxu0 0
        %570 = vmatprep.subr.bf16.mxu0 0
        %571 = vmatpush1.bf16.msra.mxu0 0
        %572 = vmatprep.subr.bf16.mxu0 0
        %573 = vmatpush1.bf16.msra.mxu0 %v553
        %574 = vmatprep.subr.bf16.mxu0 0
        %575 = vmatpush1.bf16.msra.mxu0 %v552
        %576 = vmatprep.subr.bf16.mxu0 0
        %577 = vmatpush2.bf16.msra.mxu0 0
        %578 = vmatprep.subr.bf16.mxu0 0
        %579 = vmatpush2.bf16.msra.mxu0 0
        %580 = vmatprep.subr.bf16.mxu0 0
        %581 = vmatpush2.bf16.msra.mxu0 0
        %582 = vmatprep.subr.bf16.mxu0 0
        %583 = vmatpush2.bf16.msra.mxu0 0
        %584 = vmatprep.subr.bf16.mxu0 0
        %585 = vmatpush2.bf16.msra.mxu0 0
        %586 = vmatprep.subr.bf16.mxu0 0
        %587 = vmatpush2.bf16.msra.mxu0 0
        %588 = vmatprep.subr.bf16.mxu0 0
        %589 = vmatpush2.bf16.msra.mxu0 0
        %590 = vmatprep.subr.bf16.mxu0 0
        %591 = vmatpush2.bf16.msra.mxu0 0
        %592 = vmatprep.mubr.bf16.mxu0 0
        %593 = vmatmul.mubr.bf16.gmra.mxu0 %v558
        %v594 = vpop.f32.mrf.mxu0
        %v595 = vadd.f32 %v543, %v594
        %v596 = vpop.f32.mrf.mxu0
        %v597 = vpop.f32.mrf.mxu0
        %v598 = vadd.f32 %v543, %v597
        %v599 = vpop.f32.mrf.mxu0
        %600 = vdwg.mxu0
        %v601 = vpack.c.bf16 %v595, %v595
        %vm602 = vcmask 60416
        %603 = vst.msk [vmem:[#allocation3] sm:$0xf] %vm602, %v601
        %v605 = vunpack.c.l.b16 %v601
        %v606 = vpack.c.b16 %v605, %v605
        %607 = vrot.lane.b32.xlu0 %v606, 96
        %v608 = vpop.permute.xlu0 %607
        %610 = vst.msk [vmem:[#allocation4] sm:$0xf] %vm602, %v608
        %611 = vrot.lane.b32.xlu0 %v606, 64
        %v612 = vpop.permute.xlu0 %611
        %614 = vst.msk [vmem:[#allocation5] sm:$0xf] %vm602, %v612
        %615 = vrot.lane.b32.xlu0 %v606, 120
        %v616 = vpop.permute.xlu0 %615
        %s618 = scalar_lea.vmem [#allocation3], 4
        %619 = vst.msk [vmem:[%s618] sm:$0xf] %vm602, %v616
        %620 = vrot.lane.b32.xlu0 %v606, 88
        %v621 = vpop.permute.xlu0 %620
        %s623 = scalar_lea.vmem [#allocation4], 4
        %624 = vst.msk [vmem:[%s623] sm:$0xf] %vm602, %v621
        %625 = vrot.lane.b32.xlu0 %v606, 56
        %v626 = vpop.permute.xlu0 %625
        %s628 = scalar_lea.vmem [#allocation5], 4
        %629 = vst.msk [vmem:[%s628] sm:$0xf] %vm602, %v626
        %630 = vrot.lane.b32.xlu0 %v606, 112
        %v631 = vpop.permute.xlu0 %630
        %s633 = scalar_lea.vmem [#allocation3], 8
        %634 = vst.msk [vmem:[%s633] sm:$0xf] %vm602, %v631
        %635 = vrot.lane.b32.xlu0 %v606, 80
        %v636 = vpop.permute.xlu0 %635
        %s638 = scalar_lea.vmem [#allocation4], 8
        %639 = vst.msk [vmem:[%s638] sm:$0xf] %vm602, %v636
        %640 = vrot.lane.b32.xlu0 %v606, 48
        %v641 = vpop.permute.xlu0 %640
        %s643 = scalar_lea.vmem [#allocation5], 8
        %644 = vst.msk [vmem:[%s643] sm:$0xf] %vm602, %v641
        %645 = vrot.lane.b32.xlu0 %v606, 104
        %v646 = vpop.permute.xlu0 %645
        %s648 = scalar_lea.vmem [#allocation3], 12
        %649 = vst.msk [vmem:[%s648] sm:$0xf] %vm602, %v646
        %650 = vrot.lane.b32.xlu0 %v606, 72
        %v651 = vpop.permute.xlu0 %650
        %s653 = scalar_lea.vmem [#allocation4], 12
        %654 = vst.msk [vmem:[%s653] sm:$0xf] %vm602, %v651
        %655 = vrot.lane.b32.xlu0 %v606, 40
        %v656 = vpop.permute.xlu0 %655
        %s658 = scalar_lea.vmem [#allocation5], 12
        %659 = vst.msk [vmem:[%s658] sm:$0xf] %vm602, %v656
        %v660 = vpack.c.bf16 %v598, %v598
        %s661 = scalar_lea.vmem [#allocation3], 16
        %662 = vst.msk [vmem:[%s661] sm:$0xf] %vm602, %v660
        %v664 = vunpack.c.l.b16 %v660
        %v665 = vpack.c.b16 %v664, %v664
        %666 = vrot.lane.b32.xlu0 %v665, 96
        %v667 = vpop.permute.xlu0 %666
        %s669 = scalar_lea.vmem [#allocation4], 16
        %670 = vst.msk [vmem:[%s669] sm:$0xf] %vm602, %v667
        %671 = vrot.lane.b32.xlu0 %v665, 64
        %v672 = vpop.permute.xlu0 %671
        %s674 = scalar_lea.vmem [#allocation5], 16
        %675 = vst.msk [vmem:[%s674] sm:$0xf] %vm602, %v672
        %676 = vrot.lane.b32.xlu0 %v665, 120
        %v677 = vpop.permute.xlu0 %676
        %s679 = scalar_lea.vmem [#allocation3], 20
        %680 = vst.msk [vmem:[%s679] sm:$0xf] %vm602, %v677
        %681 = vrot.lane.b32.xlu0 %v665, 88
        %v682 = vpop.permute.xlu0 %681
        %s684 = scalar_lea.vmem [#allocation4], 20
        %685 = vst.msk [vmem:[%s684] sm:$0xf] %vm602, %v682
        %686 = vrot.lane.b32.xlu0 %v665, 56
        %v687 = vpop.permute.xlu0 %686
        %s689 = scalar_lea.vmem [#allocation5], 20
        %690 = vst.msk [vmem:[%s689] sm:$0xf] %vm602, %v687
        %691 = vrot.lane.b32.xlu0 %v665, 112
        %v692 = vpop.permute.xlu0 %691
        %s694 = scalar_lea.vmem [#allocation3], 24
        %695 = vst.msk [vmem:[%s694] sm:$0xf] %vm602, %v692
        %696 = vrot.lane.b32.xlu0 %v665, 80
        %v697 = vpop.permute.xlu0 %696
        %s699 = scalar_lea.vmem [#allocation4], 24
        %700 = vst.msk [vmem:[%s699] sm:$0xf] %vm602, %v697
        %701 = vrot.lane.b32.xlu0 %v665, 48
        %v702 = vpop.permute.xlu0 %701
        %s704 = scalar_lea.vmem [#allocation5], 24
        %705 = vst.msk [vmem:[%s704] sm:$0xf] %vm602, %v702
        %706 = vrot.lane.b32.xlu0 %v665, 104
        %v707 = vpop.permute.xlu0 %706
        %s709 = scalar_lea.vmem [#allocation3], 28
        %710 = vst.msk [vmem:[%s709] sm:$0xf] %vm602, %v707
        %711 = vrot.lane.b32.xlu0 %v665, 72
        %v712 = vpop.permute.xlu0 %711
        %s714 = scalar_lea.vmem [#allocation4], 28
        %715 = vst.msk [vmem:[%s714] sm:$0xf] %vm602, %v712
        %716 = vrot.lane.b32.xlu0 %v665, 40
        %v717 = vpop.permute.xlu0 %716
        %s719 = scalar_lea.vmem [#allocation5], 28
        %720 = vst.msk [vmem:[%s719] sm:$0xf] %vm602, %v717
        %v721 = vld [vmem:[#allocation3] sm:$0xf]
        %v722 = vld [vmem:[#allocation3 + $0x4] sm:$0xf]
        %v723 = vld [vmem:[#allocation3 + $0x8] sm:$0xf]
        %v724 = vld [vmem:[#allocation3 + $0xc] sm:$0xf]
        %v725 = vld [vmem:[#allocation3 + $0x10] sm:$0xf]
        %v726 = vld [vmem:[#allocation3 + $0x14] sm:$0xf]
        %v727 = vld [vmem:[#allocation3 + $0x18] sm:$0xf]
        %v728 = vld [vmem:[#allocation3 + $0x1c] sm:$0xf]
        %v729 = vld [vmem:[#allocation4] sm:$0xf]
        %v730 = vld [vmem:[#allocation4 + $0x4] sm:$0xf]
        %v731 = vld [vmem:[#allocation4 + $0x8] sm:$0xf]
        %v732 = vld [vmem:[#allocation4 + $0xc] sm:$0xf]
        %v733 = vld [vmem:[#allocation4 + $0x10] sm:$0xf]
        %v734 = vld [vmem:[#allocation4 + $0x14] sm:$0xf]
        %v735 = vld [vmem:[#allocation4 + $0x18] sm:$0xf]
        %v736 = vld [vmem:[#allocation4 + $0x1c] sm:$0xf]
        %v737 = vld [vmem:[#allocation5] sm:$0xf]
        %v738 = vld [vmem:[#allocation5 + $0x4] sm:$0xf]
        %v739 = vld [vmem:[#allocation5 + $0x8] sm:$0xf]
        %v740 = vld [vmem:[#allocation5 + $0xc] sm:$0xf]
        %v741 = vld [vmem:[#allocation5 + $0x10] sm:$0xf]
        %v742 = vld [vmem:[#allocation5 + $0x14] sm:$0xf]
        %v743 = vld [vmem:[#allocation5 + $0x18] sm:$0xf]
        %v744 = vld [vmem:[#allocation5 + $0x1c] sm:$0xf]
        %vm745 = vcmask 64512
        %v747 = vsel %vm745, %v721, 0
        %v750 = vsel %vm745, %v729, 0
        %752 = vmatprep.subr.bf16.mxu0 0
        %753 = vmatpush1.bf16.xpose.msra.mxu0 0
        %754 = vmatprep.subr.bf16.mxu0 0
        %755 = vmatpush1.bf16.xpose.msra.mxu0 0
        %756 = vmatprep.subr.bf16.mxu0 0
        %757 = vmatpush1.bf16.xpose.msra.mxu0 0
        %758 = vmatprep.subr.bf16.mxu0 0
        %759 = vmatpush1.bf16.xpose.msra.mxu0 0
        %760 = vmatprep.subr.bf16.mxu0 0
        %761 = vmatpush1.bf16.xpose.msra.mxu0 0
        %762 = vmatprep.subr.bf16.mxu0 0
        %763 = vmatpush1.bf16.xpose.msra.mxu0 0
        %764 = vmatprep.subr.bf16.mxu0 0
        %765 = vmatpush1.bf16.xpose.msra.mxu0 0
        %766 = vmatprep.subr.bf16.mxu0 0
        %767 = vmatpush1.bf16.xpose.msra.mxu0 %v750
        %768 = vmatprep.subr.bf16.mxu0 0
        %769 = vmatpush2.bf16.xpose.msra.mxu0 0
        %770 = vmatprep.subr.bf16.mxu0 0
        %771 = vmatpush2.bf16.xpose.msra.mxu0 0
        %772 = vmatprep.subr.bf16.mxu0 0
        %773 = vmatpush2.bf16.xpose.msra.mxu0 0
        %774 = vmatprep.subr.bf16.mxu0 0
        %775 = vmatpush2.bf16.xpose.msra.mxu0 0
        %776 = vmatprep.subr.bf16.mxu0 0
        %777 = vmatpush2.bf16.xpose.msra.mxu0 0
        %778 = vmatprep.subr.bf16.mxu0 0
        %779 = vmatpush2.bf16.xpose.msra.mxu0 0
        %780 = vmatprep.subr.bf16.mxu0 0
        %781 = vmatpush2.bf16.xpose.msra.mxu0 0
        %782 = vmatprep.subr.bf16.mxu0 0
        %783 = vmatpush2.bf16.xpose.msra.mxu0 0
        %784 = vmatprep.mubr.bf16.mxu0 0
        %785 = vmatmul.mubr.bf16.gmra.mxu0 %v747
        %v786 = vpop.f32.mrf.mxu0
        %v787 = vadd.f32 0.0, %v786
        %v788 = vpop.f32.mrf.mxu0
        %v789 = vpop.f32.mrf.mxu0
        %v790 = vpop.f32.mrf.mxu0
        %791 = vdwg.mxu0
        %v793 = vsel %vm745, %v722, 0
        %v796 = vsel %vm745, %v730, 0
        %798 = vmatprep.subr.bf16.mxu0 0
        %799 = vmatpush1.bf16.xpose.msra.mxu0 0
        %800 = vmatprep.subr.bf16.mxu0 0
        %801 = vmatpush1.bf16.xpose.msra.mxu0 0
        %802 = vmatprep.subr.bf16.mxu0 0
        %803 = vmatpush1.bf16.xpose.msra.mxu0 0
        %804 = vmatprep.subr.bf16.mxu0 0
        %805 = vmatpush1.bf16.xpose.msra.mxu0 0
        %806 = vmatprep.subr.bf16.mxu0 0
        %807 = vmatpush1.bf16.xpose.msra.mxu0 0
        %808 = vmatprep.subr.bf16.mxu0 0
        %809 = vmatpush1.bf16.xpose.msra.mxu0 0
        %810 = vmatprep.subr.bf16.mxu0 0
        %811 = vmatpush1.bf16.xpose.msra.mxu0 0
        %812 = vmatprep.subr.bf16.mxu0 0
        %813 = vmatpush1.bf16.xpose.msra.mxu0 %v796
        %814 = vmatprep.subr.bf16.mxu0 0
        %815 = vmatpush2.bf16.xpose.msra.mxu0 0
        %816 = vmatprep.subr.bf16.mxu0 0
        %817 = vmatpush2.bf16.xpose.msra.mxu0 0
        %818 = vmatprep.subr.bf16.mxu0 0
        %819 = vmatpush2.bf16.xpose.msra.mxu0 0
        %820 = vmatprep.subr.bf16.mxu0 0
        %821 = vmatpush2.bf16.xpose.msra.mxu0 0
        %822 = vmatprep.subr.bf16.mxu0 0
        %823 = vmatpush2.bf16.xpose.msra.mxu0 0
        %824 = vmatprep.subr.bf16.mxu0 0
        %825 = vmatpush2.bf16.xpose.msra.mxu0 0
        %826 = vmatprep.subr.bf16.mxu0 0
        %827 = vmatpush2.bf16.xpose.msra.mxu0 0
        %828 = vmatprep.subr.bf16.mxu0 0
        %829 = vmatpush2.bf16.xpose.msra.mxu0 0
        %830 = vmatprep.mubr.bf16.mxu0 0
        %831 = vmatmul.mubr.bf16.gmra.mxu0 %v793
        %v832 = vpop.f32.mrf.mxu0
        %v833 = vadd.f32 0.0, %v832
        %v834 = vpop.f32.mrf.mxu0
        %v835 = vpop.f32.mrf.mxu0
        %v836 = vpop.f32.mrf.mxu0
        %837 = vdwg.mxu0
        %v839 = vsel %vm745, %v723, 0
        %v842 = vsel %vm745, %v731, 0
        %844 = vmatprep.subr.bf16.mxu0 0
        %845 = vmatpush1.bf16.xpose.msra.mxu0 0
        %846 = vmatprep.subr.bf16.mxu0 0
        %847 = vmatpush1.bf16.xpose.msra.mxu0 0
        %848 = vmatprep.subr.bf16.mxu0 0
        %849 = vmatpush1.bf16.xpose.msra.mxu0 0
        %850 = vmatprep.subr.bf16.mxu0 0
        %851 = vmatpush1.bf16.xpose.msra.mxu0 0
        %852 = vmatprep.subr.bf16.mxu0 0
        %853 = vmatpush1.bf16.xpose.msra.mxu0 0
        %854 = vmatprep.subr.bf16.mxu0 0
        %855 = vmatpush1.bf16.xpose.msra.mxu0 0
        %856 = vmatprep.subr.bf16.mxu0 0
        %857 = vmatpush1.bf16.xpose.msra.mxu0 0
        %858 = vmatprep.subr.bf16.mxu0 0
        %859 = vmatpush1.bf16.xpose.msra.mxu0 %v842
        %860 = vmatprep.subr.bf16.mxu0 0
        %861 = vmatpush2.bf16.xpose.msra.mxu0 0
        %862 = vmatprep.subr.bf16.mxu0 0
        %863 = vmatpush2.bf16.xpose.msra.mxu0 0
        %864 = vmatprep.subr.bf16.mxu0 0
        %865 = vmatpush2.bf16.xpose.msra.mxu0 0
        %866 = vmatprep.subr.bf16.mxu0 0
        %867 = vmatpush2.bf16.xpose.msra.mxu0 0
        %868 = vmatprep.subr.bf16.mxu0 0
        %869 = vmatpush2.bf16.xpose.msra.mxu0 0
        %870 = vmatprep.subr.bf16.mxu0 0
        %871 = vmatpush2.bf16.xpose.msra.mxu0 0
        %872 = vmatprep.subr.bf16.mxu0 0
        %873 = vmatpush2.bf16.xpose.msra.mxu0 0
        %874 = vmatprep.subr.bf16.mxu0 0
        %875 = vmatpush2.bf16.xpose.msra.mxu0 0
        %876 = vmatprep.mubr.bf16.mxu0 0
        %877 = vmatmul.mubr.bf16.gmra.mxu0 %v839
        %v878 = vpop.f32.mrf.mxu0
        %v879 = vadd.f32 0.0, %v878
        %v880 = vpop.f32.mrf.mxu0
        %v881 = vpop.f32.mrf.mxu0
        %v882 = vpop.f32.mrf.mxu0
        %883 = vdwg.mxu0
        %v885 = vsel %vm745, %v724, 0
        %v888 = vsel %vm745, %v732, 0
        %890 = vmatprep.subr.bf16.mxu0 0
        %891 = vmatpush1.bf16.xpose.msra.mxu0 0
        %892 = vmatprep.subr.bf16.mxu0 0
        %893 = vmatpush1.bf16.xpose.msra.mxu0 0
        %894 = vmatprep.subr.bf16.mxu0 0
        %895 = vmatpush1.bf16.xpose.msra.mxu0 0
        %896 = vmatprep.subr.bf16.mxu0 0
        %897 = vmatpush1.bf16.xpose.msra.mxu0 0
        %898 = vmatprep.subr.bf16.mxu0 0
        %899 = vmatpush1.bf16.xpose.msra.mxu0 0
        %900 = vmatprep.subr.bf16.mxu0 0
        %901 = vmatpush1.bf16.xpose.msra.mxu0 0
        %902 = vmatprep.subr.bf16.mxu0 0
        %903 = vmatpush1.bf16.xpose.msra.mxu0 0
        %904 = vmatprep.subr.bf16.mxu0 0
        %905 = vmatpush1.bf16.xpose.msra.mxu0 %v888
        %906 = vmatprep.subr.bf16.mxu0 0
        %907 = vmatpush2.bf16.xpose.msra.mxu0 0
        %908 = vmatprep.subr.bf16.mxu0 0
        %909 = vmatpush2.bf16.xpose.msra.mxu0 0
        %910 = vmatprep.subr.bf16.mxu0 0
        %911 = vmatpush2.bf16.xpose.msra.mxu0 0
        %912 = vmatprep.subr.bf16.mxu0 0
        %913 = vmatpush2.bf16.xpose.msra.mxu0 0
        %914 = vmatprep.subr.bf16.mxu0 0
        %915 = vmatpush2.bf16.xpose.msra.mxu0 0
        %916 = vmatprep.subr.bf16.mxu0 0
        %917 = vmatpush2.bf16.xpose.msra.mxu0 0
        %918 = vmatprep.subr.bf16.mxu0 0
        %919 = vmatpush2.bf16.xpose.msra.mxu0 0
        %920 = vmatprep.subr.bf16.mxu0 0
        %921 = vmatpush2.bf16.xpose.msra.mxu0 0
        %922 = vmatprep.mubr.bf16.mxu0 0
        %923 = vmatmul.mubr.bf16.gmra.mxu0 %v885
        %v924 = vpop.f32.mrf.mxu0
        %v925 = vadd.f32 0.0, %v924
        %v926 = vpop.f32.mrf.mxu0
        %v927 = vpop.f32.mrf.mxu0
        %v928 = vpop.f32.mrf.mxu0
        %929 = vdwg.mxu0
        %v931 = vsel %vm745, %v725, 0
        %v934 = vsel %vm745, %v733, 0
        %936 = vmatprep.subr.bf16.mxu0 0
        %937 = vmatpush1.bf16.xpose.msra.mxu0 0
        %938 = vmatprep.subr.bf16.mxu0 0
        %939 = vmatpush1.bf16.xpose.msra.mxu0 0
        %940 = vmatprep.subr.bf16.mxu0 0
        %941 = vmatpush1.bf16.xpose.msra.mxu0 0
        %942 = vmatprep.subr.bf16.mxu0 0
        %943 = vmatpush1.bf16.xpose.msra.mxu0 0
        %944 = vmatprep.subr.bf16.mxu0 0
        %945 = vmatpush1.bf16.xpose.msra.mxu0 0
        %946 = vmatprep.subr.bf16.mxu0 0
        %947 = vmatpush1.bf16.xpose.msra.mxu0 0
        %948 = vmatprep.subr.bf16.mxu0 0
        %949 = vmatpush1.bf16.xpose.msra.mxu0 0
        %950 = vmatprep.subr.bf16.mxu0 0
        %951 = vmatpush1.bf16.xpose.msra.mxu0 %v934
        %952 = vmatprep.subr.bf16.mxu0 0
        %953 = vmatpush2.bf16.xpose.msra.mxu0 0
        %954 = vmatprep.subr.bf16.mxu0 0
        %955 = vmatpush2.bf16.xpose.msra.mxu0 0
        %956 = vmatprep.subr.bf16.mxu0 0
        %957 = vmatpush2.bf16.xpose.msra.mxu0 0
        %958 = vmatprep.subr.bf16.mxu0 0
        %959 = vmatpush2.bf16.xpose.msra.mxu0 0
        %960 = vmatprep.subr.bf16.mxu0 0
        %961 = vmatpush2.bf16.xpose.msra.mxu0 0
        %962 = vmatprep.subr.bf16.mxu0 0
        %963 = vmatpush2.bf16.xpose.msra.mxu0 0
        %964 = vmatprep.subr.bf16.mxu0 0
        %965 = vmatpush2.bf16.xpose.msra.mxu0 0
        %966 = vmatprep.subr.bf16.mxu0 0
        %967 = vmatpush2.bf16.xpose.msra.mxu0 0
        %968 = vmatprep.mubr.bf16.mxu0 0
        %969 = vmatmul.mubr.bf16.gmra.mxu0 %v931
        %v970 = vpop.f32.mrf.mxu0
        %v971 = vadd.f32 0.0, %v970
        %v972 = vpop.f32.mrf.mxu0
        %v973 = vpop.f32.mrf.mxu0
        %v974 = vpop.f32.mrf.mxu0
        %975 = vdwg.mxu0
        %v977 = vsel %vm745, %v726, 0
        %v980 = vsel %vm745, %v734, 0
        %982 = vmatprep.subr.bf16.mxu0 0
        %983 = vmatpush1.bf16.xpose.msra.mxu0 0
        %984 = vmatprep.subr.bf16.mxu0 0
        %985 = vmatpush1.bf16.xpose.msra.mxu0 0
        %986 = vmatprep.subr.bf16.mxu0 0
        %987 = vmatpush1.bf16.xpose.msra.mxu0 0
        %988 = vmatprep.subr.bf16.mxu0 0
        %989 = vmatpush1.bf16.xpose.msra.mxu0 0
        %990 = vmatprep.subr.bf16.mxu0 0
        %991 = vmatpush1.bf16.xpose.msra.mxu0 0
        %992 = vmatprep.subr.bf16.mxu0 0
        %993 = vmatpush1.bf16.xpose.msra.mxu0 0
        %994 = vmatprep.subr.bf16.mxu0 0
        %995 = vmatpush1.bf16.xpose.msra.mxu0 0
        %996 = vmatprep.subr.bf16.mxu0 0
        %997 = vmatpush1.bf16.xpose.msra.mxu0 %v980
        %998 = vmatprep.subr.bf16.mxu0 0
        %999 = vmatpush2.bf16.xpose.msra.mxu0 0
        %1000 = vmatprep.subr.bf16.mxu0 0
        %1001 = vmatpush2.bf16.xpose.msra.mxu0 0
        %1002 = vmatprep.subr.bf16.mxu0 0
        %1003 = vmatpush2.bf16.xpose.msra.mxu0 0
        %1004 = vmatprep.subr.bf16.mxu0 0
        %1005 = vmatpush2.bf16.xpose.msra.mxu0 0
        %1006 = vmatprep.subr.bf16.mxu0 0
        %1007 = vmatpush2.bf16.xpose.msra.mxu0 0
        %1008 = vmatprep.subr.bf16.mxu0 0
        %1009 = vmatpush2.bf16.xpose.msra.mxu0 0
        %1010 = vmatprep.subr.bf16.mxu0 0
        %1011 = vmatpush2.bf16.xpose.msra.mxu0 0
        %1012 = vmatprep.subr.bf16.mxu0 0
        %1013 = vmatpush2.bf16.xpose.msra.mxu0 0
        %1014 = vmatprep.mubr.bf16.mxu0 0
        %1015 = vmatmul.mubr.bf16.gmra.mxu0 %v977
        %v1016 = vpop.f32.mrf.mxu0
        %v1017 = vadd.f32 0.0, %v1016
        %v1018 = vpop.f32.mrf.mxu0
        %v1019 = vpop.f32.mrf.mxu0
        %v1020 = vpop.f32.mrf.mxu0
        %1021 = vdwg.mxu0
        %v1023 = vsel %vm745, %v727, 0
        %v1026 = vsel %vm745, %v735, 0
        %1028 = vmatprep.subr.bf16.mxu0 0
        %1029 = vmatpush1.bf16.xpose.msra.mxu0 0
        %1030 = vmatprep.subr.bf16.mxu0 0
        %1031 = vmatpush1.bf16.xpose.msra.mxu0 0
        %1032 = vmatprep.subr.bf16.mxu0 0
        %1033 = vmatpush1.bf16.xpose.msra.mxu0 0
        %1034 = vmatprep.subr.bf16.mxu0 0
        %1035 = vmatpush1.bf16.xpose.msra.mxu0 0
        %1036 = vmatprep.subr.bf16.mxu0 0
        %1037 = vmatpush1.bf16.xpose.msra.mxu0 0
        %1038 = vmatprep.subr.bf16.mxu0 0
        %1039 = vmatpush1.bf16.xpose.msra.mxu0 0
        %1040 = vmatprep.subr.bf16.mxu0 0
        %1041 = vmatpush1.bf16.xpose.msra.mxu0 0
        %1042 = vmatprep.subr.bf16.mxu0 0
        %1043 = vmatpush1.bf16.xpose.msra.mxu0 %v1026
        %1044 = vmatprep.subr.bf16.mxu0 0
        %1045 = vmatpush2.bf16.xpose.msra.mxu0 0
        %1046 = vmatprep.subr.bf16.mxu0 0
        %1047 = vmatpush2.bf16.xpose.msra.mxu0 0
        %1048 = vmatprep.subr.bf16.mxu0 0
        %1049 = vmatpush2.bf16.xpose.msra.mxu0 0
        %1050 = vmatprep.subr.bf16.mxu0 0
        %1051 = vmatpush2.bf16.xpose.msra.mxu0 0
        %1052 = vmatprep.subr.bf16.mxu0 0
        %1053 = vmatpush2.bf16.xpose.msra.mxu0 0
        %1054 = vmatprep.subr.bf16.mxu0 0
        %1055 = vmatpush2.bf16.xpose.msra.mxu0 0
        %1056 = vmatprep.subr.bf16.mxu0 0
        %1057 = vmatpush2.bf16.xpose.msra.mxu0 0
        %1058 = vmatprep.subr.bf16.mxu0 0
        %1059 = vmatpush2.bf16.xpose.msra.mxu0 0
        %1060 = vmatprep.mubr.bf16.mxu0 0
        %1061 = vmatmul.mubr.bf16.gmra.mxu0 %v1023
        %v1062 = vpop.f32.mrf.mxu0
        %v1063 = vadd.f32 0.0, %v1062
        %v1064 = vpop.f32.mrf.mxu0
        %v1065 = vpop.f32.mrf.mxu0
        %v1066 = vpop.f32.mrf.mxu0
        %1067 = vdwg.mxu0
        %v1069 = vsel %vm745, %v728, 0
        %v1072 = vsel %vm745, %v736, 0
        %1074 = vmatprep.subr.bf16.mxu0 0
        %1075 = vmatpush1.bf16.xpose.msra.mxu0 0
        %1076 = vmatprep.subr.bf16.mxu0 0
        %1077 = vmatpush1.bf16.xpose.msra.mxu0 0
        %1078 = vmatprep.subr.bf16.mxu0 0
        %1079 = vmatpush1.bf16.xpose.msra.mxu0 0
        %1080 = vmatprep.subr.bf16.mxu0 0
        %1081 = vmatpush1.bf16.xpose.msra.mxu0 0
        %1082 = vmatprep.subr.bf16.mxu0 0
        %1083 = vmatpush1.bf16.xpose.msra.mxu0 0
        %1084 = vmatprep.subr.bf16.mxu0 0
        %1085 = vmatpush1.bf16.xpose.msra.mxu0 0
        %1086 = vmatprep.subr.bf16.mxu0 0
        %1087 = vmatpush1.bf16.xpose.msra.mxu0 0
        %1088 = vmatprep.subr.bf16.mxu0 0
        %1089 = vmatpush1.bf16.xpose.msra.mxu0 %v1072
        %1090 = vmatprep.subr.bf16.mxu0 0
        %1091 = vmatpush2.bf16.xpose.msra.mxu0 0
        %1092 = vmatprep.subr.bf16.mxu0 0
        %1093 = vmatpush2.bf16.xpose.msra.mxu0 0
        %1094 = vmatprep.subr.bf16.mxu0 0
        %1095 = vmatpush2.bf16.xpose.msra.mxu0 0
        %1096 = vmatprep.subr.bf16.mxu0 0
        %1097 = vmatpush2.bf16.xpose.msra.mxu0 0
        %1098 = vmatprep.subr.bf16.mxu0 0
        %1099 = vmatpush2.bf16.xpose.msra.mxu0 0
        %1100 = vmatprep.subr.bf16.mxu0 0
        %1101 = vmatpush2.bf16.xpose.msra.mxu0 0
        %1102 = vmatprep.subr.bf16.mxu0 0
        %1103 = vmatpush2.bf16.xpose.msra.mxu0 0
        %1104 = vmatprep.subr.bf16.mxu0 0
        %1105 = vmatpush2.bf16.xpose.msra.mxu0 0
        %1106 = vmatprep.mubr.bf16.mxu0 0
        %1107 = vmatmul.mubr.bf16.gmra.mxu0 %v1069
        %v1108 = vpop.f32.mrf.mxu0
        %v1109 = vadd.f32 0.0, %v1108
        %v1110 = vpop.f32.mrf.mxu0
        %v1111 = vpop.f32.mrf.mxu0
        %v1112 = vpop.f32.mrf.mxu0
        %1113 = vdwg.mxu0
        %v1114 = vmul.f32 %v787, 0.35355338
        %v1115 = vmul.f32 %v833, 0.35355338
        %v1116 = vmul.f32 %v879, 0.35355338
        %v1117 = vmul.f32 %v925, 0.35355338
        %v1118 = vmul.f32 %v971, 0.35355338
        %v1119 = vmul.f32 %v1017, 0.35355338
        %v1120 = vmul.f32 %v1063, 0.35355338
        %v1121 = vmul.f32 %v1109, 0.35355338
        %v1122 = vld [vmem:[%s455] sm:$0x1]
        %v1123 = vld [vmem:[%s455 + $0x1] sm:$0x1]
        %v1126 = vlaneseq
        %v1127 = vshrl.u32 %v1126, 7
        %v1128 = vsub.s32 0, %v1127
        %v1129 = vrot.slane %v1122, %v1128
        %v1130 = vlaneseq
        %v1131 = vshrl.u32 %v1130, 7
        %v1132 = vsub.s32 0, %v1131
        %v1133 = vrot.slane %v1123, %v1132
        %v1136 = vadd.f32 %v1114, %v1129
        %v1137 = vadd.f32 %v1115, %v1129
        %v1138 = vadd.f32 %v1116, %v1129
        %v1139 = vadd.f32 %v1117, %v1129
        %v1140 = vadd.f32 %v1118, %v1133
        %v1141 = vadd.f32 %v1119, %v1133
        %v1142 = vadd.f32 %v1120, %v1133
        %v1143 = vadd.f32 %v1121, %v1133
        %v1144 = vsel %vm745, %v1136, -inf
        %1145 = vmax.xlane.f32.xlu0 %v1144
        %v1146 = vpop.xlane.xlu0 %1145
        %v1147 = vsel %vm745, %v1137, -inf
        %1148 = vmax.xlane.f32.xlu0 %v1147
        %v1149 = vpop.xlane.xlu0 %1148
        %v1150 = vsel %vm745, %v1138, -inf
        %1151 = vmax.xlane.f32.xlu0 %v1150
        %v1152 = vpop.xlane.xlu0 %1151
        %v1153 = vsel %vm745, %v1139, -inf
        %1154 = vmax.xlane.f32.xlu0 %v1153
        %v1155 = vpop.xlane.xlu0 %1154
        %v1156 = vsel %vm745, %v1140, -inf
        %1157 = vmax.xlane.f32.xlu0 %v1156
        %v1158 = vpop.xlane.xlu0 %1157
        %v1159 = vsel %vm745, %v1141, -inf
        %1160 = vmax.xlane.f32.xlu0 %v1159
        %v1161 = vpop.xlane.xlu0 %1160
        %v1162 = vsel %vm745, %v1142, -inf
        %1163 = vmax.xlane.f32.xlu0 %v1162
        %v1164 = vpop.xlane.xlu0 %1163
        %v1165 = vsel %vm745, %v1143, -inf
        %1166 = vmax.xlane.f32.xlu0 %v1165
        %v1167 = vpop.xlane.xlu0 %1166
        %v1168 = vsub.f32 %v1136, %v1146
        %v1169 = vsub.f32 %v1137, %v1149
        %v1170 = vsub.f32 %v1138, %v1152
        %v1171 = vsub.f32 %v1139, %v1155
        %v1172 = vsub.f32 %v1140, %v1158
        %v1173 = vsub.f32 %v1141, %v1161
        %v1174 = vsub.f32 %v1142, %v1164
        %v1175 = vsub.f32 %v1143, %v1167
        %v1176 = vmul.f32 %v1168, 1.442695
        %v1177 = vpow.pop %v1176
        %v1178 = vmul.f32 %v1169, 1.442695
        %v1179 = vpow.pop %v1178
        %v1180 = vmul.f32 %v1170, 1.442695
        %v1181 = vpow.pop %v1180
        %v1182 = vmul.f32 %v1171, 1.442695
        %v1183 = vpow.pop %v1182
        %v1184 = vmul.f32 %v1172, 1.442695
        %v1185 = vpow.pop %v1184
        %v1186 = vmul.f32 %v1173, 1.442695
        %v1187 = vpow.pop %v1186
        %v1188 = vmul.f32 %v1174, 1.442695
        %v1189 = vpow.pop %v1188
        %v1190 = vmul.f32 %v1175, 1.442695
        %v1191 = vpow.pop %v1190
        %v1192 = vsel %vm745, %v1177, 0.0
        %1193 = vadd.xlane.f32.xlu0 %v1192
        %v1194 = vpop.xlane.xlu0 %1193
        %v1195 = vsel %vm745, %v1179, 0.0
        %1196 = vadd.xlane.f32.xlu0 %v1195
        %v1197 = vpop.xlane.xlu0 %1196
        %v1198 = vsel %vm745, %v1181, 0.0
        %1199 = vadd.xlane.f32.xlu0 %v1198
        %v1200 = vpop.xlane.xlu0 %1199
        %v1201 = vsel %vm745, %v1183, 0.0
        %1202 = vadd.xlane.f32.xlu0 %v1201
        %v1203 = vpop.xlane.xlu0 %1202
        %v1204 = vsel %vm745, %v1185, 0.0
        %1205 = vadd.xlane.f32.xlu0 %v1204
        %v1206 = vpop.xlane.xlu0 %1205
        %v1207 = vsel %vm745, %v1187, 0.0
        %1208 = vadd.xlane.f32.xlu0 %v1207
        %v1209 = vpop.xlane.xlu0 %1208
        %v1210 = vsel %vm745, %v1189, 0.0
        %1211 = vadd.xlane.f32.xlu0 %v1210
        %v1212 = vpop.xlane.xlu0 %1211
        %v1213 = vsel %vm745, %v1191, 0.0
        %1214 = vadd.xlane.f32.xlu0 %v1213
        %v1215 = vpop.xlane.xlu0 %1214
        %v1216 = vrcp.pop %v1194
        %v1217 = vrcp.pop %v1197
        %v1218 = vrcp.pop %v1200
        %v1219 = vrcp.pop %v1203
        %v1220 = vrcp.pop %v1206
        %v1221 = vrcp.pop %v1209
        %v1222 = vrcp.pop %v1212
        %v1223 = vrcp.pop %v1215
        %v1224 = vmul.f32 %v1177, %v1216
        %v1225 = vmul.f32 %v1179, %v1217
        %v1226 = vmul.f32 %v1181, %v1218
        %v1227 = vmul.f32 %v1183, %v1219
        %v1228 = vmul.f32 %v1185, %v1220
        %v1229 = vmul.f32 %v1187, %v1221
        %v1230 = vmul.f32 %v1189, %v1222
        %v1231 = vmul.f32 %v1191, %v1223
        %v1232 = vpack.c.bf16 %v1224, %v1224
        %v1233 = vpack.c.bf16 %v1225, %v1225
        %v1234 = vpack.c.bf16 %v1226, %v1226
        %v1235 = vpack.c.bf16 %v1227, %v1227
        %v1236 = vpack.c.bf16 %v1228, %v1228
        %v1237 = vpack.c.bf16 %v1229, %v1229
        %v1238 = vpack.c.bf16 %v1230, %v1230
        %v1239 = vpack.c.bf16 %v1231, %v1231
        %v1241 = vsel %vm745, %v1232, 0
        %vm1243 = vcmask 1043456
        %v1245 = vsel %vm1243, %v737, 0
        %1247 = vmatprep.subr.bf16.mxu0 0
        %1248 = vmatpush1.bf16.msra.mxu0 0
        %1249 = vmatprep.subr.bf16.mxu0 0
        %1250 = vmatpush1.bf16.msra.mxu0 0
        %1251 = vmatprep.subr.bf16.mxu0 0
        %1252 = vmatpush1.bf16.msra.mxu0 0
        %1253 = vmatprep.subr.bf16.mxu0 0
        %1254 = vmatpush1.bf16.msra.mxu0 0
        %1255 = vmatprep.subr.bf16.mxu0 0
        %1256 = vmatpush1.bf16.msra.mxu0 0
        %1257 = vmatprep.subr.bf16.mxu0 0
        %1258 = vmatpush1.bf16.msra.mxu0 0
        %1259 = vmatprep.subr.bf16.mxu0 0
        %1260 = vmatpush1.bf16.msra.mxu0 0
        %1261 = vmatprep.subr.bf16.mxu0 0
        %1262 = vmatpush1.bf16.msra.mxu0 %v1245
        %1263 = vmatprep.subr.bf16.mxu0 0
        %1264 = vmatpush2.bf16.msra.mxu0 0
        %1265 = vmatprep.subr.bf16.mxu0 0
        %1266 = vmatpush2.bf16.msra.mxu0 0
        %1267 = vmatprep.subr.bf16.mxu0 0
        %1268 = vmatpush2.bf16.msra.mxu0 0
        %1269 = vmatprep.subr.bf16.mxu0 0
        %1270 = vmatpush2.bf16.msra.mxu0 0
        %1271 = vmatprep.subr.bf16.mxu0 0
        %1272 = vmatpush2.bf16.msra.mxu0 0
        %1273 = vmatprep.subr.bf16.mxu0 0
        %1274 = vmatpush2.bf16.msra.mxu0 0
        %1275 = vmatprep.subr.bf16.mxu0 0
        %1276 = vmatpush2.bf16.msra.mxu0 0
        %1277 = vmatprep.subr.bf16.mxu0 0
        %1278 = vmatpush2.bf16.msra.mxu0 0
        %1279 = vmatprep.mubr.bf16.mxu0 0
        %1280 = vmatmul.mubr.bf16.gmra.mxu0 %v1241
        %v1281 = vpop.f32.mrf.mxu0
        %v1282 = vadd.f32 0.0, %v1281
        %v1283 = vpop.f32.mrf.mxu0
        %v1284 = vpop.f32.mrf.mxu0
        %v1285 = vpop.f32.mrf.mxu0
        %1286 = vdwg.mxu0
        %v1288 = vsel %vm745, %v1233, 0
        %v1291 = vsel %vm1243, %v738, 0
        %1293 = vmatprep.subr.bf16.mxu0 0
        %1294 = vmatpush1.bf16.msra.mxu0 0
        %1295 = vmatprep.subr.bf16.mxu0 0
        %1296 = vmatpush1.bf16.msra.mxu0 0
        %1297 = vmatprep.subr.bf16.mxu0 0
        %1298 = vmatpush1.bf16.msra.mxu0 0
        %1299 = vmatprep.subr.bf16.mxu0 0
        %1300 = vmatpush1.bf16.msra.mxu0 0
        %1301 = vmatprep.subr.bf16.mxu0 0
        %1302 = vmatpush1.bf16.msra.mxu0 0
        %1303 = vmatprep.subr.bf16.mxu0 0
        %1304 = vmatpush1.bf16.msra.mxu0 0
        %1305 = vmatprep.subr.bf16.mxu0 0
        %1306 = vmatpush1.bf16.msra.mxu0 0
        %1307 = vmatprep.subr.bf16.mxu0 0
        %1308 = vmatpush1.bf16.msra.mxu0 %v1291
        %1309 = vmatprep.subr.bf16.mxu0 0
        %1310 = vmatpush2.bf16.msra.mxu0 0
        %1311 = vmatprep.subr.bf16.mxu0 0
        %1312 = vmatpush2.bf16.msra.mxu0 0
        %1313 = vmatprep.subr.bf16.mxu0 0
        %1314 = vmatpush2.bf16.msra.mxu0 0
        %1315 = vmatprep.subr.bf16.mxu0 0
        %1316 = vmatpush2.bf16.msra.mxu0 0
        %1317 = vmatprep.subr.bf16.mxu0 0
        %1318 = vmatpush2.bf16.msra.mxu0 0
        %1319 = vmatprep.subr.bf16.mxu0 0
        %1320 = vmatpush2.bf16.msra.mxu0 0
        %1321 = vmatprep.subr.bf16.mxu0 0
        %1322 = vmatpush2.bf16.msra.mxu0 0
        %1323 = vmatprep.subr.bf16.mxu0 0
        %1324 = vmatpush2.bf16.msra.mxu0 0
        %1325 = vmatprep.mubr.bf16.mxu0 0
        %1326 = vmatmul.mubr.bf16.gmra.mxu0 %v1288
        %v1327 = vpop.f32.mrf.mxu0
        %v1328 = vadd.f32 0.0, %v1327
        %v1329 = vpop.f32.mrf.mxu0
        %v1330 = vpop.f32.mrf.mxu0
        %v1331 = vpop.f32.mrf.mxu0
        %1332 = vdwg.mxu0
        %v1334 = vsel %vm745, %v1234, 0
        %v1337 = vsel %vm1243, %v739, 0
        %1339 = vmatprep.subr.bf16.mxu0 0
        %1340 = vmatpush1.bf16.msra.mxu0 0
        %1341 = vmatprep.subr.bf16.mxu0 0
        %1342 = vmatpush1.bf16.msra.mxu0 0
        %1343 = vmatprep.subr.bf16.mxu0 0
        %1344 = vmatpush1.bf16.msra.mxu0 0
        %1345 = vmatprep.subr.bf16.mxu0 0
        %1346 = vmatpush1.bf16.msra.mxu0 0
        %1347 = vmatprep.subr.bf16.mxu0 0
        %1348 = vmatpush1.bf16.msra.mxu0 0
        %1349 = vmatprep.subr.bf16.mxu0 0
        %1350 = vmatpush1.bf16.msra.mxu0 0
        %1351 = vmatprep.subr.bf16.mxu0 0
        %1352 = vmatpush1.bf16.msra.mxu0 0
        %1353 = vmatprep.subr.bf16.mxu0 0
        %1354 = vmatpush1.bf16.msra.mxu0 %v1337
        %1355 = vmatprep.subr.bf16.mxu0 0
        %1356 = vmatpush2.bf16.msra.mxu0 0
        %1357 = vmatprep.subr.bf16.mxu0 0
        %1358 = vmatpush2.bf16.msra.mxu0 0
        %1359 = vmatprep.subr.bf16.mxu0 0
        %1360 = vmatpush2.bf16.msra.mxu0 0
        %1361 = vmatprep.subr.bf16.mxu0 0
        %1362 = vmatpush2.bf16.msra.mxu0 0
        %1363 = vmatprep.subr.bf16.mxu0 0
        %1364 = vmatpush2.bf16.msra.mxu0 0
        %1365 = vmatprep.subr.bf16.mxu0 0
        %1366 = vmatpush2.bf16.msra.mxu0 0
        %1367 = vmatprep.subr.bf16.mxu0 0
        %1368 = vmatpush2.bf16.msra.mxu0 0
        %1369 = vmatprep.subr.bf16.mxu0 0
        %1370 = vmatpush2.bf16.msra.mxu0 0
        %1371 = vmatprep.mubr.bf16.mxu0 0
        %1372 = vmatmul.mubr.bf16.gmra.mxu0 %v1334
        %v1373 = vpop.f32.mrf.mxu0
        %v1374 = vadd.f32 0.0, %v1373
        %v1375 = vpop.f32.mrf.mxu0
        %v1376 = vpop.f32.mrf.mxu0
        %v1377 = vpop.f32.mrf.mxu0
        %1378 = vdwg.mxu0
        %v1380 = vsel %vm745, %v1235, 0
        %v1383 = vsel %vm1243, %v740, 0
        %1385 = vmatprep.subr.bf16.mxu0 0
        %1386 = vmatpush1.bf16.msra.mxu0 0
        %1387 = vmatprep.subr.bf16.mxu0 0
        %1388 = vmatpush1.bf16.msra.mxu0 0
        %1389 = vmatprep.subr.bf16.mxu0 0
        %1390 = vmatpush1.bf16.msra.mxu0 0
        %1391 = vmatprep.subr.bf16.mxu0 0
        %1392 = vmatpush1.bf16.msra.mxu0 0
        %1393 = vmatprep.subr.bf16.mxu0 0
        %1394 = vmatpush1.bf16.msra.mxu0 0
        %1395 = vmatprep.subr.bf16.mxu0 0
        %1396 = vmatpush1.bf16.msra.mxu0 0
        %1397 = vmatprep.subr.bf16.mxu0 0
        %1398 = vmatpush1.bf16.msra.mxu0 0
        %1399 = vmatprep.subr.bf16.mxu0 0
        %1400 = vmatpush1.bf16.msra.mxu0 %v1383
        %1401 = vmatprep.subr.bf16.mxu0 0
        %1402 = vmatpush2.bf16.msra.mxu0 0
        %1403 = vmatprep.subr.bf16.mxu0 0
        %1404 = vmatpush2.bf16.msra.mxu0 0
        %1405 = vmatprep.subr.bf16.mxu0 0
        %1406 = vmatpush2.bf16.msra.mxu0 0
        %1407 = vmatprep.subr.bf16.mxu0 0
        %1408 = vmatpush2.bf16.msra.mxu0 0
        %1409 = vmatprep.subr.bf16.mxu0 0
        %1410 = vmatpush2.bf16.msra.mxu0 0
        %1411 = vmatprep.subr.bf16.mxu0 0
        %1412 = vmatpush2.bf16.msra.mxu0 0
        %1413 = vmatprep.subr.bf16.mxu0 0
        %1414 = vmatpush2.bf16.msra.mxu0 0
        %1415 = vmatprep.subr.bf16.mxu0 0
        %1416 = vmatpush2.bf16.msra.mxu0 0
        %1417 = vmatprep.mubr.bf16.mxu0 0
        %1418 = vmatmul.mubr.bf16.gmra.mxu0 %v1380
        %v1419 = vpop.f32.mrf.mxu0
        %v1420 = vadd.f32 0.0, %v1419
        %v1421 = vpop.f32.mrf.mxu0
        %v1422 = vpop.f32.mrf.mxu0
        %v1423 = vpop.f32.mrf.mxu0
        %1424 = vdwg.mxu0
        %v1426 = vsel %vm745, %v1236, 0
        %v1429 = vsel %vm1243, %v741, 0
        %1431 = vmatprep.subr.bf16.mxu0 0
        %1432 = vmatpush1.bf16.msra.mxu0 0
        %1433 = vmatprep.subr.bf16.mxu0 0
        %1434 = vmatpush1.bf16.msra.mxu0 0
        %1435 = vmatprep.subr.bf16.mxu0 0
        %1436 = vmatpush1.bf16.msra.mxu0 0
        %1437 = vmatprep.subr.bf16.mxu0 0
        %1438 = vmatpush1.bf16.msra.mxu0 0
        %1439 = vmatprep.subr.bf16.mxu0 0
        %1440 = vmatpush1.bf16.msra.mxu0 0
        %1441 = vmatprep.subr.bf16.mxu0 0
        %1442 = vmatpush1.bf16.msra.mxu0 0
        %1443 = vmatprep.subr.bf16.mxu0 0
        %1444 = vmatpush1.bf16.msra.mxu0 0
        %1445 = vmatprep.subr.bf16.mxu0 0
        %1446 = vmatpush1.bf16.msra.mxu0 %v1429
        %1447 = vmatprep.subr.bf16.mxu0 0
        %1448 = vmatpush2.bf16.msra.mxu0 0
        %1449 = vmatprep.subr.bf16.mxu0 0
        %1450 = vmatpush2.bf16.msra.mxu0 0
        %1451 = vmatprep.subr.bf16.mxu0 0
        %1452 = vmatpush2.bf16.msra.mxu0 0
        %1453 = vmatprep.subr.bf16.mxu0 0
        %1454 = vmatpush2.bf16.msra.mxu0 0
        %1455 = vmatprep.subr.bf16.mxu0 0
        %1456 = vmatpush2.bf16.msra.mxu0 0
        %1457 = vmatprep.subr.bf16.mxu0 0
        %1458 = vmatpush2.bf16.msra.mxu0 0
        %1459 = vmatprep.subr.bf16.mxu0 0
        %1460 = vmatpush2.bf16.msra.mxu0 0
        %1461 = vmatprep.subr.bf16.mxu0 0
        %1462 = vmatpush2.bf16.msra.mxu0 0
        %1463 = vmatprep.mubr.bf16.mxu0 0
        %1464 = vmatmul.mubr.bf16.gmra.mxu0 %v1426
        %v1465 = vpop.f32.mrf.mxu0
        %v1466 = vadd.f32 0.0, %v1465
        %v1467 = vpop.f32.mrf.mxu0
        %v1468 = vpop.f32.mrf.mxu0
        %v1469 = vpop.f32.mrf.mxu0
        %1470 = vdwg.mxu0
        %v1472 = vsel %vm745, %v1237, 0
        %v1475 = vsel %vm1243, %v742, 0
        %1477 = vmatprep.subr.bf16.mxu0 0
        %1478 = vmatpush1.bf16.msra.mxu0 0
        %1479 = vmatprep.subr.bf16.mxu0 0
        %1480 = vmatpush1.bf16.msra.mxu0 0
        %1481 = vmatprep.subr.bf16.mxu0 0
        %1482 = vmatpush1.bf16.msra.mxu0 0
        %1483 = vmatprep.subr.bf16.mxu0 0
        %1484 = vmatpush1.bf16.msra.mxu0 0
        %1485 = vmatprep.subr.bf16.mxu0 0
        %1486 = vmatpush1.bf16.msra.mxu0 0
        %1487 = vmatprep.subr.bf16.mxu0 0
        %1488 = vmatpush1.bf16.msra.mxu0 0
        %1489 = vmatprep.subr.bf16.mxu0 0
        %1490 = vmatpush1.bf16.msra.mxu0 0
        %1491 = vmatprep.subr.bf16.mxu0 0
        %1492 = vmatpush1.bf16.msra.mxu0 %v1475
        %1493 = vmatprep.subr.bf16.mxu0 0
        %1494 = vmatpush2.bf16.msra.mxu0 0
        %1495 = vmatprep.subr.bf16.mxu0 0
        %1496 = vmatpush2.bf16.msra.mxu0 0
        %1497 = vmatprep.subr.bf16.mxu0 0
        %1498 = vmatpush2.bf16.msra.mxu0 0
        %1499 = vmatprep.subr.bf16.mxu0 0
        %1500 = vmatpush2.bf16.msra.mxu0 0
        %1501 = vmatprep.subr.bf16.mxu0 0
        %1502 = vmatpush2.bf16.msra.mxu0 0
        %1503 = vmatprep.subr.bf16.mxu0 0
        %1504 = vmatpush2.bf16.msra.mxu0 0
        %1505 = vmatprep.subr.bf16.mxu0 0
        %1506 = vmatpush2.bf16.msra.mxu0 0
        %1507 = vmatprep.subr.bf16.mxu0 0
        %1508 = vmatpush2.bf16.msra.mxu0 0
        %1509 = vmatprep.mubr.bf16.mxu0 0
        %1510 = vmatmul.mubr.bf16.gmra.mxu0 %v1472
        %v1511 = vpop.f32.mrf.mxu0
        %v1512 = vadd.f32 0.0, %v1511
        %v1513 = vpop.f32.mrf.mxu0
        %v1514 = vpop.f32.mrf.mxu0
        %v1515 = vpop.f32.mrf.mxu0
        %1516 = vdwg.mxu0
        %v1518 = vsel %vm745, %v1238, 0
        %v1521 = vsel %vm1243, %v743, 0
        %1523 = vmatprep.subr.bf16.mxu0 0
        %1524 = vmatpush1.bf16.msra.mxu0 0
        %1525 = vmatprep.subr.bf16.mxu0 0
        %1526 = vmatpush1.bf16.msra.mxu0 0
        %1527 = vmatprep.subr.bf16.mxu0 0
        %1528 = vmatpush1.bf16.msra.mxu0 0
        %1529 = vmatprep.subr.bf16.mxu0 0
        %1530 = vmatpush1.bf16.msra.mxu0 0
        %1531 = vmatprep.subr.bf16.mxu0 0
        %1532 = vmatpush1.bf16.msra.mxu0 0
        %1533 = vmatprep.subr.bf16.mxu0 0
        %1534 = vmatpush1.bf16.msra.mxu0 0
        %1535 = vmatprep.subr.bf16.mxu0 0
        %1536 = vmatpush1.bf16.msra.mxu0 0
        %1537 = vmatprep.subr.bf16.mxu0 0
        %1538 = vmatpush1.bf16.msra.mxu0 %v1521
        %1539 = vmatprep.subr.bf16.mxu0 0
        %1540 = vmatpush2.bf16.msra.mxu0 0
        %1541 = vmatprep.subr.bf16.mxu0 0
        %1542 = vmatpush2.bf16.msra.mxu0 0
        %1543 = vmatprep.subr.bf16.mxu0 0
        %1544 = vmatpush2.bf16.msra.mxu0 0
        %1545 = vmatprep.subr.bf16.mxu0 0
        %1546 = vmatpush2.bf16.msra.mxu0 0
        %1547 = vmatprep.subr.bf16.mxu0 0
        %1548 = vmatpush2.bf16.msra.mxu0 0
        %1549 = vmatprep.subr.bf16.mxu0 0
        %1550 = vmatpush2.bf16.msra.mxu0 0
        %1551 = vmatprep.subr.bf16.mxu0 0
        %1552 = vmatpush2.bf16.msra.mxu0 0
        %1553 = vmatprep.subr.bf16.mxu0 0
        %1554 = vmatpush2.bf16.msra.mxu0 0
        %1555 = vmatprep.mubr.bf16.mxu0 0
        %1556 = vmatmul.mubr.bf16.gmra.mxu0 %v1518
        %v1557 = vpop.f32.mrf.mxu0
        %v1558 = vadd.f32 0.0, %v1557
        %v1559 = vpop.f32.mrf.mxu0
        %v1560 = vpop.f32.mrf.mxu0
        %v1561 = vpop.f32.mrf.mxu0
        %1562 = vdwg.mxu0
        %v1564 = vsel %vm745, %v1239, 0
        %v1567 = vsel %vm1243, %v744, 0
        %1569 = vmatprep.subr.bf16.mxu0 0
        %1570 = vmatpush1.bf16.msra.mxu0 0
        %1571 = vmatprep.subr.bf16.mxu0 0
        %1572 = vmatpush1.bf16.msra.mxu0 0
        %1573 = vmatprep.subr.bf16.mxu0 0
        %1574 = vmatpush1.bf16.msra.mxu0 0
        %1575 = vmatprep.subr.bf16.mxu0 0
        %1576 = vmatpush1.bf16.msra.mxu0 0
        %1577 = vmatprep.subr.bf16.mxu0 0
        %1578 = vmatpush1.bf16.msra.mxu0 0
        %1579 = vmatprep.subr.bf16.mxu0 0
        %1580 = vmatpush1.bf16.msra.mxu0 0
        %1581 = vmatprep.subr.bf16.mxu0 0
        %1582 = vmatpush1.bf16.msra.mxu0 0
        %1583 = vmatprep.subr.bf16.mxu0 0
        %1584 = vmatpush1.bf16.msra.mxu0 %v1567
        %1585 = vmatprep.subr.bf16.mxu0 0
        %1586 = vmatpush2.bf16.msra.mxu0 0
        %1587 = vmatprep.subr.bf16.mxu0 0
        %1588 = vmatpush2.bf16.msra.mxu0 0
        %1589 = vmatprep.subr.bf16.mxu0 0
        %1590 = vmatpush2.bf16.msra.mxu0 0
        %1591 = vmatprep.subr.bf16.mxu0 0
        %1592 = vmatpush2.bf16.msra.mxu0 0
        %1593 = vmatprep.subr.bf16.mxu0 0
        %1594 = vmatpush2.bf16.msra.mxu0 0
        %1595 = vmatprep.subr.bf16.mxu0 0
        %1596 = vmatpush2.bf16.msra.mxu0 0
        %1597 = vmatprep.subr.bf16.mxu0 0
        %1598 = vmatpush2.bf16.msra.mxu0 0
        %1599 = vmatprep.subr.bf16.mxu0 0
        %1600 = vmatpush2.bf16.msra.mxu0 0
        %1601 = vmatprep.mubr.bf16.mxu0 0
        %1602 = vmatmul.mubr.bf16.gmra.mxu0 %v1564
        %v1603 = vpop.f32.mrf.mxu0
        %v1604 = vadd.f32 0.0, %v1603
        %v1605 = vpop.f32.mrf.mxu0
        %v1606 = vpop.f32.mrf.mxu0
        %v1607 = vpop.f32.mrf.mxu0
        %1608 = vdwg.mxu0
        %1609 = vst.msk [vmem:[#allocation6] sm:$0xff] %vm745, %v1282
        %1611 = vrot.lane.b32.xlu0 %v1328, 8
        %v1612 = vpop.permute.xlu0 %1611
        %vm1614 = vcmask 130112
        %1615 = vst.msk [vmem:[#allocation6] sm:$0xff] %vm1614, %v1612
        %1617 = vrot.lane.b32.xlu0 %v1374, 16
        %v1618 = vpop.permute.xlu0 %1617
        %vm1620 = vcmask 195712
        %1621 = vst.msk [vmem:[#allocation6] sm:$0xff] %vm1620, %v1618
        %1623 = vrot.lane.b32.xlu0 %v1420, 24
        %v1624 = vpop.permute.xlu0 %1623
        %vm1626 = vcmask 261312
        %1627 = vst.msk [vmem:[#allocation6] sm:$0xff] %vm1626, %v1624
        %1628 = vst.msk [vmem:[#allocation6 + $0x8] sm:$0xff] %vm745, %v1466
        %1630 = vrot.lane.b32.xlu0 %v1512, 8
        %v1631 = vpop.permute.xlu0 %1630
        %1633 = vst.msk [vmem:[#allocation6 + $0x8] sm:$0xff] %vm1614, %v1631
        %1635 = vrot.lane.b32.xlu0 %v1558, 16
        %v1636 = vpop.permute.xlu0 %1635
        %1638 = vst.msk [vmem:[#allocation6 + $0x8] sm:$0xff] %vm1620, %v1636
        %1640 = vrot.lane.b32.xlu0 %v1604, 24
        %v1641 = vpop.permute.xlu0 %1640
        %1643 = vst.msk [vmem:[#allocation6 + $0x8] sm:$0xff] %vm1626, %v1641
        %v1644 = vld [vmem:[#allocation6] sm:$0xff]
        %v1645 = vld [vmem:[#allocation6 + $0x8] sm:$0xff]
        %v1646 = vld [vmem:[%s466] sm:$0xf]
        %v1647 = vld [vmem:[%s466 + $0x4] sm:$0xf]
        %v1648 = vld [vmem:[%s466 + $0x8] sm:$0xf]
        %v1649 = vld [vmem:[%s466 + $0xc] sm:$0xf]
        %v1650 = vpack.c.bf16 %v1645, %v1644
        %v1651 = vlaneseq
        %v1652 = vshrl.u32 %v1651, 7
        %v1653 = vsub.s32 2, %v1652
        %v1654 = vrot.slane %v532, %v1653
        %v1659 = vunpack.c.l.b16 %v1646
        %v1660 = vunpack.c.l.b16 %v1647
        %v1661 = vunpack.c.l.b16 %v1648
        %v1662 = vunpack.c.l.b16 %v1649
        %v1663 = vpack.c.b16 %v1660, %v1659
        %v1664 = vpack.c.b16 %v1662, %v1661
        %v1668 = vsel %vm556, %v1650, 0
        %1670 = vmatprep.subr.bf16.mxu0 0
        %1671 = vmatpush1.bf16.msra.mxu0 0
        %1672 = vmatprep.subr.bf16.mxu0 0
        %1673 = vmatpush1.bf16.msra.mxu0 0
        %1674 = vmatprep.subr.bf16.mxu0 0
        %1675 = vmatpush1.bf16.msra.mxu0 0
        %1676 = vmatprep.subr.bf16.mxu0 0
        %1677 = vmatpush1.bf16.msra.mxu0 0
        %1678 = vmatprep.subr.bf16.mxu0 0
        %1679 = vmatpush1.bf16.msra.mxu0 0
        %1680 = vmatprep.subr.bf16.mxu0 0
        %1681 = vmatpush1.bf16.msra.mxu0 0
        %1682 = vmatprep.subr.bf16.mxu0 0
        %1683 = vmatpush1.bf16.msra.mxu0 %v1664
        %1684 = vmatprep.subr.bf16.mxu0 0
        %1685 = vmatpush1.bf16.msra.mxu0 %v1663
        %1686 = vmatprep.subr.bf16.mxu0 0
        %1687 = vmatpush2.bf16.msra.mxu0 0
        %1688 = vmatprep.subr.bf16.mxu0 0
        %1689 = vmatpush2.bf16.msra.mxu0 0
        %1690 = vmatprep.subr.bf16.mxu0 0
        %1691 = vmatpush2.bf16.msra.mxu0 0
        %1692 = vmatprep.subr.bf16.mxu0 0
        %1693 = vmatpush2.bf16.msra.mxu0 0
        %1694 = vmatprep.subr.bf16.mxu0 0
        %1695 = vmatpush2.bf16.msra.mxu0 0
        %1696 = vmatprep.subr.bf16.mxu0 0
        %1697 = vmatpush2.bf16.msra.mxu0 0
        %1698 = vmatprep.subr.bf16.mxu0 0
        %1699 = vmatpush2.bf16.msra.mxu0 0
        %1700 = vmatprep.subr.bf16.mxu0 0
        %1701 = vmatpush2.bf16.msra.mxu0 0
        %1702 = vmatprep.mubr.bf16.mxu0 0
        %1703 = vmatmul.mubr.bf16.gmra.mxu0 %v1668
        %v1704 = vpop.f32.mrf.mxu0
        %v1705 = vadd.f32 %v1654, %v1704
        %v1706 = vpop.f32.mrf.mxu0
        %v1707 = vpop.f32.mrf.mxu0
        %v1708 = vadd.f32 %v1654, %v1707
        %v1709 = vpop.f32.mrf.mxu0
        %1710 = vdwg.mxu0
        %v1711 = vadd.f32 %v1705, %v533
        %v1712 = vadd.f32 %v1708, %v534
        %v1713 = vsel %vm556, %v1711, 0.0
        %1714 = vadd.xlane.f32.xlu0 %v1713
        %v1715 = vpop.xlane.xlu0 %1714
        %v1716 = vsel %vm556, %v1712, 0.0
        %1717 = vadd.xlane.f32.xlu0 %v1716
        %v1718 = vpop.xlane.xlu0 %1717
        %v1719 = vrcp.pop 32.0
        %v1720 = vmul.f32 %v1715, %v1719
        %v1721 = vmul.f32 %v1718, %v1719
        %v1722 = vsub.f32 %v1711, %v1720
        %v1723 = vsub.f32 %v1712, %v1721
        %v1724 = vmul.f32 %v1722, %v1722
        %v1725 = vmul.f32 %v1723, %v1723
        %v1726 = vsel %vm556, %v1724, 0.0
        %1727 = vadd.xlane.f32.xlu0 %v1726
        %v1728 = vpop.xlane.xlu0 %1727
        %v1729 = vsel %vm556, %v1725, 0.0
        %1730 = vadd.xlane.f32.xlu0 %v1729
        %v1731 = vpop.xlane.xlu0 %1730
        %v1732 = vmul.f32 %v1728, %v1719
        %v1733 = vmul.f32 %v1731, %v1719
        %v1734 = vadd.f32 %v1732, 1e-12
        %v1735 = vadd.f32 %v1733, 1e-12
        %v1736 = vrsqrt.pop %v1734
        %v1737 = vrsqrt.pop %v1735
        %v1738 = vmul.f32 %v1722, %v1736
        %v1739 = vmul.f32 %v1723, %v1737
        %v1740 = vlaneseq
        %v1741 = vshrl.u32 %v1740, 7
        %v1742 = vsub.s32 4, %v1741
        %v1743 = vrot.slane %v532, %v1742
        %v1744 = vmul.f32 %v1738, %v1743
        %v1745 = vmul.f32 %v1739, %v1743
        %v1746 = vlaneseq
        %v1747 = vshrl.u32 %v1746, 7
        %v1748 = vsub.s32 5, %v1747
        %v1749 = vrot.slane %v532, %v1748
        %v1750 = vadd.f32 %v1744, %v1749
        %v1751 = vadd.f32 %v1745, %v1749
        %v1752 = vld [vmem:[%s471] sm:$0xf]
        %v1753 = vld [vmem:[%s471 + $0x4] sm:$0xf]
        %v1754 = vld [vmem:[%s471 + $0x8] sm:$0xf]
        %v1755 = vld [vmem:[%s471 + $0xc] sm:$0xf]
        %v1756 = vpack.c.bf16 %v1751, %v1750
        %v1757 = vlaneseq
        %v1758 = vshrl.u32 %v1757, 7
        %v1759 = vsub.s32 1, %v1758
        %v1760 = vrot.slane %v532, %v1759
        %v1765 = vunpack.c.l.b16 %v1752
        %v1766 = vunpack.c.l.b16 %v1753
        %v1767 = vunpack.c.l.b16 %v1754
        %v1768 = vunpack.c.l.b16 %v1755
        %v1769 = vpack.c.b16 %v1766, %v1765
        %v1770 = vpack.c.b16 %v1768, %v1767
        %v1774 = vsel %vm556, %v1756, 0
        %1776 = vmatprep.subr.bf16.mxu0 0
        %1777 = vmatpush1.bf16.msra.mxu0 0
        %1778 = vmatprep.subr.bf16.mxu0 0
        %1779 = vmatpush1.bf16.msra.mxu0 0
        %1780 = vmatprep.subr.bf16.mxu0 0
        %1781 = vmatpush1.bf16.msra.mxu0 0
        %1782 = vmatprep.subr.bf16.mxu0 0
        %1783 = vmatpush1.bf16.msra.mxu0 0
        %1784 = vmatprep.subr.bf16.mxu0 0
        %1785 = vmatpush1.bf16.msra.mxu0 0
        %1786 = vmatprep.subr.bf16.mxu0 0
        %1787 = vmatpush1.bf16.msra.mxu0 0
        %1788 = vmatprep.subr.bf16.mxu0 0
        %1789 = vmatpush1.bf16.msra.mxu0 %v1770
        %1790 = vmatprep.subr.bf16.mxu0 0
        %1791 = vmatpush1.bf16.msra.mxu0 %v1769
        %1792 = vmatprep.subr.bf16.mxu0 0
        %1793 = vmatpush2.bf16.msra.mxu0 0
        %1794 = vmatprep.subr.bf16.mxu0 0
        %1795 = vmatpush2.bf16.msra.mxu0 0
        %1796 = vmatprep.subr.bf16.mxu0 0
        %1797 = vmatpush2.bf16.msra.mxu0 0
        %1798 = vmatprep.subr.bf16.mxu0 0
        %1799 = vmatpush2.bf16.msra.mxu0 0
        %1800 = vmatprep.subr.bf16.mxu0 0
        %1801 = vmatpush2.bf16.msra.mxu0 0
        %1802 = vmatprep.subr.bf16.mxu0 0
        %1803 = vmatpush2.bf16.msra.mxu0 0
        %1804 = vmatprep.subr.bf16.mxu0 0
        %1805 = vmatpush2.bf16.msra.mxu0 0
        %1806 = vmatprep.subr.bf16.mxu0 0
        %1807 = vmatpush2.bf16.msra.mxu0 0
        %1808 = vmatprep.mubr.bf16.mxu0 0
        %1809 = vmatmul.mubr.bf16.gmra.mxu0 %v1774
        %v1810 = vpop.f32.mrf.mxu0
        %v1811 = vadd.f32 %v1760, %v1810
        %v1812 = vpop.f32.mrf.mxu0
        %v1813 = vpop.f32.mrf.mxu0
        %v1814 = vadd.f32 %v1760, %v1813
        %v1815 = vpop.f32.mrf.mxu0
        %1816 = vdwg.mxu0
        %v1817 = vmul.f32 %v1811, 0.5
        %v1818 = vmul.f32 %v1814, 0.5
        %v1819 = vmul.f32 %v1811, 0.70710677
        %v1820 = vmul.f32 %v1814, 0.70710677
        %v1821 = vand.u32 2147483647, %v1819
        %v1822 = vand.u32 2147483647, %v1820
        %v1823 = vmul.f32 %v1821, 0.3275911
        %v1824 = vmul.f32 %v1822, 0.3275911
        %v1825 = vadd.f32 %v1823, 1.0
        %v1826 = vadd.f32 %v1824, 1.0
        %v1827 = vrcp.pop %v1825
        %v1828 = vmul.f32 1.0, %v1827
        %v1829 = vrcp.pop %v1826
        %v1830 = vmul.f32 1.0, %v1829
        %v1831 = vmul.f32 %v1828, 1.0614054
        %v1832 = vmul.f32 %v1830, 1.0614054
        %v1833 = vadd.f32 %v1831, -1.4531521
        %v1834 = vadd.f32 %v1832, -1.4531521
        %v1835 = vmul.f32 %v1833, %v1828
        %v1836 = vmul.f32 %v1834, %v1830
        %v1837 = vadd.f32 %v1835, 1.4214138
        %v1838 = vadd.f32 %v1836, 1.4214138
        %v1839 = vmul.f32 %v1837, %v1828
        %v1840 = vmul.f32 %v1838, %v1830
        %v1841 = vadd.f32 %v1839, -0.28449672
        %v1842 = vadd.f32 %v1840, -0.28449672
        %v1843 = vmul.f32 %v1841, %v1828
        %v1844 = vmul.f32 %v1842, %v1830
        %v1845 = vadd.f32 %v1843, 0.2548296
        %v1846 = vadd.f32 %v1844, 0.2548296
        %v1847 = vmul.f32 %v1845, %v1828
        %v1848 = vmul.f32 %v1846, %v1830
        %v1849 = vsub.f32 0.0, %v1821
        %v1850 = vsub.f32 0.0, %v1822
        %v1851 = vmul.f32 %v1849, %v1821
        %v1852 = vmul.f32 %v1850, %v1822
        %v1853 = vmul.f32 %v1851, 1.442695
        %v1854 = vpow.pop %v1853
        %v1855 = vmul.f32 %v1852, 1.442695
        %v1856 = vpow.pop %v1855
        %v1857 = vmul.f32 %v1847, %v1854
        %v1858 = vmul.f32 %v1848, %v1856
        %v1859 = vsub.f32 1.0, %v1857
        %v1860 = vsub.f32 1.0, %v1858
        %vm1861 = vcmp.ge.f32.partialorder %v1819, 0.0
        %vm1862 = vcmp.ge.f32.partialorder %v1820, 0.0
        %v1863 = vsub.f32 0.0, %v1859
        %v1864 = vsub.f32 0.0, %v1860
        %v1865 = vsel %vm1861, %v1859, %v1863
        %v1866 = vsel %vm1862, %v1860, %v1864
        %v1867 = vadd.f32 %v1865, 1.0
        %v1868 = vadd.f32 %v1866, 1.0
        %v1869 = vmul.f32 %v1817, %v1867
        %v1870 = vmul.f32 %v1818, %v1868
        %v1871 = vld [vmem:[%s476] sm:$0xf]
        %v1872 = vld [vmem:[%s476 + $0x4] sm:$0xf]
        %v1873 = vld [vmem:[%s476 + $0x8] sm:$0xf]
        %v1874 = vld [vmem:[%s476 + $0xc] sm:$0xf]
        %v1875 = vld [vmem:[%s476 + $0x10] sm:$0xf]
        %v1876 = vld [vmem:[%s476 + $0x14] sm:$0xf]
        %v1877 = vld [vmem:[%s476 + $0x18] sm:$0xf]
        %v1878 = vld [vmem:[%s476 + $0x1c] sm:$0xf]
        %v1879 = vpack.c.bf16 %v1870, %v1869
        %v1880 = vlaneseq
        %v1881 = vshrl.u32 %v1880, 7
        %v1882 = vsub.s32 3, %v1881
        %v1883 = vrot.slane %v532, %v1882
        %v1892 = vunpack.c.l.b16 %v1871
        %v1893 = vunpack.c.l.b16 %v1872
        %v1894 = vunpack.c.l.b16 %v1873
        %v1895 = vunpack.c.l.b16 %v1874
        %v1896 = vunpack.c.l.b16 %v1875
        %v1897 = vunpack.c.l.b16 %v1876
        %v1898 = vunpack.c.l.b16 %v1877
        %v1899 = vunpack.c.l.b16 %v1878
        %v1900 = vpack.c.b16 %v1893, %v1892
        %v1901 = vpack.c.b16 %v1895, %v1894
        %v1902 = vpack.c.b16 %v1897, %v1896
        %v1903 = vpack.c.b16 %v1899, %v1898
        %vm1908 = vcmask 523264
        %v1910 = vsel %vm1908, %v1879, 0
        %1912 = vmatprep.subr.bf16.mxu0 0
        %1913 = vmatpush1.bf16.msra.mxu0 0
        %1914 = vmatprep.subr.bf16.mxu0 0
        %1915 = vmatpush1.bf16.msra.mxu0 0
        %1916 = vmatprep.subr.bf16.mxu0 0
        %1917 = vmatpush1.bf16.msra.mxu0 0
        %1918 = vmatprep.subr.bf16.mxu0 0
        %1919 = vmatpush1.bf16.msra.mxu0 0
        %1920 = vmatprep.subr.bf16.mxu0 0
        %1921 = vmatpush1.bf16.msra.mxu0 %v1903
        %1922 = vmatprep.subr.bf16.mxu0 0
        %1923 = vmatpush1.bf16.msra.mxu0 %v1902
        %1924 = vmatprep.subr.bf16.mxu0 0
        %1925 = vmatpush1.bf16.msra.mxu0 %v1901
        %1926 = vmatprep.subr.bf16.mxu0 0
        %1927 = vmatpush1.bf16.msra.mxu0 %v1900
        %1928 = vmatprep.subr.bf16.mxu0 0
        %1929 = vmatpush2.bf16.msra.mxu0 0
        %1930 = vmatprep.subr.bf16.mxu0 0
        %1931 = vmatpush2.bf16.msra.mxu0 0
        %1932 = vmatprep.subr.bf16.mxu0 0
        %1933 = vmatpush2.bf16.msra.mxu0 0
        %1934 = vmatprep.subr.bf16.mxu0 0
        %1935 = vmatpush2.bf16.msra.mxu0 0
        %1936 = vmatprep.subr.bf16.mxu0 0
        %1937 = vmatpush2.bf16.msra.mxu0 0
        %1938 = vmatprep.subr.bf16.mxu0 0
        %1939 = vmatpush2.bf16.msra.mxu0 0
        %1940 = vmatprep.subr.bf16.mxu0 0
        %1941 = vmatpush2.bf16.msra.mxu0 0
        %1942 = vmatprep.subr.bf16.mxu0 0
        %1943 = vmatpush2.bf16.msra.mxu0 0
        %1944 = vmatprep.mubr.bf16.mxu0 0
        %1945 = vmatmul.mubr.bf16.gmra.mxu0 %v1910
        %v1946 = vpop.f32.mrf.mxu0
        %v1947 = vadd.f32 %v1883, %v1946
        %v1948 = vpop.f32.mrf.mxu0
        %v1949 = vpop.f32.mrf.mxu0
        %v1950 = vadd.f32 %v1883, %v1949
        %v1951 = vpop.f32.mrf.mxu0
        %1952 = vdwg.mxu0
        %v1953 = vadd.f32 %v1947, %v1750
        %v1954 = vadd.f32 %v1950, %v1751
        %v1955 = vsel %vm556, %v1953, 0.0
        %1956 = vadd.xlane.f32.xlu0 %v1955
        %v1957 = vpop.xlane.xlu0 %1956
        %v1958 = vsel %vm556, %v1954, 0.0
        %1959 = vadd.xlane.f32.xlu0 %v1958
        %v1960 = vpop.xlane.xlu0 %1959
        %v1961 = vmul.f32 %v1957, %v1719
        %v1962 = vmul.f32 %v1960, %v1719
        %v1963 = vsub.f32 %v1953, %v1961
        %v1964 = vsub.f32 %v1954, %v1962
        %v1965 = vmul.f32 %v1963, %v1963
        %v1966 = vmul.f32 %v1964, %v1964
        %v1967 = vsel %vm556, %v1965, 0.0
        %1968 = vadd.xlane.f32.xlu0 %v1967
        %v1969 = vpop.xlane.xlu0 %1968
        %v1970 = vsel %vm556, %v1966, 0.0
        %1971 = vadd.xlane.f32.xlu0 %v1970
        %v1972 = vpop.xlane.xlu0 %1971
        %v1973 = vmul.f32 %v1969, %v1719
        %v1974 = vmul.f32 %v1972, %v1719
        %v1975 = vadd.f32 %v1973, 1e-12
        %v1976 = vadd.f32 %v1974, 1e-12
        %v1977 = vrsqrt.pop %v1975
        %v1978 = vrsqrt.pop %v1976
        %v1979 = vmul.f32 %v1963, %v1977
        %v1980 = vmul.f32 %v1964, %v1978
        %v1981 = vlaneseq
        %v1982 = vshrl.u32 %v1981, 7
        %v1983 = vsub.s32 6, %v1982
        %v1984 = vrot.slane %v532, %v1983
        %v1985 = vmul.f32 %v1979, %v1984
        %v1986 = vmul.f32 %v1980, %v1984
        %v1987 = vlaneseq
        %v1988 = vshrl.u32 %v1987, 7
        %v1989 = vsub.s32 7, %v1988
        %v1990 = vrot.slane %v532, %v1989
        %v1991 = vadd.f32 %v1985, %v1990
        %v1992 = vadd.f32 %v1986, %v1990
        %1993 = vst.msk [vmem:[#allocation2] sm:$0xff] %vm556, %v1991
        %1994 = vst.msk [vmem:[#allocation2 + $0x8] sm:$0xff] %vm556, %v1992
        %p1995 = scmp.eq.s32.totalorder %s27, 1
        // Predicated region
        $region65: #{kobert_classifier_forward.1} parent=59 // pred_check
          %p1996 = pneg %p1995
        $region66: #{kobert_classifier_forward.1} parent=59 // pred_check_branch
          %1998 = sbr.rel (%p1996) target = $region68
        $region67: #{kobert_classifier_forward.1} parent=59 // pred_region
          %v1999 = vpack.c.bf16 %v1991, %v1991
          %v2000 = vpack.c.bf16 %v1992, %v1992
          %v2001 = vld [vmem:[%s3] sm:$0xf]
          %v2002 = vld [vmem:[%s3 + $0x4] sm:$0xf]
          %v2003 = vld [vmem:[%s3 + $0x8] sm:$0xf]
          %v2004 = vld [vmem:[%s3 + $0xc] sm:$0xf]
          %v2005 = vld [vmem:[%s4] sm:$0x1]
          %v2007 = vlaneseq
          %v2008 = vshrl.u32 %v2007, 7
          %v2009 = vsub.s32 0, %v2008
          %v2010 = vrot.slane %v2005, %v2009
          %v2014 = vunpack.c.l.b16 %v1999
          %v2015 = vunpack.c.l.b16 %v2000
          %v2016 = vrot.slane %v2015, 7
          %vm2017 = vcmask 1041409
          %v2018 = vsel %vm2017, %v2016, %v2014
          %v2019 = vpack.c.b16 %v2018, %v2018
          %v2024 = vunpack.c.l.b16 %v2001
          %v2025 = vunpack.c.l.b16 %v2002
          %v2026 = vunpack.c.l.b16 %v2003
          %v2027 = vunpack.c.l.b16 %v2004
          %v2028 = vpack.c.b16 %v2025, %v2024
          %v2029 = vpack.c.b16 %v2027, %v2026
          %v2033 = vsel %vm556, %v2019, 0
          %2035 = vmatprep.subr.bf16.mxu0 0
          %2036 = vmatpush1.bf16.msra.mxu0 0
          %2037 = vmatprep.subr.bf16.mxu0 0
          %2038 = vmatpush1.bf16.msra.mxu0 0
          %2039 = vmatprep.subr.bf16.mxu0 0
          %2040 = vmatpush1.bf16.msra.mxu0 0
          %2041 = vmatprep.subr.bf16.mxu0 0
          %2042 = vmatpush1.bf16.msra.mxu0 0
          %2043 = vmatprep.subr.bf16.mxu0 0
          %2044 = vmatpush1.bf16.msra.mxu0 0
          %2045 = vmatprep.subr.bf16.mxu0 0
          %2046 = vmatpush1.bf16.msra.mxu0 0
          %2047 = vmatprep.subr.bf16.mxu0 0
          %2048 = vmatpush1.bf16.msra.mxu0 %v2029
          %2049 = vmatprep.subr.bf16.mxu0 0
          %2050 = vmatpush1.bf16.msra.mxu0 %v2028
          %2051 = vmatprep.subr.bf16.mxu0 0
          %2052 = vmatpush2.bf16.msra.mxu0 0
          %2053 = vmatprep.subr.bf16.mxu0 0
          %2054 = vmatpush2.bf16.msra.mxu0 0
          %2055 = vmatprep.subr.bf16.mxu0 0
          %2056 = vmatpush2.bf16.msra.mxu0 0
          %2057 = vmatprep.subr.bf16.mxu0 0
          %2058 = vmatpush2.bf16.msra.mxu0 0
          %2059 = vmatprep.subr.bf16.mxu0 0
          %2060 = vmatpush2.bf16.msra.mxu0 0
          %2061 = vmatprep.subr.bf16.mxu0 0
          %2062 = vmatpush2.bf16.msra.mxu0 0
          %2063 = vmatprep.subr.bf16.mxu0 0
          %2064 = vmatpush2.bf16.msra.mxu0 0
          %2065 = vmatprep.subr.bf16.mxu0 0
          %2066 = vmatpush2.bf16.msra.mxu0 0
          %2067 = vmatprep.mubr.bf16.mxu0 0
          %2068 = vmatmul.mubr.bf16.gmra.mxu0 %v2033
          %v2069 = vpop.f32.mrf.mxu0
          %v2070 = vadd.f32 %v2010, %v2069
          %v2071 = vpop.f32.mrf.mxu0
          %v2072 = vpop.f32.mrf.mxu0
          %v2073 = vpop.f32.mrf.mxu0
          %2074 = vdwg.mxu0
          %2075 = vst [vmem:[#allocation7] sm:$0x3] %v2070
        $region68: #{kobert_classifier_forward.1} parent=59 // pred_fallthru
          _
        // Predicated region
        $region69: #{kobert_classifier_forward.1} parent=59 // pred_check
          %p2076 = pneg %p297
        $region70: #{kobert_classifier_forward.1} parent=59 // pred_check_branch
          %2078 = sbr.rel (%p2076) target = $region72
        $region71: #{kobert_classifier_forward.1} parent=59 // pred_region
          %s2080 = ssub.s32 32, 32
          %2081 = vsyncadd [#allocation8], %s2080
          %s2082 = smul.addr %s26, 32
          %s2083 = scalar_lea.hbm %s10, %s2082
          %s2085 = sshll.u32 [#allocation7], 4
          %s2086 = int_to_ptr.vmem [resolvable:$true] %s2085
          %2088 = dma.vmem_to_hbm [thread:$0]  %s2086, 32, %s2083, [#allocation8]
        $region72: #{kobert_classifier_forward.1} parent=59 // pred_fallthru
          _
        // Predicated region
        $region73: #{kobert_classifier_forward.1} parent=59 // pred_check
          %p2089 = pneg %p297
        $region74: #{kobert_classifier_forward.1} parent=59 // pred_check_branch
          %2091 = sbr.rel (%p2089) target = $region76
        $region75: #{kobert_classifier_forward.1} parent=59 // pred_region
          %2092 = dma.done [#allocation8], 32
        $region76: #{kobert_classifier_forward.1} parent=59 // pred_fallthru
          _
      $region60: #{kobert_classifier_forward.1} parent=5 // pred_fallthru
        _
      %p2093 = scmp.le.s32.totalorder 2, %s17
      // Predicated region
      $region77: #{kobert_classifier_forward.1} parent=5 // pred_check
        %p2094 = pneg %p2093
      $region78: #{kobert_classifier_forward.1} parent=5 // pred_check_branch
        %2096 = sbr.rel (%p2094) target = $region80
      $region79: #{kobert_classifier_forward.1} parent=5 // pred_region
        %s2097 = ssub.s32 %s17, 2
      $region80: #{kobert_classifier_forward.1} parent=5 // pred_fallthru
        _
    $region6: #{kobert_classifier_forward.1} parent=1 // loop_footer
      %s21 = sadd.s32 1, %s17
    $region7: #{kobert_classifier_forward.1} parent=1 // loop_footer_branch
      %16 = sbr.rel target = $region3
    $region8: #{kobert_classifier_forward.1} parent=1 // loop_exit
      _
    %2098 = vsyncpa [#allocation8], 1
    %s2099 = scalar_lea.sflag [#allocation8], 1
    %2100 = vsyncpa %s2099, 1

</llo_original>
